<compile_context>
chip_gen: v6e
topology: v6e:2x2x1
jax: 0.10.0
libtpu: 0.0.40
codegen_flags: <defaults>
</compile_context>

<pallas_src>
import functools
import math
import numpy as np

import jax
import jax.numpy as jnp
from jax import lax
from jax.experimental import pallas as pl
from jax.experimental.pallas import tpu as pltpu


def _round_up(x, m):
    return ((x + m - 1) // m) * m


# ----------------------------------------------------------------------------
# Pallas kernel: one decoder step for one batch tile
#   grid = (batch_tiles, decoder_steps); state carried in VMEM scratch
# ----------------------------------------------------------------------------
def mdca_kernel(q_ref, x_ref, aw0_ref, mask_ref, par_ref,
                ctx_ref, attn_ref, state_ref, *,
                A, Qd, Ks, Kd, prior_taps, r_bq, r_c, r_d, energy_dtype):
    bb, T = state_ref.shape
    P = len(prior_taps)
    ps = (Ks - 1) // 2
    pd = (Kd - 1) // 2

    # ---- carry the attention-weight state across decoder steps in VMEM ----
    @pl.when(pl.program_id(1) == 0)
    def _init():
        state_ref[...] = aw0_ref[...]

    aw = state_ref[...]                                        # [bb, T]

    # ---- unpack the single packed-parameter slab (static slices only) ----
    wq    = par_ref[0:Qd, 0:A]                                 # [Qd, A]
    bq    = par_ref[r_bq:r_bq + 1, 0:A]                        # [1, A]
    wstat = par_ref[r_c:r_c + A, 0:Ks]                         # [A, Ks]  (A on sublanes)
    bdf   = par_ref[r_c:r_c + A, Ks:Ks + 1]                    # [A, 1]
    v     = par_ref[r_c:r_c + A, Ks + 1:Ks + 2]                # [A, 1]
    wkf   = par_ref[r_d:r_d + A, 0:A * Kd]                     # [A, A*Kd] (a_out-major, k-minor)

    # ---- query projection + fused dynamic-coefficient matmul (1 MXU dot) ----
    h = jnp.tanh(jnp.dot(q_ref[0], wq, preferred_element_type=jnp.float32) + bq)
    gd = jnp.dot(h, wkf, preferred_element_type=jnp.float32)   # [bb, A*Kd]
    gd = gd.reshape(bb, A, Kd)                                 # single relayout: A -> sublanes

    # ---- shared roll taps: prior conv (compile-time scalar taps) and the
    #      static+dynamic convs (coefficients already A-on-sublanes) ----
    t_idx = lax.broadcasted_iota(jnp.int32, (1, T), 1)
    pf = prior_taps[P - 1] * aw                                # prior tap at offset 0
    arg = bdf[None, :, :] + aw[:, None, :] * (wstat[None, :, ps:ps + 1]
                                              + gd[:, :, pd:pd + 1])

    offsets = sorted((set(range(-ps, Ks - ps)) | set(range(-pd, Kd - pd))
                      | set(range(-(P - 1), 1))) - {0})
    for d in offsets:
        rolled = pltpu.roll(aw, (-d) % T, axis=1)              # XLU lane rotate
        valid = (t_idx + d >= 0) if d < 0 else (t_idx + d < T)
        shifted = jnp.where(valid, rolled, 0.0)                # shifted[b,t] = aw[b,t+d]
        if -(P - 1) <= d <= 0:                                 # causal prior conv tap
            pf = pf + prior_taps[d + P - 1] * shifted
        coeff = None
        ks_i = d + ps
        if 0 <= ks_i < Ks:                                     # folded static tap
            coeff = wstat[None, :, ks_i:ks_i + 1]              # [1, A, 1]
        kd_i = d + pd
        if 0 <= kd_i < Kd:                                     # folded dynamic tap
            dyn = gd[:, :, kd_i:kd_i + 1]                      # [bb, A, 1]
            coeff = dyn if coeff is None else coeff + dyn
        if coeff is not None:
            arg = arg + shifted[:, None, :] * coeff            # [bb, A, T] VPU fma

    prior_log = jnp.log(jnp.maximum(pf, 1e-6))                 # [bb, T]

    # energy_dtype=bf16 is the v6e/v7x option from the perf review; f32 default
    # (mandatory on v5e, keeps the test tolerance tight).
    e = jnp.tanh(arg.astype(energy_dtype))                     # [bb, A, T]
    alignment = jnp.sum(e.astype(jnp.float32) * v[None, :, :], axis=1) + prior_log

    # ---- softmax over T (exact divide) then post-softmax mask fill ----
    m = jnp.max(alignment, axis=-1, keepdims=True)
    ex = jnp.exp(alignment - m)
    aw_new = ex / jnp.sum(ex, axis=-1, keepdims=True)
    aw_new = jnp.where(mask_ref[...] > 0, aw_new, 1e-8)

    state_ref[...] = aw_new                                    # state for next step
    attn_ref[...] = aw_new[None, :, :]                         # [1, bb, T]

    # ---- context = attention @ encoder memory : MXU contraction over T ----
    # TODO(synk): on v5e/v6e a VPU reduction may beat these bb M=1 matmuls;
    # pick per the bundle dump (review item); MXU is otherwise idle here.
    ctx = jnp.einsum('bqt,btd->bqd', aw_new[:, None, :], x_ref[...],
                     preferred_element_type=jnp.float32)       # [bb, 1, D]
    ctx_ref[...] = jnp.swapaxes(ctx, 0, 1)                     # [1, bb, D]


# ----------------------------------------------------------------------------
# Parameter preparation (hoisted out of the decoder loop): fold + pack weights
# ----------------------------------------------------------------------------
def mdca_prepare(params):
    Qd, A = params['Wq'].shape
    _, Ks = params['Wst'].shape
    Fd = params['Wdf'].shape[0]
    Kd = params['Wk'].shape[1] // Fd

    # static conv (x) static_filter_layer folded, stored A-on-sublanes: [A, Ks]
    wstatT = (params['Wst'].T @ params['Wsf']).T
    # dynamic_filter_layer folded into the key layer, a_out-major / k-minor
    wkf = jnp.einsum('afk,fb->abk',
                     params['Wk'].reshape(A, Fd, Kd),
                     params['Wdf']).reshape(A, A * Kd)

    # single packed slab: sublane-concatenated, 128-lane padded (1 DMA)
    r_bq = _round_up(Qd, 8)
    r_c = _round_up(r_bq + 1, 8)
    r_d = _round_up(r_c + A, 8)
    rows = _round_up(r_d + A, 8)
    lanes = _round_up(max(A, Ks + 2, A * Kd, 128), 128)

    slab = np.zeros((rows, lanes), np.float32)
    slab[:Qd, :A] = np.asarray(params['Wq'])
    slab[r_bq, :A] = np.asarray(params['bq'])
    slab[r_c:r_c + A, :Ks] = np.asarray(wstatT)
    slab[r_c:r_c + A, Ks] = np.asarray(params['bdf'])
    slab[r_c:r_c + A, Ks + 1] = np.asarray(params['v'])
    slab[r_d:r_d + A, :A * Kd] = np.asarray(wkf)

    # prior conv taps become compile-time scalars (no DMA, no [T,T] Toeplitz)
    prior_taps = tuple(float(x) for x in np.asarray(params['prior']))

    return dict(slab=jnp.asarray(slab), A=A, Qd=Qd, Ks=Ks, Kd=Kd,
                prior_taps=prior_taps, r_bq=r_bq, r_c=r_c, r_d=r_d)


# ----------------------------------------------------------------------------
# Wrapper: multi-step decode (encoder memory resident across decoder steps)
# ----------------------------------------------------------------------------
def mdca_decode(queries, inputs, attention_weights, mask, prep,
                energy_dtype=jnp.float32):
    S, B, Qd = queries.shape
    _, T, D = inputs.shape
    rows, lanes = prep['slab'].shape

    # bb=8 keeps the f32 [bb, A, T] energy slab at 32 vregs (no spills) and,
    # for B >= 16, gives >=2 "parallel" batch tiles (both v7x TensorCores busy).
    # TODO(synk): for B not a multiple of 8, pad B outside the kernel instead.
    bb = 8 if B % 8 == 0 else B
    grid = (B // bb, S)

    kernel = functools.partial(
        mdca_kernel, A=prep['A'], Qd=prep['Qd'], Ks=prep['Ks'], Kd=prep['Kd'],
        prior_taps=prep['prior_taps'], r_bq=prep['r_bq'], r_c=prep['r_c'],
        r_d=prep['r_d'], energy_dtype=energy_dtype)

    ctx_all, attn_all = pl.pallas_call(
        kernel,
        out_shape=(jax.ShapeDtypeStruct((S, B, D), jnp.float32),
                   jax.ShapeDtypeStruct((S, B, T), jnp.float32)),
        grid=grid,
        in_specs=[
            pl.BlockSpec((1, bb, Qd), lambda i, s: (s, i, 0)),   # per-step query
            pl.BlockSpec((bb, T, D), lambda i, s: (i, 0, 0)),    # encoder memory (resident across s)
            pl.BlockSpec((bb, T), lambda i, s: (i, 0)),          # initial attention-weight state
            pl.BlockSpec((bb, T), lambda i, s: (i, 0)),          # mask
            # TODO(synk): constant-index param slab could be single-buffered
            # (pipeline_mode=pl.Buffered(1)) to save VMEM on v7x.
            pl.BlockSpec((rows, lanes), lambda i, s: (0, 0)),    # packed params (1 DMA)
        ],
        out_specs=(pl.BlockSpec((1, bb, D), lambda i, s: (s, i, 0)),
                   pl.BlockSpec((1, bb, T), lambda i, s: (s, i, 0))),
        scratch_shapes=[pltpu.VMEM((bb, T), jnp.float32)],       # carried attention state
        compiler_params=pltpu.CompilerParams(
            dimension_semantics=("parallel", "arbitrary")),
    )(queries, inputs, attention_weights, mask.astype(jnp.int32), prep['slab'])
    return ctx_all, attn_all


def mdca_forward(query, inputs, attention_weights, mask, prep, **kw):
    """Single decoder step (matches the torch module's forward signature).
    Returns (context [B,D], new attention weights [B,T])."""
    ctx, attn = mdca_decode(query[None], inputs, attention_weights, mask, prep, **kw)
    return ctx[0], attn[0]


# ----------------------------------------------------------------------------
# Pure-JAX reference (mirrors the PyTorch forward) for checking
# ----------------------------------------------------------------------------
def mdca_reference(query, inputs, attention_weights, mask, params, Fd, Kd):
    B, T = attention_weights.shape
    Ks = params['Wst'].shape[1]
    P = params['prior'].shape[0]
    pd = (Kd - 1) // 2
    ps = (Ks - 1) // 2

    pf = lax.conv_general_dilated(
        attention_weights[:, None, :], params['prior'][None, None, :],
        window_strides=(1,), padding=[(P - 1, 0)],
        dimension_numbers=('NCH', 'OIH', 'NCH'))[:, 0, :]
    prior_log = jnp.log(jnp.maximum(pf, 1e-6))

    h = jnp.tanh(query @ params['Wq'] + params['bq'])
    G = h @ params['Wk']                                          # [B, Fd*Kd]
    dyn = lax.conv_general_dilated(
        attention_weights[None, :, :], G.reshape(B * Fd, 1, Kd),
        window_strides=(1,), padding=[(pd, pd)],
        dimension_numbers=('NCH', 'OIH', 'NCH'), feature_group_count=B)
    df = dyn.reshape(B, Fd, T).transpose(0, 2, 1)                 # [B, T, Fd]

    st = lax.conv_general_dilated(
        attention_weights[:, None, :], params['Wst'][:, None, :],
        window_strides=(1,), padding=[(ps, ps)],
        dimension_numbers=('NCH', 'OIH', 'NCH'))
    sf = st.transpose(0, 2, 1)                                    # [B, T, Cst]

    e = jnp.tanh(jnp.einsum('btc,ca->bta', sf, params['Wsf'])
                 + jnp.einsum('btf,fa->bta', df, params['Wdf'])
                 + params['bdf'][None, None, :])
    alignment = jnp.einsum('bta,a->bt', e, params['v']) + prior_log
    aw = jax.nn.softmax(alignment, axis=-1)
    aw = jnp.where(mask, aw, 1e-8)
    context = jnp.einsum('bt,btd->bd', aw, inputs)
    return context, aw


def mdca_reference_decode(queries, inputs, aw0, mask, params, Fd, Kd):
    aw = aw0
    ctxs, attns = [], []
    for s in range(queries.shape[0]):
        ctx, aw = mdca_reference(queries[s], inputs, aw, mask, params, Fd, Kd)
        ctxs.append(ctx)
        attns.append(aw)
    return jnp.stack(ctxs, 0), jnp.stack(attns, 0)


def betabinom_pmf(k, n, a, b):
    """scipy.stats.betabinom.pmf without scipy."""
    lg = math.lgamma
    return math.exp(lg(n + 1) - lg(k + 1) - lg(n - k + 1)
                    + lg(k + a) + lg(n - k + b) - lg(n + a + b)
                    - (lg(a) + lg(b) - lg(a + b)))


if __name__ == "__main__":
    # small, deterministic configuration (T = 128 keeps lanes dense)
    B, T, D_en, S = 16, 128, 64, 4
    query_dim, attention_dim = 16, 32
    static_filter_dim, static_kernel_size = 8, 5
    dynamic_filter_dim, dynamic_kernel_size = 8, 3
    prior_filter_len, alpha, beta = 11, 0.1, 0.9

    key = jax.random.PRNGKey(0)
    ks = jax.random.split(key, 12)

    params = {
        'Wq':  0.2 * jax.random.normal(ks[0], (query_dim, attention_dim), jnp.float32),
        'bq':  0.1 * jax.random.normal(ks[1], (attention_dim,), jnp.float32),
        'Wk':  0.2 * jax.random.normal(ks[2], (attention_dim,
                                               dynamic_filter_dim * dynamic_kernel_size), jnp.float32),
        'Wst': 0.2 * jax.random.normal(ks[3], (static_filter_dim, static_kernel_size), jnp.float32),
        'Wsf': 0.2 * jax.random.normal(ks[4], (static_filter_dim, attention_dim), jnp.float32),
        'Wdf': 0.2 * jax.random.normal(ks[5], (dynamic_filter_dim, attention_dim), jnp.float32),
        'bdf': 0.1 * jax.random.normal(ks[6], (attention_dim,), jnp.float32),
        'v':   0.2 * jax.random.normal(ks[7], (attention_dim,), jnp.float32),
    }
    prior = np.array([betabinom_pmf(i, prior_filter_len - 1, alpha, beta)
                      for i in range(prior_filter_len)], dtype=np.float32)[::-1].copy()
    params['prior'] = jnp.asarray(prior)      # flipped, as in the torch buffer

    # forward inputs: S decoder-step queries, init_states-style attention weights
    queries = jax.random.normal(ks[8], (S, B, query_dim), jnp.float32)
    inputs = jax.random.normal(ks[9], (B, T, D_en), jnp.float32)
    attn_w0 = jnp.zeros((B, T), jnp.float32).at[:, 0].set(1.0)
    mask = jnp.ones((B, T), bool).at[1, -5:].set(False).at[3, -17:].set(False)

    prep = mdca_prepare(params)                # hoisted param folding/packing

    # multi-step decode: encoder memory + params stay resident across steps
    ctx_all, attn_all = mdca_decode(queries, inputs, attn_w0, mask, prep)
    jax.block_until_ready(ctx_all)
    jax.block_until_ready(attn_all)

    # single-step wrapper (module-forward parity)
    ctx1, attn1 = mdca_forward(queries[0], inputs, attn_w0, mask, prep)
    jax.block_until_ready(ctx1)

    ctx_ref, attn_ref = mdca_reference_decode(queries, inputs, attn_w0, mask,
                                              params, dynamic_filter_dim,
                                              dynamic_kernel_size)

    np.testing.assert_allclose(np.asarray(attn_all), np.asarray(attn_ref),
                               rtol=1e-3, atol=1e-6)
    np.testing.assert_allclose(np.asarray(ctx_all), np.asarray(ctx_ref),
                               rtol=1e-3, atol=1e-5)
    np.testing.assert_allclose(np.asarray(attn1), np.asarray(attn_ref[0]),
                               rtol=1e-3, atol=1e-6)
    np.testing.assert_allclose(np.asarray(ctx1), np.asarray(ctx_ref[0]),
                               rtol=1e-3, atol=1e-5)

    # TODO(synk): the torch module mutates self.attention_weights in place; here the
    # state is carried in VMEM across the step grid axis and returned per step.
    print("KERNEL_OK")
</pallas_src>

<mosaic_0001>
module attributes {stable_mosaic.version = 11 : i64} {
  func.func @mdca_kernel(%arg0: i32, %arg1: i32, %arg2: memref<1x8x16xf32, #tpu.memory_space<vmem>>, %arg3: memref<8x128x64xf32, #tpu.memory_space<vmem>>, %arg4: memref<8x128xf32, #tpu.memory_space<vmem>>, %arg5: memref<8x128xi32, #tpu.memory_space<vmem>>, %arg6: memref<88x128xf32, #tpu.memory_space<vmem>>, %arg7: memref<1x8x64xf32, #tpu.memory_space<vmem>>, %arg8: memref<1x8x128xf32, #tpu.memory_space<vmem>>, %arg9: memref<8x128xf32, #tpu.memory_space<vmem>>) attributes {dimension_semantics = [#tpu.dimension_semantics<parallel>, #tpu.dimension_semantics<arbitrary>], iteration_bounds = array<i64: 2, 4>, scalar_prefetch = 0 : i64, scratch_operands = 1 : i64, tpu.core_type = #tpu.core_type<tc>, window_params = [{transform_indices = @transform_0, window_bounds = array<i64: 1, 8, 16>}, {transform_indices = @transform_1, window_bounds = array<i64: 8, 128, 64>}, {transform_indices = @transform_2, window_bounds = array<i64: 8, 128>}, {transform_indices = @transform_3, window_bounds = array<i64: 8, 128>}, {pipeline_mode = #tpu.pipeline_mode<synchronous>, transform_indices = @transform_4, window_bounds = array<i64: 88, 128>}, {transform_indices = @transform_5, window_bounds = array<i64: 1, 8, 64>}, {transform_indices = @transform_6, window_bounds = array<i64: 1, 8, 128>}]} {
    %c0_i32 = arith.constant 0 : i32
    %0 = arith.cmpi eq, %arg1, %c0_i32 : i32
    %1 = arith.extui %0 : i1 to i32
    %c0_i32_0 = arith.constant 0 : i32
    %2 = arith.cmpi ne, %1, %c0_i32_0 : i32
    scf.if %2 {
      %c0_69 = arith.constant 0 : index
      %c0_70 = arith.constant 0 : index
      %236 = vector.load %arg4[%c0_69, %c0_70] : memref<8x128xf32, #tpu.memory_space<vmem>>, vector<8x128xf32>
      %c0_71 = arith.constant 0 : index
      %c0_72 = arith.constant 0 : index
      %237 = vector.load %arg9[%c0_71, %c0_72] : memref<8x128xf32, #tpu.memory_space<vmem>>, vector<8x128xf32>
      tpu.vector_store %arg9[%c0_71, %c0_72], %236 {strides = array<i32>} : memref<8x128xf32, #tpu.memory_space<vmem>>, vector<8x128xf32>,
    } else {
    }
    %c0 = arith.constant 0 : index
    %c0_1 = arith.constant 0 : index
    %3 = vector.load %arg9[%c0, %c0_1] : memref<8x128xf32, #tpu.memory_space<vmem>>, vector<8x128xf32>
    %c0_2 = arith.constant 0 : index
    %c0_3 = arith.constant 0 : index
    %4 = vector.load %arg6[%c0_2, %c0_3] : memref<88x128xf32, #tpu.memory_space<vmem>>, vector<16x32xf32>
    %c16 = arith.constant 16 : index
    %c0_4 = arith.constant 0 : index
    %5 = vector.load %arg6[%c16, %c0_4] : memref<88x128xf32, #tpu.memory_space<vmem>>, vector<1x32xf32>
    %c24 = arith.constant 24 : index
    %c0_5 = arith.constant 0 : index
    %6 = vector.load %arg6[%c24, %c0_5] : memref<88x128xf32, #tpu.memory_space<vmem>>, vector<32x5xf32>
    %c24_6 = arith.constant 24 : index
    %c5 = arith.constant 5 : index
    %7 = vector.load %arg6[%c24_6, %c5] : memref<88x128xf32, #tpu.memory_space<vmem>>, vector<32x1xf32>
    %c24_7 = arith.constant 24 : index
    %c6 = arith.constant 6 : index
    %8 = vector.load %arg6[%c24_7, %c6] : memref<88x128xf32, #tpu.memory_space<vmem>>, vector<32x1xf32>
    %c56 = arith.constant 56 : index
    %c0_8 = arith.constant 0 : index
    %9 = vector.load %arg6[%c56, %c0_8] : memref<88x128xf32, #tpu.memory_space<vmem>>, vector<32x96xf32>
    %c0_9 = arith.constant 0 : index
    %c0_10 = arith.constant 0 : index
    %c0_11 = arith.constant 0 : index
    %10 = vector.load %arg2[%c0_9, %c0_10, %c0_11] : memref<1x8x16xf32, #tpu.memory_space<vmem>>, vector<1x8x16xf32>
    %11 = vector.shape_cast %10 : vector<1x8x16xf32> to vector<8x16xf32>
    %cst = arith.constant dense<0.000000e+00> : vector<8x32xf32>
    %12 = tpu.matmul %11, %4, %cst {dimension_numbers = #tpu.dot_dimension_numbers<[1], [0], [0], [1], [0, 0, 1, 1], [], []>} : vector<8x16xf32>, vector<16x32xf32>, vector<8x32xf32> -> vector<8x32xf32>
    %13 = vector.broadcast %5 : vector<1x32xf32> to vector<8x32xf32>
    %14 = arith.addf %12, %13 : vector<8x32xf32>
    %15 = math.tanh %14 : vector<8x32xf32>
    %cst_12 = arith.constant dense<0.000000e+00> : vector<8x96xf32>
    %16 = tpu.matmul %15, %9, %cst_12 {dimension_numbers = #tpu.dot_dimension_numbers<[1], [0], [0], [1], [0, 0, 1, 1], [], []>} : vector<8x32xf32>, vector<32x96xf32>, vector<8x96xf32> -> vector<8x96xf32>
    %17 = vector.shape_cast %16 : vector<8x96xf32> to vector<8x32x3xf32>
    %18 = tpu.iota {dimensions = array<i32: 1>} : vector<1x128xi32>
    %cst_13 = arith.constant 0.740022898 : f32
    %19 = vector.broadcast %cst_13 : f32 to vector<8x128xf32>
    %20 = arith.mulf %19, %3 : vector<8x128xf32>
    %21 = vector.shape_cast %7 : vector<32x1xf32> to vector<1x32x1xf32>
    %22 = vector.shape_cast %3 : vector<8x128xf32> to vector<8x1x128xf32>
    %23 = vector.extract_strided_slice %6 {offsets = [0, 2], sizes = [32, 1], strides = [1, 1]} : vector<32x5xf32> to vector<32x1xf32>
    %24 = vector.shape_cast %23 : vector<32x1xf32> to vector<1x32x1xf32>
    %25 = vector.extract_strided_slice %17 {offsets = [0, 0, 1], sizes = [8, 32, 1], strides = [1, 1, 1]} : vector<8x32x3xf32> to vector<8x32x1xf32>
    %26 = vector.broadcast %24 : vector<1x32x1xf32> to vector<8x32x1xf32>
    %27 = arith.addf %26, %25 : vector<8x32x1xf32>
    %28 = vector.broadcast %22 : vector<8x1x128xf32> to vector<8x32x128xf32>
    %29 = vector.broadcast %27 : vector<8x32x1xf32> to vector<8x32x128xf32>
    %30 = arith.mulf %28, %29 : vector<8x32x128xf32>
    %31 = vector.broadcast %21 : vector<1x32x1xf32> to vector<8x32x128xf32>
    %32 = arith.addf %31, %30 : vector<8x32x128xf32>
    %c10_i32 = arith.constant 10 : i32
    %33 = tpu.dynamic_rotate %3 by %c10_i32 dim 1 : vector<8x128xf32>, i32 -> vector<8x128xf32>
    %c-10_i32 = arith.constant -10 : i32
    %34 = vector.broadcast %c-10_i32 : i32 to vector<1x128xi32>
    %35 = arith.addi %18, %34 : vector<1x128xi32>
    %c0_i32_14 = arith.constant 0 : i32
    %36 = vector.broadcast %c0_i32_14 : i32 to vector<1x128xi32>
    %37 = arith.cmpi sge, %35, %36 : vector<1x128xi32>
    %cst_15 = arith.constant 0.000000e+00 : f32
    %38 = vector.shape_cast %37 : vector<1x128xi1> to vector<1x128xi1>
    %39 = vector.broadcast %38 : vector<1x128xi1> to vector<8x128xi1>
    %40 = vector.broadcast %cst_15 : f32 to vector<8x128xf32>
    %41 = arith.select %39, %33, %40 : vector<8x128xi1>, vector<8x128xf32>
    %cst_16 = arith.constant 0.0131728351 : f32
    %42 = vector.broadcast %cst_16 : f32 to vector<8x128xf32>
    %43 = arith.mulf %42, %41 : vector<8x128xf32>
    %44 = arith.addf %20, %43 : vector<8x128xf32>
    %c9_i32 = arith.constant 9 : i32
    %45 = tpu.dynamic_rotate %3 by %c9_i32 dim 1 : vector<8x128xf32>, i32 -> vector<8x128xf32>
    %c-9_i32 = arith.constant -9 : i32
    %46 = vector.broadcast %c-9_i32 : i32 to vector<1x128xi32>
    %47 = arith.addi %18, %46 : vector<1x128xi32>
    %c0_i32_17 = arith.constant 0 : i32
    %48 = vector.broadcast %c0_i32_17 : i32 to vector<1x128xi32>
    %49 = arith.cmpi sge, %47, %48 : vector<1x128xi32>
    %cst_18 = arith.constant 0.000000e+00 : f32
    %50 = vector.shape_cast %49 : vector<1x128xi1> to vector<1x128xi1>
    %51 = vector.broadcast %50 : vector<1x128xi1> to vector<8x128xi1>
    %52 = vector.broadcast %cst_18 : f32 to vector<8x128xf32>
    %53 = arith.select %51, %45, %52 : vector<8x128xi1>, vector<8x128xf32>
    %cst_19 = arith.constant 0.0130280787 : f32
    %54 = vector.broadcast %cst_19 : f32 to vector<8x128xf32>
    %55 = arith.mulf %54, %53 : vector<8x128xf32>
    %56 = arith.addf %44, %55 : vector<8x128xf32>
    %c8_i32 = arith.constant 8 : i32
    %57 = tpu.dynamic_rotate %3 by %c8_i32 dim 1 : vector<8x128xf32>, i32 -> vector<8x128xf32>
    %c-8_i32 = arith.constant -8 : i32
    %58 = vector.broadcast %c-8_i32 : i32 to vector<1x128xi32>
    %59 = arith.addi %18, %58 : vector<1x128xi32>
    %c0_i32_20 = arith.constant 0 : i32
    %60 = vector.broadcast %c0_i32_20 : i32 to vector<1x128xi32>
    %61 = arith.cmpi sge, %59, %60 : vector<1x128xi32>
    %cst_21 = arith.constant 0.000000e+00 : f32
    %62 = vector.shape_cast %61 : vector<1x128xi1> to vector<1x128xi1>
    %63 = vector.broadcast %62 : vector<1x128xi1> to vector<8x128xi1>
    %64 = vector.broadcast %cst_21 : f32 to vector<8x128xf32>
    %65 = arith.select %63, %57, %64 : vector<8x128xi1>, vector<8x128xf32>
    %cst_22 = arith.constant 0.0137518616 : f32
    %66 = vector.broadcast %cst_22 : f32 to vector<8x128xf32>
    %67 = arith.mulf %66, %65 : vector<8x128xf32>
    %68 = arith.addf %56, %67 : vector<8x128xf32>
    %c7_i32 = arith.constant 7 : i32
    %69 = tpu.dynamic_rotate %3 by %c7_i32 dim 1 : vector<8x128xf32>, i32 -> vector<8x128xf32>
    %c-7_i32 = arith.constant -7 : i32
    %70 = vector.broadcast %c-7_i32 : i32 to vector<1x128xi32>
    %71 = arith.addi %18, %70 : vector<1x128xi32>
    %c0_i32_23 = arith.constant 0 : i32
    %72 = vector.broadcast %c0_i32_23 : i32 to vector<1x128xi32>
    %73 = arith.cmpi sge, %71, %72 : vector<1x128xi32>
    %cst_24 = arith.constant 0.000000e+00 : f32
    %74 = vector.shape_cast %73 : vector<1x128xi1> to vector<1x128xi1>
    %75 = vector.broadcast %74 : vector<1x128xi1> to vector<8x128xi1>
    %76 = vector.broadcast %cst_24 : f32 to vector<8x128xf32>
    %77 = arith.select %75, %69, %76 : vector<8x128xi1>, vector<8x128xf32>
    %cst_25 = arith.constant 0.0149785532 : f32
    %78 = vector.broadcast %cst_25 : f32 to vector<8x128xf32>
    %79 = arith.mulf %78, %77 : vector<8x128xf32>
    %80 = arith.addf %68, %79 : vector<8x128xf32>
    %c6_i32 = arith.constant 6 : i32
    %81 = tpu.dynamic_rotate %3 by %c6_i32 dim 1 : vector<8x128xf32>, i32 -> vector<8x128xf32>
    %c-6_i32 = arith.constant -6 : i32
    %82 = vector.broadcast %c-6_i32 : i32 to vector<1x128xi32>
    %83 = arith.addi %18, %82 : vector<1x128xi32>
    %c0_i32_26 = arith.constant 0 : i32
    %84 = vector.broadcast %c0_i32_26 : i32 to vector<1x128xi32>
    %85 = arith.cmpi sge, %83, %84 : vector<1x128xi32>
    %cst_27 = arith.constant 0.000000e+00 : f32
    %86 = vector.shape_cast %85 : vector<1x128xi1> to vector<1x128xi1>
    %87 = vector.broadcast %86 : vector<1x128xi1> to vector<8x128xi1>
    %88 = vector.broadcast %cst_27 : f32 to vector<8x128xf32>
    %89 = arith.select %87, %81, %88 : vector<8x128xi1>, vector<8x128xf32>
    %cst_28 = arith.constant 0.0167587902 : f32
    %90 = vector.broadcast %cst_28 : f32 to vector<8x128xf32>
    %91 = arith.mulf %90, %89 : vector<8x128xf32>
    %92 = arith.addf %80, %91 : vector<8x128xf32>
    %c5_i32 = arith.constant 5 : i32
    %93 = tpu.dynamic_rotate %3 by %c5_i32 dim 1 : vector<8x128xf32>, i32 -> vector<8x128xf32>
    %c-5_i32 = arith.constant -5 : i32
    %94 = vector.broadcast %c-5_i32 : i32 to vector<1x128xi32>
    %95 = arith.addi %18, %94 : vector<1x128xi32>
    %c0_i32_29 = arith.constant 0 : i32
    %96 = vector.broadcast %c0_i32_29 : i32 to vector<1x128xi32>
    %97 = arith.cmpi sge, %95, %96 : vector<1x128xi32>
    %cst_30 = arith.constant 0.000000e+00 : f32
    %98 = vector.shape_cast %97 : vector<1x128xi1> to vector<1x128xi1>
    %99 = vector.broadcast %98 : vector<1x128xi1> to vector<8x128xi1>
    %100 = vector.broadcast %cst_30 : f32 to vector<8x128xf32>
    %101 = arith.select %99, %93, %100 : vector<8x128xi1>, vector<8x128xf32>
    %cst_31 = arith.constant 1.932190e-02 : f32
    %102 = vector.broadcast %cst_31 : f32 to vector<8x128xf32>
    %103 = arith.mulf %102, %101 : vector<8x128xf32>
    %104 = arith.addf %92, %103 : vector<8x128xf32>
    %c4_i32 = arith.constant 4 : i32
    %105 = tpu.dynamic_rotate %3 by %c4_i32 dim 1 : vector<8x128xf32>, i32 -> vector<8x128xf32>
    %c-4_i32 = arith.constant -4 : i32
    %106 = vector.broadcast %c-4_i32 : i32 to vector<1x128xi32>
    %107 = arith.addi %18, %106 : vector<1x128xi32>
    %c0_i32_32 = arith.constant 0 : i32
    %108 = vector.broadcast %c0_i32_32 : i32 to vector<1x128xi32>
    %109 = arith.cmpi sge, %107, %108 : vector<1x128xi32>
    %cst_33 = arith.constant 0.000000e+00 : f32
    %110 = vector.shape_cast %109 : vector<1x128xi1> to vector<1x128xi1>
    %111 = vector.broadcast %110 : vector<1x128xi1> to vector<8x128xi1>
    %112 = vector.broadcast %cst_33 : f32 to vector<8x128xf32>
    %113 = arith.select %111, %105, %112 : vector<8x128xi1>, vector<8x128xf32>
    %cst_34 = arith.constant 0.0231705718 : f32
    %114 = vector.broadcast %cst_34 : f32 to vector<8x128xf32>
    %115 = arith.mulf %114, %113 : vector<8x128xf32>
    %116 = arith.addf %104, %115 : vector<8x128xf32>
    %c3_i32 = arith.constant 3 : i32
    %117 = tpu.dynamic_rotate %3 by %c3_i32 dim 1 : vector<8x128xf32>, i32 -> vector<8x128xf32>
    %c-3_i32 = arith.constant -3 : i32
    %118 = vector.broadcast %c-3_i32 : i32 to vector<1x128xi32>
    %119 = arith.addi %18, %118 : vector<1x128xi32>
    %c0_i32_35 = arith.constant 0 : i32
    %120 = vector.broadcast %c0_i32_35 : i32 to vector<1x128xi32>
    %121 = arith.cmpi sge, %119, %120 : vector<1x128xi32>
    %cst_36 = arith.constant 0.000000e+00 : f32
    %122 = vector.shape_cast %121 : vector<1x128xi1> to vector<1x128xi1>
    %123 = vector.broadcast %122 : vector<1x128xi1> to vector<8x128xi1>
    %124 = vector.broadcast %cst_36 : f32 to vector<8x128xf32>
    %125 = arith.select %123, %117, %124 : vector<8x128xi1>, vector<8x128xf32>
    %cst_37 = arith.constant 0.0294704046 : f32
    %126 = vector.broadcast %cst_37 : f32 to vector<8x128xf32>
    %127 = arith.mulf %126, %125 : vector<8x128xf32>
    %128 = arith.addf %116, %127 : vector<8x128xf32>
    %c2_i32 = arith.constant 2 : i32
    %129 = tpu.dynamic_rotate %3 by %c2_i32 dim 1 : vector<8x128xf32>, i32 -> vector<8x128xf32>
    %c-2_i32 = arith.constant -2 : i32
    %130 = vector.broadcast %c-2_i32 : i32 to vector<1x128xi32>
    %131 = arith.addi %18, %130 : vector<1x128xi32>
    %c0_i32_38 = arith.constant 0 : i32
    %132 = vector.broadcast %c0_i32_38 : i32 to vector<1x128xi32>
    %133 = arith.cmpi sge, %131, %132 : vector<1x128xi32>
    %cst_39 = arith.constant 0.000000e+00 : f32
    %134 = vector.shape_cast %133 : vector<1x128xi1> to vector<1x128xi1>
    %135 = vector.broadcast %134 : vector<1x128xi1> to vector<8x128xi1>
    %136 = vector.broadcast %cst_39 : f32 to vector<8x128xf32>
    %137 = arith.select %135, %129, %136 : vector<8x128xi1>, vector<8x128xf32>
    %cst_40 = arith.constant 0.0415743217 : f32
    %138 = vector.broadcast %cst_40 : f32 to vector<8x128xf32>
    %139 = arith.mulf %138, %137 : vector<8x128xf32>
    %140 = arith.addf %128, %139 : vector<8x128xf32>
    %141 = vector.extract_strided_slice %6 {offsets = [0, 0], sizes = [32, 1], strides = [1, 1]} : vector<32x5xf32> to vector<32x1xf32>
    %142 = vector.shape_cast %141 : vector<32x1xf32> to vector<1x32x1xf32>
    %143 = vector.shape_cast %137 : vector<8x128xf32> to vector<8x1x128xf32>
    %144 = vector.broadcast %143 : vector<8x1x128xf32> to vector<8x32x128xf32>
    %145 = vector.broadcast %142 : vector<1x32x1xf32> to vector<8x32x128xf32>
    %146 = arith.mulf %144, %145 : vector<8x32x128xf32>
    %147 = arith.addf %32, %146 : vector<8x32x128xf32>
    %c1_i32 = arith.constant 1 : i32
    %148 = tpu.dynamic_rotate %3 by %c1_i32 dim 1 : vector<8x128xf32>, i32 -> vector<8x128xf32>
    %c-1_i32 = arith.constant -1 : i32
    %149 = vector.broadcast %c-1_i32 : i32 to vector<1x128xi32>
    %150 = arith.addi %18, %149 : vector<1x128xi32>
    %c0_i32_41 = arith.constant 0 : i32
    %151 = vector.broadcast %c0_i32_41 : i32 to vector<1x128xi32>
    %152 = arith.cmpi sge, %150, %151 : vector<1x128xi32>
    %cst_42 = arith.constant 0.000000e+00 : f32
    %153 = vector.shape_cast %152 : vector<1x128xi1> to vector<1x128xi1>
    %154 = vector.broadcast %153 : vector<1x128xi1> to vector<8x128xi1>
    %155 = vector.broadcast %cst_42 : f32 to vector<8x128xf32>
    %156 = arith.select %154, %148, %155 : vector<8x128xi1>, vector<8x128xf32>
    %cst_43 = arith.constant 0.0747497901 : f32
    %157 = vector.broadcast %cst_43 : f32 to vector<8x128xf32>
    %158 = arith.mulf %157, %156 : vector<8x128xf32>
    %159 = arith.addf %140, %158 : vector<8x128xf32>
    %160 = vector.extract_strided_slice %6 {offsets = [0, 1], sizes = [32, 1], strides = [1, 1]} : vector<32x5xf32> to vector<32x1xf32>
    %161 = vector.shape_cast %160 : vector<32x1xf32> to vector<1x32x1xf32>
    %162 = vector.extract_strided_slice %17 {offsets = [0, 0, 0], sizes = [8, 32, 1], strides = [1, 1, 1]} : vector<8x32x3xf32> to vector<8x32x1xf32>
    %163 = vector.broadcast %161 : vector<1x32x1xf32> to vector<8x32x1xf32>
    %164 = arith.addf %163, %162 : vector<8x32x1xf32>
    %165 = vector.shape_cast %156 : vector<8x128xf32> to vector<8x1x128xf32>
    %166 = vector.broadcast %165 : vector<8x1x128xf32> to vector<8x32x128xf32>
    %167 = vector.broadcast %164 : vector<8x32x1xf32> to vector<8x32x128xf32>
    %168 = arith.mulf %166, %167 : vector<8x32x128xf32>
    %169 = arith.addf %147, %168 : vector<8x32x128xf32>
    %c127_i32 = arith.constant 127 : i32
    %170 = tpu.dynamic_rotate %3 by %c127_i32 dim 1 : vector<8x128xf32>, i32 -> vector<8x128xf32>
    %c1_i32_44 = arith.constant 1 : i32
    %171 = vector.broadcast %c1_i32_44 : i32 to vector<1x128xi32>
    %172 = arith.addi %18, %171 : vector<1x128xi32>
    %c128_i32 = arith.constant 128 : i32
    %173 = vector.broadcast %c128_i32 : i32 to vector<1x128xi32>
    %174 = arith.cmpi slt, %172, %173 : vector<1x128xi32>
    %cst_45 = arith.constant 0.000000e+00 : f32
    %175 = vector.shape_cast %174 : vector<1x128xi1> to vector<1x128xi1>
    %176 = vector.broadcast %175 : vector<1x128xi1> to vector<8x128xi1>
    %177 = vector.broadcast %cst_45 : f32 to vector<8x128xf32>
    %178 = arith.select %176, %170, %177 : vector<8x128xi1>, vector<8x128xf32>
    %179 = vector.extract_strided_slice %6 {offsets = [0, 3], sizes = [32, 1], strides = [1, 1]} : vector<32x5xf32> to vector<32x1xf32>
    %180 = vector.shape_cast %179 : vector<32x1xf32> to vector<1x32x1xf32>
    %181 = vector.extract_strided_slice %17 {offsets = [0, 0, 2], sizes = [8, 32, 1], strides = [1, 1, 1]} : vector<8x32x3xf32> to vector<8x32x1xf32>
    %182 = vector.broadcast %180 : vector<1x32x1xf32> to vector<8x32x1xf32>
    %183 = arith.addf %182, %181 : vector<8x32x1xf32>
    %184 = vector.shape_cast %178 : vector<8x128xf32> to vector<8x1x128xf32>
    %185 = vector.broadcast %184 : vector<8x1x128xf32> to vector<8x32x128xf32>
    %186 = vector.broadcast %183 : vector<8x32x1xf32> to vector<8x32x128xf32>
    %187 = arith.mulf %185, %186 : vector<8x32x128xf32>
    %188 = arith.addf %169, %187 : vector<8x32x128xf32>
    %c126_i32 = arith.constant 126 : i32
    %189 = tpu.dynamic_rotate %3 by %c126_i32 dim 1 : vector<8x128xf32>, i32 -> vector<8x128xf32>
    %c2_i32_46 = arith.constant 2 : i32
    %190 = vector.broadcast %c2_i32_46 : i32 to vector<1x128xi32>
    %191 = arith.addi %18, %190 : vector<1x128xi32>
    %c128_i32_47 = arith.constant 128 : i32
    %192 = vector.broadcast %c128_i32_47 : i32 to vector<1x128xi32>
    %193 = arith.cmpi slt, %191, %192 : vector<1x128xi32>
    %cst_48 = arith.constant 0.000000e+00 : f32
    %194 = vector.shape_cast %193 : vector<1x128xi1> to vector<1x128xi1>
    %195 = vector.broadcast %194 : vector<1x128xi1> to vector<8x128xi1>
    %196 = vector.broadcast %cst_48 : f32 to vector<8x128xf32>
    %197 = arith.select %195, %189, %196 : vector<8x128xi1>, vector<8x128xf32>
    %198 = vector.extract_strided_slice %6 {offsets = [0, 4], sizes = [32, 1], strides = [1, 1]} : vector<32x5xf32> to vector<32x1xf32>
    %199 = vector.shape_cast %198 : vector<32x1xf32> to vector<1x32x1xf32>
    %200 = vector.shape_cast %197 : vector<8x128xf32> to vector<8x1x128xf32>
    %201 = vector.broadcast %200 : vector<8x1x128xf32> to vector<8x32x128xf32>
    %202 = vector.broadcast %199 : vector<1x32x1xf32> to vector<8x32x128xf32>
    %203 = arith.mulf %201, %202 : vector<8x32x128xf32>
    %204 = arith.addf %188, %203 : vector<8x32x128xf32>
    %cst_49 = arith.constant 9.99999997E-7 : f32
    %205 = vector.broadcast %cst_49 : f32 to vector<8x128xf32>
    %206 = arith.maximumf %159, %205 : vector<8x128xf32>
    %207 = math.log %206 : vector<8x128xf32>
    %208 = math.tanh %204 : vector<8x32x128xf32>
    %209 = vector.shape_cast %8 : vector<32x1xf32> to vector<1x32x1xf32>
    %210 = vector.broadcast %209 : vector<1x32x1xf32> to vector<8x32x128xf32>
    %211 = arith.mulf %208, %210 : vector<8x32x128xf32>
    %cst_50 = arith.constant dense<0.000000e+00> : vector<8x128xf32>
    %212 = vector.multi_reduction <add>, %211, %cst_50 [1] : vector<8x32x128xf32> to vector<8x128xf32>
    %213 = arith.addf %212, %207 : vector<8x128xf32>
    %cst_51 = arith.constant dense<0xFF800000> : vector<8xf32>
    %214 = vector.multi_reduction <maximumf>, %213, %cst_51 [1] : vector<8x128xf32> to vector<8xf32>
    %215 = vector.shape_cast %214 : vector<8xf32> to vector<8x1xf32>
    %216 = vector.broadcast %215 : vector<8x1xf32> to vector<8x128xf32>
    %217 = arith.subf %213, %216 : vector<8x128xf32>
    %218 = math.exp %217 : vector<8x128xf32>
    %cst_52 = arith.constant dense<0.000000e+00> : vector<8xf32>
    %219 = vector.multi_reduction <add>, %218, %cst_52 [1] : vector<8x128xf32> to vector<8xf32>
    %220 = vector.shape_cast %219 : vector<8xf32> to vector<8x1xf32>
    %221 = vector.broadcast %220 : vector<8x1xf32> to vector<8x128xf32>
    %222 = arith.divf %218, %221 : vector<8x128xf32>
    %c0_53 = arith.constant 0 : index
    %c0_54 = arith.constant 0 : index
    %223 = vector.load %arg5[%c0_53, %c0_54] : memref<8x128xi32, #tpu.memory_space<vmem>>, vector<8x128xi32>
    %c0_i32_55 = arith.constant 0 : i32
    %224 = vector.broadcast %c0_i32_55 : i32 to vector<8x128xi32>
    %225 = arith.cmpi sgt, %223, %224 : vector<8x128xi32>
    %cst_56 = arith.constant 9.99999993E-9 : f32
    %226 = vector.broadcast %cst_56 : f32 to vector<8x128xf32>
    %227 = arith.select %225, %222, %226 : vector<8x128xi1>, vector<8x128xf32>
    %c0_57 = arith.constant 0 : index
    %c0_58 = arith.constant 0 : index
    %228 = vector.load %arg9[%c0_57, %c0_58] : memref<8x128xf32, #tpu.memory_space<vmem>>, vector<8x128xf32>
    tpu.vector_store %arg9[%c0_57, %c0_58], %227 {strides = array<i32>} : memref<8x128xf32, #tpu.memory_space<vmem>>, vector<8x128xf32>,
    %229 = vector.shape_cast %227 : vector<8x128xf32> to vector<1x8x128xf32>
    %c0_59 = arith.constant 0 : index
    %c0_60 = arith.constant 0 : index
    %c0_61 = arith.constant 0 : index
    %230 = vector.load %arg8[%c0_59, %c0_60, %c0_61] : memref<1x8x128xf32, #tpu.memory_space<vmem>>, vector<1x8x128xf32>
    tpu.vector_store %arg8[%c0_59, %c0_60, %c0_61], %229 {strides = array<i32>} : memref<1x8x128xf32, #tpu.memory_space<vmem>>, vector<1x8x128xf32>,
    %231 = vector.shape_cast %227 : vector<8x128xf32> to vector<8x1x128xf32>
    %c0_62 = arith.constant 0 : index
    %c0_63 = arith.constant 0 : index
    %c0_64 = arith.constant 0 : index
    %232 = vector.load %arg3[%c0_62, %c0_63, %c0_64] : memref<8x128x64xf32, #tpu.memory_space<vmem>>, vector<8x128x64xf32>
    "tpu.trace_start"() <{level = 10 : i32, message = "bqt,btd->bqd"}> : () -> ()
    %cst_65 = arith.constant dense<0.000000e+00> : vector<8x1x64xf32>
    %233 = tpu.matmul %231, %232, %cst_65 {dimension_numbers = #tpu.dot_dimension_numbers<[2], [1], [1], [2], [0, 0, 0, 1, 1, 2], [0], [0]>} : vector<8x1x128xf32>, vector<8x128x64xf32>, vector<8x1x64xf32> -> vector<8x1x64xf32>
    "tpu.trace_stop"() : () -> ()
    %234 = tpu.transpose %233, [1, 0, 2] : vector<8x1x64xf32> -> vector<1x8x64xf32>
    %c0_66 = arith.constant 0 : index
    %c0_67 = arith.constant 0 : index
    %c0_68 = arith.constant 0 : index
    %235 = vector.load %arg7[%c0_66, %c0_67, %c0_68] : memref<1x8x64xf32, #tpu.memory_space<vmem>>, vector<1x8x64xf32>
    tpu.vector_store %arg7[%c0_66, %c0_67, %c0_68], %234 {strides = array<i32>} : memref<1x8x64xf32, #tpu.memory_space<vmem>>, vector<1x8x64xf32>,
    return
  }
  func.func @transform_0(%arg0: i32, %arg1: i32) -> (i32, i32, i32) {
    %c0_i32 = arith.constant 0 : i32
    %c0_i32_0 = arith.constant 0 : i32
    return %arg1, %arg0, %c0_i32 : i32, i32, i32
  }
  func.func @transform_1(%arg0: i32, %arg1: i32) -> (i32, i32, i32) {
    %c0_i32 = arith.constant 0 : i32
    %c0_i32_0 = arith.constant 0 : i32
    %c0_i32_1 = arith.constant 0 : i32
    return %arg0, %c0_i32, %c0_i32_0 : i32, i32, i32
  }
  func.func @transform_2(%arg0: i32, %arg1: i32) -> (i32, i32) {
    %c0_i32 = arith.constant 0 : i32
    %c0_i32_0 = arith.constant 0 : i32
    return %arg0, %c0_i32 : i32, i32
  }
  func.func @transform_3(%arg0: i32, %arg1: i32) -> (i32, i32) {
    %c0_i32 = arith.constant 0 : i32
    %c0_i32_0 = arith.constant 0 : i32
    return %arg0, %c0_i32 : i32, i32
  }
  func.func @transform_4(%arg0: i32, %arg1: i32) -> (i32, i32) {
    %c0_i32 = arith.constant 0 : i32
    %c0_i32_0 = arith.constant 0 : i32
    %c0_i32_1 = arith.constant 0 : i32
    return %c0_i32, %c0_i32_0 : i32, i32
  }
  func.func @transform_5(%arg0: i32, %arg1: i32) -> (i32, i32, i32) {
    %c0_i32 = arith.constant 0 : i32
    %c0_i32_0 = arith.constant 0 : i32
    return %arg1, %arg0, %c0_i32 : i32, i32, i32
  }
  func.func @transform_6(%arg0: i32, %arg1: i32) -> (i32, i32, i32) {
    %c0_i32 = arith.constant 0 : i32
    %c0_i32_0 = arith.constant 0 : i32
    return %arg1, %arg0, %c0_i32 : i32, i32, i32
  }
}

</mosaic_0001>

<llo_original>
// kernel: tpu_custom_call.1
$region0: #{tpu_custom_call.1}
  #allocation0 [shape = 'u32[]', space=smem, size = 0x4, offset = 0x4, fixed_abs, tag = 'smem constant byte address 0x4 - core index']
  #allocation1 [shape = 'u32[144,128]{1,0:T(1,128)}', space=vmem, size = 0x12000, scoped, tag = 'internal scratch']
  #allocation2 [shape = 'f32[8,128]{1,0:T(8,128)}', space=vmem, size = 0x1000, scoped, tag = 'scratch operand']
  %s0 = inlined_call_operand.vmem [shape: f32[4,16,16], index: 0, kind: input, shape index: {}]
  %s1 = inlined_call_operand.vmem [shape: f32[16,128,64], index: 1, kind: input, shape index: {}]
  %s2 = inlined_call_operand.vmem [shape: f32[16,128], index: 2, kind: input, shape index: {}]
  %s3 = inlined_call_operand.vmem [shape: s32[16,128], index: 3, kind: input, shape index: {}]
  %s4 = inlined_call_operand.vmem [shape: f32[88,128], index: 4, kind: input, shape index: {}]
  %s5 = inlined_call_operand.hbm [shape: f32[4,16,64], index: 5, kind: output, shape index: {0}]
  %s6 = inlined_call_operand.hbm [shape: f32[4,16,128], index: 6, kind: output, shape index: {1}]
  %7 = xla_tuple %s5, %s6
  %s8 = sld [smem:[#allocation0]]
  $region65: #{tpu_custom_call.1} parent=0
    _
  %s10 = ssub.s32 1, %s8
  %s11 = scalar_select 0, %s10, %s8
  $region1: #{tpu_custom_call.1} parent=0
    #allocation3 [shape = 'u8[8192]{0}', space=vmem, size = 0x2000, scoped, tag = 'output window, operand 0']
    #allocation4 [shape = 's32[2]{0}', space=sflag, size = 0x8, scoped, tag = 'scoped memory for tpu_custom_call.1']
    #allocation5 [shape = 'u8[8192]{0}', space=vmem, size = 0x2000, scoped, tag = 'output window, operand 1']
    #allocation6 [shape = 's32[2]{0}', space=sflag, size = 0x8, scoped, tag = 'scoped memory for tpu_custom_call.1']
    %12 = vsyncpa [#allocation4], 0
    %s13 = scalar_lea.sflag [#allocation4], 1
    %14 = vsyncpa %s13, 0
    %15 = vsyncpa [#allocation6], 0
    %s16 = scalar_lea.sflag [#allocation6], 1
    %17 = vsyncpa %s16, 0
    loop: start=0, step=1, limit=10
    $region2: #{tpu_custom_call.1} parent=1 // loop_pre_header
      _
    $region3: #{tpu_custom_call.1} parent=1 // loop_header
      %s19 = sphi 0, %s23
      %p20 = scmp.ge.s32.totalorder %s19, 10
      %s26 = sphi 0, %s38
      %s27 = sphi 0, %s34
      %s28 = sphi 0, %s26
      %s29 = sphi 0, %s27
      %s30 = sphi 0, %s28
      %s31 = sphi 0, %s29
      %s43 = sphi 0, %s45
      %s46 = sphi 0, %s43
      %s47 = sphi 0, %s46
      %s63 = sphi 0, %s47
      %s69 = sphi 0, %s71
      %s72 = sphi 0, %s69
      %s73 = sphi 0, %s72
      %s89 = sphi 0, %s73
      %s95 = sphi 0, %s97
      %s98 = sphi 0, %s95
      %s99 = sphi 0, %s98
      %s115 = sphi 0, %s99
      %s121 = sphi 0, %s123
      %s124 = sphi 0, %s121
      %s125 = sphi 0, %s124
      %s141 = sphi 0, %s125
      %s145 = sphi 0, %s145
      %s147 = sphi 0, %s145
      %s148 = sphi 0, %s147
      %s162 = sphi 0, %s148
      %s170 = sphi 0, %s172
      %s173 = sphi 0, %s170
      %s174 = sphi 0, %s173
      %s190 = sphi 0, %s174
      %s198 = sphi 0, %s200
      %s201 = sphi 0, %s198
      %s202 = sphi 0, %s201
      %s218 = sphi 0, %s202
    $region4: #{tpu_custom_call.1} parent=1 // loop_header_branch
      %22 = sbr.rel (%p20) target = $region8
    $region5: #{tpu_custom_call.1} parent=1 // loop_body
      %s24 = ssub.s32 %s19, 1
      %s25 = ssub.s32 %s19, 2
      %s32 = sadd.s32 1, %s27
      %p33 = scmp.ge.s32.totalorder %s32, 4
      %s34 = scalar_select %p33, 0, %s32
      %s35 = sadd.s32 1, %s26
      %s36 = scalar_select %p33, %s35, %s26
      %p37 = scmp.ge.s32.totalorder %s36, 2
      %s38 = scalar_select %p37, 0, %s36
      %s39 = ssub.s32 %s27, %s34
      %s40 = ssub.s32 %s26, %s38
      %s41 = sor.u32 %s39, %s40
      %p42 = scmp.eq.s32.totalorder %s41, 0
      %s44 = sadd.s32 %s43, 1
      %s45 = scalar_select %p42, %s43, %s44
      %p48 = pneg %p42
      %p49 = scmp.eq.s32.totalorder %s19, 7
      %p50 = por %p48, %p49
      %p51 = scmp.ne.s32.totalorder %s43, %s46
      %p52 = scmp.eq.s32.totalorder %s19, 0
      %p53 = por %p51, %p52
      %p54 = scmp.ne.s32.totalorder %s43, %s46
      %p55 = scmp.eq.s32.totalorder %s24, 7
      %p56 = por %p54, %p55
      %p57 = scmp.ne.s32.totalorder %s46, %s47
      %p58 = scmp.eq.s32.totalorder %s24, 0
      %p59 = por %p57, %p58
      %p60 = scmp.ne.s32.totalorder %s46, %s47
      %p61 = scmp.eq.s32.totalorder %s25, 7
      %p62 = por %p60, %p61
      %p64 = scmp.ne.s32.totalorder %s47, %s63
      %p65 = scmp.eq.s32.totalorder %s25, 0
      %p66 = por %p64, %p65
      %s67 = ssub.s32 %s26, %s38
      %p68 = scmp.eq.s32.totalorder %s67, 0
      %s70 = sadd.s32 %s69, 1
      %s71 = scalar_select %p68, %s69, %s70
      %p74 = pneg %p68
      %p75 = scmp.eq.s32.totalorder %s19, 7
      %p76 = por %p74, %p75
      %p77 = scmp.ne.s32.totalorder %s69, %s72
      %p78 = scmp.eq.s32.totalorder %s19, 0
      %p79 = por %p77, %p78
      %p80 = scmp.ne.s32.totalorder %s69, %s72
      %p81 = scmp.eq.s32.totalorder %s24, 7
      %p82 = por %p80, %p81
      %p83 = scmp.ne.s32.totalorder %s72, %s73
      %p84 = scmp.eq.s32.totalorder %s24, 0
      %p85 = por %p83, %p84
      %p86 = scmp.ne.s32.totalorder %s72, %s73
      %p87 = scmp.eq.s32.totalorder %s25, 7
      %p88 = por %p86, %p87
      %p90 = scmp.ne.s32.totalorder %s73, %s89
      %p91 = scmp.eq.s32.totalorder %s25, 0
      %p92 = por %p90, %p91
      %s93 = ssub.s32 %s26, %s38
      %p94 = scmp.eq.s32.totalorder %s93, 0
      %s96 = sadd.s32 %s95, 1
      %s97 = scalar_select %p94, %s95, %s96
      %p100 = pneg %p94
      %p101 = scmp.eq.s32.totalorder %s19, 7
      %p102 = por %p100, %p101
      %p103 = scmp.ne.s32.totalorder %s95, %s98
      %p104 = scmp.eq.s32.totalorder %s19, 0
      %p105 = por %p103, %p104
      %p106 = scmp.ne.s32.totalorder %s95, %s98
      %p107 = scmp.eq.s32.totalorder %s24, 7
      %p108 = por %p106, %p107
      %p109 = scmp.ne.s32.totalorder %s98, %s99
      %p110 = scmp.eq.s32.totalorder %s24, 0
      %p111 = por %p109, %p110
      %p112 = scmp.ne.s32.totalorder %s98, %s99
      %p113 = scmp.eq.s32.totalorder %s25, 7
      %p114 = por %p112, %p113
      %p116 = scmp.ne.s32.totalorder %s99, %s115
      %p117 = scmp.eq.s32.totalorder %s25, 0
      %p118 = por %p116, %p117
      %s119 = ssub.s32 %s26, %s38
      %p120 = scmp.eq.s32.totalorder %s119, 0
      %s122 = sadd.s32 %s121, 1
      %s123 = scalar_select %p120, %s121, %s122
      %p126 = pneg %p120
      %p127 = scmp.eq.s32.totalorder %s19, 7
      %p128 = por %p126, %p127
      %p129 = scmp.ne.s32.totalorder %s121, %s124
      %p130 = scmp.eq.s32.totalorder %s19, 0
      %p131 = por %p129, %p130
      %p132 = scmp.ne.s32.totalorder %s121, %s124
      %p133 = scmp.eq.s32.totalorder %s24, 7
      %p134 = por %p132, %p133
      %p135 = scmp.ne.s32.totalorder %s124, %s125
      %p136 = scmp.eq.s32.totalorder %s24, 0
      %p137 = por %p135, %p136
      %p138 = scmp.ne.s32.totalorder %s124, %s125
      %p139 = scmp.eq.s32.totalorder %s25, 7
      %p140 = por %p138, %p139
      %p142 = scmp.ne.s32.totalorder %s125, %s141
      %p143 = scmp.eq.s32.totalorder %s25, 0
      %p144 = por %p142, %p143
      %s146 = sadd.s32 %s145, 1
      %p149 = scmp.eq.s32.totalorder %s19, 7
      %p150 = scmp.ne.s32.totalorder %s145, %s147
      %p151 = scmp.eq.s32.totalorder %s19, 0
      %p152 = por %p150, %p151
      %p153 = scmp.ne.s32.totalorder %s145, %s147
      %p154 = scmp.eq.s32.totalorder %s24, 7
      %p155 = por %p153, %p154
      %p156 = scmp.ne.s32.totalorder %s147, %s148
      %p157 = scmp.eq.s32.totalorder %s24, 0
      %p158 = por %p156, %p157
      %p159 = scmp.ne.s32.totalorder %s147, %s148
      %p160 = scmp.eq.s32.totalorder %s25, 7
      %p161 = por %p159, %p160
      %p163 = scmp.ne.s32.totalorder %s148, %s162
      %p164 = scmp.eq.s32.totalorder %s25, 0
      %p165 = por %p163, %p164
      %s166 = ssub.s32 %s27, %s34
      %s167 = ssub.s32 %s26, %s38
      %s168 = sor.u32 %s166, %s167
      %p169 = scmp.eq.s32.totalorder %s168, 0
      %s171 = sadd.s32 %s170, 1
      %s172 = scalar_select %p169, %s170, %s171
      %p175 = pneg %p169
      %p176 = scmp.eq.s32.totalorder %s19, 7
      %p177 = por %p175, %p176
      %p178 = scmp.ne.s32.totalorder %s170, %s173
      %p179 = scmp.eq.s32.totalorder %s19, 0
      %p180 = por %p178, %p179
      %p181 = scmp.ne.s32.totalorder %s170, %s173
      %p182 = scmp.eq.s32.totalorder %s24, 7
      %p183 = por %p181, %p182
      %p184 = scmp.ne.s32.totalorder %s173, %s174
      %p185 = scmp.eq.s32.totalorder %s24, 0
      %p186 = por %p184, %p185
      %p187 = scmp.ne.s32.totalorder %s173, %s174
      %p188 = scmp.eq.s32.totalorder %s25, 7
      %p189 = por %p187, %p188
      %p191 = scmp.ne.s32.totalorder %s174, %s190
      %p192 = scmp.eq.s32.totalorder %s25, 0
      %p193 = por %p191, %p192
      %s194 = ssub.s32 %s27, %s34
      %s195 = ssub.s32 %s26, %s38
      %s196 = sor.u32 %s194, %s195
      %p197 = scmp.eq.s32.totalorder %s196, 0
      %s199 = sadd.s32 %s198, 1
      %s200 = scalar_select %p197, %s198, %s199
      %p203 = pneg %p197
      %p204 = scmp.eq.s32.totalorder %s19, 7
      %p205 = por %p203, %p204
      %p206 = scmp.ne.s32.totalorder %s198, %s201
      %p207 = scmp.eq.s32.totalorder %s19, 0
      %p208 = por %p206, %p207
      %p209 = scmp.ne.s32.totalorder %s198, %s201
      %p210 = scmp.eq.s32.totalorder %s24, 7
      %p211 = por %p209, %p210
      %p212 = scmp.ne.s32.totalorder %s201, %s202
      %p213 = scmp.eq.s32.totalorder %s24, 0
      %p214 = por %p212, %p213
      %p215 = scmp.ne.s32.totalorder %s201, %s202
      %p216 = scmp.eq.s32.totalorder %s25, 7
      %p217 = por %p215, %p216
      %p219 = scmp.ne.s32.totalorder %s202, %s218
      %p220 = scmp.eq.s32.totalorder %s25, 0
      %p221 = por %p219, %p220
      %p222 = scmp.le.s32.totalorder 1, %s19
      %p223 = scmp.lt.s32.totalorder %s19, 9
      %p224 = pnand %p222, %p223
      %p225 = pneg %p224
      // Predicated region
      $region9: #{tpu_custom_call.1} parent=5 // pred_check
        _
      $region10: #{tpu_custom_call.1} parent=5 // pred_check_branch
        %227 = sbr.rel (%p224) target = $region12
      $region11: #{tpu_custom_call.1} parent=5 // pred_region
        %s228 = ssub.s32 %s19, 1
        // Predicated region
        $region13: #{tpu_custom_call.1} parent=11 // pred_check
          %p229 = pneg %p158
        $region14: #{tpu_custom_call.1} parent=11 // pred_check_branch
          %231 = sbr.rel (%p229) target = $region16
        $region15: #{tpu_custom_call.1} parent=11 // pred_region
          _
        $region16: #{tpu_custom_call.1} parent=11 // pred_fallthru
          _
      $region12: #{tpu_custom_call.1} parent=5 // pred_fallthru
        _
      %p232 = scmp.lt.s32.totalorder %s19, 8
      // Predicated region
      $region17: #{tpu_custom_call.1} parent=5 // pred_check
        %p233 = pneg %p232
      $region18: #{tpu_custom_call.1} parent=5 // pred_check_branch
        %235 = sbr.rel (%p233) target = $region20
      $region19: #{tpu_custom_call.1} parent=5 // pred_region
        // Predicated region
        $region21: #{tpu_custom_call.1} parent=19 // pred_check
          %p236 = pneg %p53
        $region22: #{tpu_custom_call.1} parent=19 // pred_check_branch
          %238 = sbr.rel (%p236) target = $region24
        $region23: #{tpu_custom_call.1} parent=19 // pred_region
          %p239 = scmp.lt.s32.totalorder %s27, 3
          %s240 = scalar_select %p239, %s27, 3
          %p241 = scmp.lt.s32.totalorder %s26, 1
          %s242 = scalar_select %p241, %s26, 1
          %s243 = smul.addr %s240, 2
          %s244 = sadd.s32 %s242, %s243
          %s245 = smul.addr %s244, 8
          %s246 = scalar_lea.vmem %s0, %s245
        $region24: #{tpu_custom_call.1} parent=19 // pred_fallthru
          _
        // Predicated region
        $region25: #{tpu_custom_call.1} parent=19 // pred_check
          %p247 = pneg %p79
        $region26: #{tpu_custom_call.1} parent=19 // pred_check_branch
          %249 = sbr.rel (%p247) target = $region28
        $region27: #{tpu_custom_call.1} parent=19 // pred_region
          %s250 = smul.u32 8, %s26
          %p251 = scmp.lt.s32.totalorder %s250, 15
          %s252 = scalar_select %p251, %s250, 15
          %s253 = smul.addr %s252, 16
          %s254 = smul.addr %s253, 8
          %s255 = scalar_lea.vmem %s1, %s254
          %s256 = smul.u32 8, %s26
        $region28: #{tpu_custom_call.1} parent=19 // pred_fallthru
          _
        // Predicated region
        $region29: #{tpu_custom_call.1} parent=19 // pred_check
          %p257 = pneg %p105
        $region30: #{tpu_custom_call.1} parent=19 // pred_check_branch
          %259 = sbr.rel (%p257) target = $region32
        $region31: #{tpu_custom_call.1} parent=19 // pred_region
          %p260 = scmp.lt.s32.totalorder %s26, 1
          %s261 = scalar_select %p260, %s26, 1
          %s262 = smul.addr %s261, 8
          %s263 = scalar_lea.vmem %s2, %s262
        $region32: #{tpu_custom_call.1} parent=19 // pred_fallthru
          _
        // Predicated region
        $region33: #{tpu_custom_call.1} parent=19 // pred_check
          %p264 = pneg %p131
        $region34: #{tpu_custom_call.1} parent=19 // pred_check_branch
          %266 = sbr.rel (%p264) target = $region36
        $region35: #{tpu_custom_call.1} parent=19 // pred_region
          %p267 = scmp.lt.s32.totalorder %s26, 1
          %s268 = scalar_select %p267, %s26, 1
          %s269 = smul.addr %s268, 8
          %s270 = scalar_lea.vmem %s3, %s269
        $region36: #{tpu_custom_call.1} parent=19 // pred_fallthru
          _
      $region20: #{tpu_custom_call.1} parent=5 // pred_fallthru
        _
      %p271 = scmp.le.s32.totalorder 1, %s19
      %p272 = scmp.lt.s32.totalorder %s19, 9
      %p273 = pnand %p271, %p272
      %p274 = pneg %p273
      // Predicated region
      $region37: #{tpu_custom_call.1} parent=5 // pred_check
        _
      $region38: #{tpu_custom_call.1} parent=5 // pred_check_branch
        %276 = sbr.rel (%p273) target = $region40
      $region39: #{tpu_custom_call.1} parent=5 // pred_region
        %s277 = ssub.s32 %s19, 1
        %p278 = scmp.lt.s32.totalorder %s29, 3
        %s279 = scalar_select %p278, %s29, 3
        %p280 = scmp.lt.s32.totalorder %s28, 1
        %s281 = scalar_select %p280, %s28, 1
        %s282 = smul.addr %s279, 2
        %s283 = sadd.s32 %s281, %s282
        %s284 = smul.addr %s283, 8
        %s285 = scalar_lea.vmem %s0, %s284
        %p286 = pneg %p59
        %p287 = pneg %p56
        %s288 = smul.u32 8, %s28
        %p289 = scmp.lt.s32.totalorder %s288, 15
        %s290 = scalar_select %p289, %s288, 15
        %s291 = smul.addr %s290, 16
        %s292 = smul.addr %s291, 8
        %s293 = scalar_lea.vmem %s1, %s292
        %p294 = pneg %p85
        %p295 = pneg %p82
        %p296 = scmp.lt.s32.totalorder %s28, 1
        %s297 = scalar_select %p296, %s28, 1
        %s298 = smul.addr %s297, 8
        %s299 = scalar_lea.vmem %s2, %s298
        %p300 = pneg %p111
        %p301 = pneg %p108
        %p302 = scmp.lt.s32.totalorder %s28, 1
        %s303 = scalar_select %p302, %s28, 1
        %s304 = smul.addr %s303, 8
        %s305 = scalar_lea.vmem %s3, %s304
        %p306 = pneg %p137
        %p307 = pneg %p134
        %p308 = pneg %p158
        %p309 = pneg %p155
        %p310 = pneg %p186
        %p311 = pneg %p183
        %s312 = sand.u32 %s173, 1
        %s313 = scalar_lea.sflag [#allocation4], %s312
        %s314 = sand.u32 %s173, 1
        %s315 = smul.addr %s314, 8
        %s316 = scalar_lea.vmem [#allocation3], %s315
        %p317 = pneg %p214
        %p318 = pneg %p211
        %s319 = sand.u32 %s201, 1
        %s320 = scalar_lea.sflag [#allocation6], %s319
        %s321 = sand.u32 %s201, 1
        %s322 = smul.addr %s321, 8
        %s323 = scalar_lea.vmem [#allocation5], %s322
        %p324 = scmp.lt.s32.totalorder %s29, 3
        %s325 = scalar_select %p324, %s29, 3
        %p326 = scmp.lt.s32.totalorder %s28, 1
        %s327 = scalar_select %p326, %s28, 1
        %s328 = smul.addr %s325, 2
        %s329 = sadd.s32 %s327, %s328
        %s330 = smul.addr %s329, 8
        %s331 = scalar_lea.vmem %s0, %s330
        %s332 = smul.u32 8, %s28
        %p333 = scmp.lt.s32.totalorder %s332, 15
        %s334 = scalar_select %p333, %s332, 15
        %s335 = smul.addr %s334, 16
        %s336 = smul.addr %s335, 8
        %s337 = scalar_lea.vmem %s1, %s336
        %s338 = smul.u32 8, %s28
        %p339 = scmp.lt.s32.totalorder %s28, 1
        %s340 = scalar_select %p339, %s28, 1
        %s341 = smul.addr %s340, 8
        %s342 = scalar_lea.vmem %s2, %s341
        %p343 = scmp.lt.s32.totalorder %s28, 1
        %s344 = scalar_select %p343, %s28, 1
        %s345 = smul.addr %s344, 8
        %s346 = scalar_lea.vmem %s3, %s345
        %p347 = scmp.eq.s32.totalorder %s29, 0
        // Predicated region
        $region41: #{tpu_custom_call.1} parent=39 // pred_check
          %p348 = pneg %p347
        $region42: #{tpu_custom_call.1} parent=39 // pred_check_branch
          %350 = sbr.rel (%p348) target = $region44
        $region43: #{tpu_custom_call.1} parent=39 // pred_region
          %v351 = vld [vmem:[%s342] sm:$0xff]
          %352 = vst [vmem:[#allocation2] sm:$0xff] %v351
        $region44: #{tpu_custom_call.1} parent=39 // pred_fallthru
          _
        %v353 = vld [vmem:[#allocation2] sm:$0xff]
        %v354 = vld [vmem:[%s4] sm:$0xff]
        %v355 = vld [vmem:[%s4 + $0x8] sm:$0xff]
        %v356 = vld [vmem:[%s4 + $0x10] sm:$0x1]
        %v357 = vld [vmem:[%s4 + $0x18] sm:$0xff]
        %v358 = vld [vmem:[%s4 + $0x20] sm:$0xff]
        %v359 = vld [vmem:[%s4 + $0x28] sm:$0xff]
        %v360 = vld [vmem:[%s4 + $0x30] sm:$0xff]
        %v361 = vld [vmem:[%s4 + $0x38] sm:$0xff]
        %v362 = vld [vmem:[%s4 + $0x40] sm:$0xff]
        %v363 = vld [vmem:[%s4 + $0x48] sm:$0xff]
        %v364 = vld [vmem:[%s4 + $0x50] sm:$0xff]
        %v365 = vld [vmem:[%s331] sm:$0xff]
        %v366 = vlaneseq
        %v367 = vshrl.u32 %v366, 7
        %v368 = vsub.s32 0, %v367
        %v369 = vrot.slane %v356, %v368
        %vm370 = vcmask 130048
        %v372 = vsel %vm370, %v365, 0
        %374 = vmatprep.subr.mxu0 0.0
        %375 = vmatpush1.msra.mxu0 0.0
        %376 = vmatprep.subr.mxu0 0.0
        %377 = vmatpush1.msra.mxu0 0.0
        %378 = vmatprep.subr.mxu0 0.0
        %379 = vmatpush1.msra.mxu0 0.0
        %380 = vmatprep.subr.mxu0 0.0
        %381 = vmatpush1.msra.mxu0 0.0
        %382 = vmatprep.subr.mxu0 0.0
        %383 = vmatpush1.msra.mxu0 0.0
        %384 = vmatprep.subr.mxu0 0.0
        %385 = vmatpush1.msra.mxu0 0.0
        %386 = vmatprep.subr.mxu0 0.0
        %387 = vmatpush1.msra.mxu0 0.0
        %388 = vmatprep.subr.mxu0 0.0
        %389 = vmatpush1.msra.mxu0 0.0
        %390 = vmatprep.subr.mxu0 0.0
        %391 = vmatpush1.msra.mxu0 0.0
        %392 = vmatprep.subr.mxu0 0.0
        %393 = vmatpush1.msra.mxu0 0.0
        %394 = vmatprep.subr.mxu0 0.0
        %395 = vmatpush1.msra.mxu0 0.0
        %396 = vmatprep.subr.mxu0 0.0
        %397 = vmatpush1.msra.mxu0 0.0
        %398 = vmatprep.subr.mxu0 0.0
        %399 = vmatpush1.msra.mxu0 0.0
        %400 = vmatprep.subr.mxu0 0.0
        %401 = vmatpush1.msra.mxu0 0.0
        %402 = vmatprep.subr.mxu0 0.0
        %403 = vmatpush1.msra.mxu0 %v355
        %404 = vmatprep.subr.mxu0 0.0
        %405 = vmatpush1.msra.mxu0 %v354
        %406 = vmatprep.subr.mxu0 0.0
        %407 = vmatpush2.msra.mxu0 0.0
        %408 = vmatprep.subr.mxu0 0.0
        %409 = vmatpush2.msra.mxu0 0.0
        %410 = vmatprep.subr.mxu0 0.0
        %411 = vmatpush2.msra.mxu0 0.0
        %412 = vmatprep.subr.mxu0 0.0
        %413 = vmatpush2.msra.mxu0 0.0
        %414 = vmatprep.subr.mxu0 0.0
        %415 = vmatpush2.msra.mxu0 0.0
        %416 = vmatprep.subr.mxu0 0.0
        %417 = vmatpush2.msra.mxu0 0.0
        %418 = vmatprep.subr.mxu0 0.0
        %419 = vmatpush2.msra.mxu0 0.0
        %420 = vmatprep.subr.mxu0 0.0
        %421 = vmatpush2.msra.mxu0 0.0
        %422 = vmatprep.subr.mxu0 0.0
        %423 = vmatpush2.msra.mxu0 0.0
        %424 = vmatprep.subr.mxu0 0.0
        %425 = vmatpush2.msra.mxu0 0.0
        %426 = vmatprep.subr.mxu0 0.0
        %427 = vmatpush2.msra.mxu0 0.0
        %428 = vmatprep.subr.mxu0 0.0
        %429 = vmatpush2.msra.mxu0 0.0
        %430 = vmatprep.subr.mxu0 0.0
        %431 = vmatpush2.msra.mxu0 0.0
        %432 = vmatprep.subr.mxu0 0.0
        %433 = vmatpush2.msra.mxu0 0.0
        %434 = vmatprep.subr.mxu0 0.0
        %435 = vmatpush2.msra.mxu0 0.0
        %436 = vmatprep.subr.mxu0 0.0
        %437 = vmatpush2.msra.mxu0 0.0
        %438 = vmatprep.mubr.f32.mxu0 0.0
        %439 = vmatmul.mubr.f32.gmra.mxu0 %v372
        %v440 = vpop.f32.mrf.mxu0
        %v441 = vadd.f32 %v369, %v440
        %v442 = vpop.f32.mrf.mxu0
        %443 = vdwg.mxu0
        %v444 = vtanh.pop %v441
        %vm445 = vcmask 261120
        %v447 = vsel %vm445, %v444, 0
        %449 = vmatprep.subr.mxu0 0.0
        %450 = vmatpush1.msra.mxu0 0.0
        %451 = vmatprep.subr.mxu0 0.0
        %452 = vmatpush1.msra.mxu0 0.0
        %453 = vmatprep.subr.mxu0 0.0
        %454 = vmatpush1.msra.mxu0 0.0
        %455 = vmatprep.subr.mxu0 0.0
        %456 = vmatpush1.msra.mxu0 0.0
        %457 = vmatprep.subr.mxu0 0.0
        %458 = vmatpush1.msra.mxu0 0.0
        %459 = vmatprep.subr.mxu0 0.0
        %460 = vmatpush1.msra.mxu0 0.0
        %461 = vmatprep.subr.mxu0 0.0
        %462 = vmatpush1.msra.mxu0 0.0
        %463 = vmatprep.subr.mxu0 0.0
        %464 = vmatpush1.msra.mxu0 0.0
        %465 = vmatprep.subr.mxu0 0.0
        %466 = vmatpush1.msra.mxu0 0.0
        %467 = vmatprep.subr.mxu0 0.0
        %468 = vmatpush1.msra.mxu0 0.0
        %469 = vmatprep.subr.mxu0 0.0
        %470 = vmatpush1.msra.mxu0 0.0
        %471 = vmatprep.subr.mxu0 0.0
        %472 = vmatpush1.msra.mxu0 0.0
        %473 = vmatprep.subr.mxu0 0.0
        %474 = vmatpush1.msra.mxu0 %v364
        %475 = vmatprep.subr.mxu0 0.0
        %476 = vmatpush1.msra.mxu0 %v363
        %477 = vmatprep.subr.mxu0 0.0
        %478 = vmatpush1.msra.mxu0 %v362
        %479 = vmatprep.subr.mxu0 0.0
        %480 = vmatpush1.msra.mxu0 %v361
        %481 = vmatprep.subr.mxu0 0.0
        %482 = vmatpush2.msra.mxu0 0.0
        %483 = vmatprep.subr.mxu0 0.0
        %484 = vmatpush2.msra.mxu0 0.0
        %485 = vmatprep.subr.mxu0 0.0
        %486 = vmatpush2.msra.mxu0 0.0
        %487 = vmatprep.subr.mxu0 0.0
        %488 = vmatpush2.msra.mxu0 0.0
        %489 = vmatprep.subr.mxu0 0.0
        %490 = vmatpush2.msra.mxu0 0.0
        %491 = vmatprep.subr.mxu0 0.0
        %492 = vmatpush2.msra.mxu0 0.0
        %493 = vmatprep.subr.mxu0 0.0
        %494 = vmatpush2.msra.mxu0 0.0
        %495 = vmatprep.subr.mxu0 0.0
        %496 = vmatpush2.msra.mxu0 0.0
        %497 = vmatprep.subr.mxu0 0.0
        %498 = vmatpush2.msra.mxu0 0.0
        %499 = vmatprep.subr.mxu0 0.0
        %500 = vmatpush2.msra.mxu0 0.0
        %501 = vmatprep.subr.mxu0 0.0
        %502 = vmatpush2.msra.mxu0 0.0
        %503 = vmatprep.subr.mxu0 0.0
        %504 = vmatpush2.msra.mxu0 0.0
        %505 = vmatprep.subr.mxu0 0.0
        %506 = vmatpush2.msra.mxu0 0.0
        %507 = vmatprep.subr.mxu0 0.0
        %508 = vmatpush2.msra.mxu0 0.0
        %509 = vmatprep.subr.mxu0 0.0
        %510 = vmatpush2.msra.mxu0 0.0
        %511 = vmatprep.subr.mxu0 0.0
        %512 = vmatpush2.msra.mxu0 0.0
        %513 = vmatprep.mubr.f32.mxu0 0.0
        %514 = vmatmul.mubr.f32.gmra.mxu0 %v447
        %v515 = vpop.f32.mrf.mxu0
        %v516 = vadd.f32 0.0, %v515
        %v517 = vpop.f32.mrf.mxu0
        %518 = vdwg.mxu0
        %520 = vrot.lane.b32.xlu0 %v516, 125
        %v521 = vpop.permute.xlu0 %520
        %523 = vrot.lane.b32.xlu0 %v516, 122
        %v524 = vpop.permute.xlu0 %523
        %526 = vrot.lane.b32.xlu0 %v516, 119
        %v527 = vpop.permute.xlu0 %526
        %529 = vrot.lane.b32.xlu0 %v516, 116
        %v530 = vpop.permute.xlu0 %529
        %532 = vrot.lane.b32.xlu0 %v516, 113
        %v533 = vpop.permute.xlu0 %532
        %535 = vrot.lane.b32.xlu0 %v516, 110
        %v536 = vpop.permute.xlu0 %535
        %538 = vrot.lane.b32.xlu0 %v516, 107
        %v539 = vpop.permute.xlu0 %538
        %541 = vrot.lane.b32.xlu0 %v516, 104
        %v542 = vpop.permute.xlu0 %541
        %544 = vrot.lane.b32.xlu0 %v516, 101
        %v545 = vpop.permute.xlu0 %544
        %547 = vrot.lane.b32.xlu0 %v516, 98
        %v548 = vpop.permute.xlu0 %547
        %550 = vrot.lane.b32.xlu0 %v516, 95
        %v551 = vpop.permute.xlu0 %550
        %553 = vrot.lane.b32.xlu0 %v516, 92
        %v554 = vpop.permute.xlu0 %553
        %556 = vrot.lane.b32.xlu0 %v516, 89
        %v557 = vpop.permute.xlu0 %556
        %559 = vrot.lane.b32.xlu0 %v516, 86
        %v560 = vpop.permute.xlu0 %559
        %562 = vrot.lane.b32.xlu0 %v516, 83
        %v563 = vpop.permute.xlu0 %562
        %565 = vrot.lane.b32.xlu0 %v516, 80
        %v566 = vpop.permute.xlu0 %565
        %568 = vrot.lane.b32.xlu0 %v516, 77
        %v569 = vpop.permute.xlu0 %568
        %571 = vrot.lane.b32.xlu0 %v516, 74
        %v572 = vpop.permute.xlu0 %571
        %574 = vrot.lane.b32.xlu0 %v516, 71
        %v575 = vpop.permute.xlu0 %574
        %577 = vrot.lane.b32.xlu0 %v516, 68
        %v578 = vpop.permute.xlu0 %577
        %580 = vrot.lane.b32.xlu0 %v516, 65
        %v581 = vpop.permute.xlu0 %580
        %583 = vrot.lane.b32.xlu0 %v516, 62
        %v584 = vpop.permute.xlu0 %583
        %586 = vrot.lane.b32.xlu0 %v516, 59
        %v587 = vpop.permute.xlu0 %586
        %589 = vrot.lane.b32.xlu0 %v516, 56
        %v590 = vpop.permute.xlu0 %589
        %592 = vrot.lane.b32.xlu0 %v516, 53
        %v593 = vpop.permute.xlu0 %592
        %595 = vrot.lane.b32.xlu0 %v516, 50
        %v596 = vpop.permute.xlu0 %595
        %598 = vrot.lane.b32.xlu0 %v516, 47
        %v599 = vpop.permute.xlu0 %598
        %601 = vrot.lane.b32.xlu0 %v516, 44
        %v602 = vpop.permute.xlu0 %601
        %604 = vrot.lane.b32.xlu0 %v516, 41
        %v605 = vpop.permute.xlu0 %604
        %607 = vrot.lane.b32.xlu0 %v516, 38
        %v608 = vpop.permute.xlu0 %607
        %610 = vrot.lane.b32.xlu0 %v516, 35
        %v611 = vpop.permute.xlu0 %610
        %v613 = vcombine.low %v516, %v524
        %v614 = vcombine.high %v516, %v524
        %v616 = vunpack.c.l.s4 1983009808
        %v617 = vunpack.c.0.s8 %v616
        %v618 = vlaneseq
        %v619 = vshrl.u32 %v618, 7
        %v620 = vsub.s32 %v617, %v619
        %v621 = vrot.slane %v613, %v620
        %v623 = vunpack.c.l.s4 1983009808
        %v624 = vunpack.c.0.s8 %v623
        %v625 = vlaneseq
        %v626 = vshrl.u32 %v625, 7
        %v627 = vsub.s32 %v624, %v626
        %v628 = vrot.slane %v614, %v627
        %v629 = vcombine.low %v521, %v527
        %v630 = vcombine.high %v521, %v527
        %v632 = vunpack.c.l.s4 1983009808
        %v633 = vunpack.c.0.s8 %v632
        %v634 = vlaneseq
        %v635 = vshrl.u32 %v634, 7
        %v636 = vsub.s32 %v633, %v635
        %v637 = vrot.slane %v629, %v636
        %v639 = vunpack.c.l.s4 1983009808
        %v640 = vunpack.c.0.s8 %v639
        %v641 = vlaneseq
        %v642 = vshrl.u32 %v641, 7
        %v643 = vsub.s32 %v640, %v642
        %v644 = vrot.slane %v630, %v643
        %v645 = vcombine.low %v530, %v536
        %v646 = vcombine.high %v530, %v536
        %v648 = vunpack.c.l.s4 1983009808
        %v649 = vunpack.c.0.s8 %v648
        %v650 = vlaneseq
        %v651 = vshrl.u32 %v650, 7
        %v652 = vsub.s32 %v649, %v651
        %v653 = vrot.slane %v645, %v652
        %v655 = vunpack.c.l.s4 1983009808
        %v656 = vunpack.c.0.s8 %v655
        %v657 = vlaneseq
        %v658 = vshrl.u32 %v657, 7
        %v659 = vsub.s32 %v656, %v658
        %v660 = vrot.slane %v646, %v659
        %v661 = vcombine.low %v533, %v539
        %v662 = vcombine.high %v533, %v539
        %v664 = vunpack.c.l.s4 1983009808
        %v665 = vunpack.c.0.s8 %v664
        %v666 = vlaneseq
        %v667 = vshrl.u32 %v666, 7
        %v668 = vsub.s32 %v665, %v667
        %v669 = vrot.slane %v661, %v668
        %v671 = vunpack.c.l.s4 1983009808
        %v672 = vunpack.c.0.s8 %v671
        %v673 = vlaneseq
        %v674 = vshrl.u32 %v673, 7
        %v675 = vsub.s32 %v672, %v674
        %v676 = vrot.slane %v662, %v675
        %v677 = vcombine.low %v621, %v637
        %v678 = vcombine.high %v621, %v637
        %v680 = vunpack.c.l.s4 1934713408
        %v681 = vunpack.c.0.s8 %v680
        %v682 = vlaneseq
        %v683 = vshrl.u32 %v682, 7
        %v684 = vsub.s32 %v681, %v683
        %v685 = vrot.slane %v677, %v684
        %v687 = vunpack.c.l.s4 1934713408
        %v688 = vunpack.c.0.s8 %v687
        %v689 = vlaneseq
        %v690 = vshrl.u32 %v689, 7
        %v691 = vsub.s32 %v688, %v690
        %v692 = vrot.slane %v678, %v691
        %v693 = vcombine.low %v628, %v644
        %v694 = vcombine.high %v628, %v644
        %v696 = vunpack.c.l.s4 1934713408
        %v697 = vunpack.c.0.s8 %v696
        %v698 = vlaneseq
        %v699 = vshrl.u32 %v698, 7
        %v700 = vsub.s32 %v697, %v699
        %v701 = vrot.slane %v693, %v700
        %v703 = vunpack.c.l.s4 1934713408
        %v704 = vunpack.c.0.s8 %v703
        %v705 = vlaneseq
        %v706 = vshrl.u32 %v705, 7
        %v707 = vsub.s32 %v704, %v706
        %v708 = vrot.slane %v694, %v707
        %v709 = vcombine.low %v653, %v669
        %v710 = vcombine.high %v653, %v669
        %v712 = vunpack.c.l.s4 1934713408
        %v713 = vunpack.c.0.s8 %v712
        %v714 = vlaneseq
        %v715 = vshrl.u32 %v714, 7
        %v716 = vsub.s32 %v713, %v715
        %v717 = vrot.slane %v709, %v716
        %v719 = vunpack.c.l.s4 1934713408
        %v720 = vunpack.c.0.s8 %v719
        %v721 = vlaneseq
        %v722 = vshrl.u32 %v721, 7
        %v723 = vsub.s32 %v720, %v722
        %v724 = vrot.slane %v710, %v723
        %v725 = vcombine.low %v660, %v676
        %v726 = vcombine.high %v660, %v676
        %v728 = vunpack.c.l.s4 1934713408
        %v729 = vunpack.c.0.s8 %v728
        %v730 = vlaneseq
        %v731 = vshrl.u32 %v730, 7
        %v732 = vsub.s32 %v729, %v731
        %v733 = vrot.slane %v725, %v732
        %v735 = vunpack.c.l.s4 1934713408
        %v736 = vunpack.c.0.s8 %v735
        %v737 = vlaneseq
        %v738 = vshrl.u32 %v737, 7
        %v739 = vsub.s32 %v736, %v738
        %v740 = vrot.slane %v726, %v739
        %v741 = vcombine.low %v685, %v717
        %v742 = vcombine.high %v685, %v717
        %v743 = vcombine.low %v692, %v724
        %v744 = vcombine.high %v692, %v724
        %v745 = vcombine.low %v701, %v733
        %v746 = vcombine.high %v701, %v733
        %v747 = vcombine.low %v708, %v740
        %v748 = vcombine.high %v708, %v740
        %v749 = vcombine.low %v542, %v548
        %v750 = vcombine.high %v542, %v548
        %v752 = vunpack.c.l.s4 1983009808
        %v753 = vunpack.c.0.s8 %v752
        %v754 = vlaneseq
        %v755 = vshrl.u32 %v754, 7
        %v756 = vsub.s32 %v753, %v755
        %v757 = vrot.slane %v749, %v756
        %v759 = vunpack.c.l.s4 1983009808
        %v760 = vunpack.c.0.s8 %v759
        %v761 = vlaneseq
        %v762 = vshrl.u32 %v761, 7
        %v763 = vsub.s32 %v760, %v762
        %v764 = vrot.slane %v750, %v763
        %v765 = vcombine.low %v545, %v551
        %v766 = vcombine.high %v545, %v551
        %v768 = vunpack.c.l.s4 1983009808
        %v769 = vunpack.c.0.s8 %v768
        %v770 = vlaneseq
        %v771 = vshrl.u32 %v770, 7
        %v772 = vsub.s32 %v769, %v771
        %v773 = vrot.slane %v765, %v772
        %v775 = vunpack.c.l.s4 1983009808
        %v776 = vunpack.c.0.s8 %v775
        %v777 = vlaneseq
        %v778 = vshrl.u32 %v777, 7
        %v779 = vsub.s32 %v776, %v778
        %v780 = vrot.slane %v766, %v779
        %v781 = vcombine.low %v554, %v560
        %v782 = vcombine.high %v554, %v560
        %v784 = vunpack.c.l.s4 1983009808
        %v785 = vunpack.c.0.s8 %v784
        %v786 = vlaneseq
        %v787 = vshrl.u32 %v786, 7
        %v788 = vsub.s32 %v785, %v787
        %v789 = vrot.slane %v781, %v788
        %v791 = vunpack.c.l.s4 1983009808
        %v792 = vunpack.c.0.s8 %v791
        %v793 = vlaneseq
        %v794 = vshrl.u32 %v793, 7
        %v795 = vsub.s32 %v792, %v794
        %v796 = vrot.slane %v782, %v795
        %v797 = vcombine.low %v557, %v563
        %v798 = vcombine.high %v557, %v563
        %v800 = vunpack.c.l.s4 1983009808
        %v801 = vunpack.c.0.s8 %v800
        %v802 = vlaneseq
        %v803 = vshrl.u32 %v802, 7
        %v804 = vsub.s32 %v801, %v803
        %v805 = vrot.slane %v797, %v804
        %v807 = vunpack.c.l.s4 1983009808
        %v808 = vunpack.c.0.s8 %v807
        %v809 = vlaneseq
        %v810 = vshrl.u32 %v809, 7
        %v811 = vsub.s32 %v808, %v810
        %v812 = vrot.slane %v798, %v811
        %v813 = vcombine.low %v757, %v773
        %v814 = vcombine.high %v757, %v773
        %v816 = vunpack.c.l.s4 1934713408
        %v817 = vunpack.c.0.s8 %v816
        %v818 = vlaneseq
        %v819 = vshrl.u32 %v818, 7
        %v820 = vsub.s32 %v817, %v819
        %v821 = vrot.slane %v813, %v820
        %v823 = vunpack.c.l.s4 1934713408
        %v824 = vunpack.c.0.s8 %v823
        %v825 = vlaneseq
        %v826 = vshrl.u32 %v825, 7
        %v827 = vsub.s32 %v824, %v826
        %v828 = vrot.slane %v814, %v827
        %v829 = vcombine.low %v764, %v780
        %v830 = vcombine.high %v764, %v780
        %v832 = vunpack.c.l.s4 1934713408
        %v833 = vunpack.c.0.s8 %v832
        %v834 = vlaneseq
        %v835 = vshrl.u32 %v834, 7
        %v836 = vsub.s32 %v833, %v835
        %v837 = vrot.slane %v829, %v836
        %v839 = vunpack.c.l.s4 1934713408
        %v840 = vunpack.c.0.s8 %v839
        %v841 = vlaneseq
        %v842 = vshrl.u32 %v841, 7
        %v843 = vsub.s32 %v840, %v842
        %v844 = vrot.slane %v830, %v843
        %v845 = vcombine.low %v789, %v805
        %v846 = vcombine.high %v789, %v805
        %v848 = vunpack.c.l.s4 1934713408
        %v849 = vunpack.c.0.s8 %v848
        %v850 = vlaneseq
        %v851 = vshrl.u32 %v850, 7
        %v852 = vsub.s32 %v849, %v851
        %v853 = vrot.slane %v845, %v852
        %v855 = vunpack.c.l.s4 1934713408
        %v856 = vunpack.c.0.s8 %v855
        %v857 = vlaneseq
        %v858 = vshrl.u32 %v857, 7
        %v859 = vsub.s32 %v856, %v858
        %v860 = vrot.slane %v846, %v859
        %v861 = vcombine.low %v796, %v812
        %v862 = vcombine.high %v796, %v812
        %v864 = vunpack.c.l.s4 1934713408
        %v865 = vunpack.c.0.s8 %v864
        %v866 = vlaneseq
        %v867 = vshrl.u32 %v866, 7
        %v868 = vsub.s32 %v865, %v867
        %v869 = vrot.slane %v861, %v868
        %v871 = vunpack.c.l.s4 1934713408
        %v872 = vunpack.c.0.s8 %v871
        %v873 = vlaneseq
        %v874 = vshrl.u32 %v873, 7
        %v875 = vsub.s32 %v872, %v874
        %v876 = vrot.slane %v862, %v875
        %v877 = vcombine.low %v821, %v853
        %v878 = vcombine.high %v821, %v853
        %v879 = vcombine.low %v828, %v860
        %v880 = vcombine.high %v828, %v860
        %v881 = vcombine.low %v837, %v869
        %v882 = vcombine.high %v837, %v869
        %v883 = vcombine.low %v844, %v876
        %v884 = vcombine.high %v844, %v876
        %v885 = vcombine.low %v566, %v572
        %v886 = vcombine.high %v566, %v572
        %v888 = vunpack.c.l.s4 1983009808
        %v889 = vunpack.c.0.s8 %v888
        %v890 = vlaneseq
        %v891 = vshrl.u32 %v890, 7
        %v892 = vsub.s32 %v889, %v891
        %v893 = vrot.slane %v885, %v892
        %v895 = vunpack.c.l.s4 1983009808
        %v896 = vunpack.c.0.s8 %v895
        %v897 = vlaneseq
        %v898 = vshrl.u32 %v897, 7
        %v899 = vsub.s32 %v896, %v898
        %v900 = vrot.slane %v886, %v899
        %v901 = vcombine.low %v569, %v575
        %v902 = vcombine.high %v569, %v575
        %v904 = vunpack.c.l.s4 1983009808
        %v905 = vunpack.c.0.s8 %v904
        %v906 = vlaneseq
        %v907 = vshrl.u32 %v906, 7
        %v908 = vsub.s32 %v905, %v907
        %v909 = vrot.slane %v901, %v908
        %v911 = vunpack.c.l.s4 1983009808
        %v912 = vunpack.c.0.s8 %v911
        %v913 = vlaneseq
        %v914 = vshrl.u32 %v913, 7
        %v915 = vsub.s32 %v912, %v914
        %v916 = vrot.slane %v902, %v915
        %v917 = vcombine.low %v578, %v584
        %v918 = vcombine.high %v578, %v584
        %v920 = vunpack.c.l.s4 1983009808
        %v921 = vunpack.c.0.s8 %v920
        %v922 = vlaneseq
        %v923 = vshrl.u32 %v922, 7
        %v924 = vsub.s32 %v921, %v923
        %v925 = vrot.slane %v917, %v924
        %v927 = vunpack.c.l.s4 1983009808
        %v928 = vunpack.c.0.s8 %v927
        %v929 = vlaneseq
        %v930 = vshrl.u32 %v929, 7
        %v931 = vsub.s32 %v928, %v930
        %v932 = vrot.slane %v918, %v931
        %v933 = vcombine.low %v581, %v587
        %v934 = vcombine.high %v581, %v587
        %v936 = vunpack.c.l.s4 1983009808
        %v937 = vunpack.c.0.s8 %v936
        %v938 = vlaneseq
        %v939 = vshrl.u32 %v938, 7
        %v940 = vsub.s32 %v937, %v939
        %v941 = vrot.slane %v933, %v940
        %v943 = vunpack.c.l.s4 1983009808
        %v944 = vunpack.c.0.s8 %v943
        %v945 = vlaneseq
        %v946 = vshrl.u32 %v945, 7
        %v947 = vsub.s32 %v944, %v946
        %v948 = vrot.slane %v934, %v947
        %v949 = vcombine.low %v893, %v909
        %v950 = vcombine.high %v893, %v909
        %v952 = vunpack.c.l.s4 1934713408
        %v953 = vunpack.c.0.s8 %v952
        %v954 = vlaneseq
        %v955 = vshrl.u32 %v954, 7
        %v956 = vsub.s32 %v953, %v955
        %v957 = vrot.slane %v949, %v956
        %v959 = vunpack.c.l.s4 1934713408
        %v960 = vunpack.c.0.s8 %v959
        %v961 = vlaneseq
        %v962 = vshrl.u32 %v961, 7
        %v963 = vsub.s32 %v960, %v962
        %v964 = vrot.slane %v950, %v963
        %v965 = vcombine.low %v900, %v916
        %v966 = vcombine.high %v900, %v916
        %v968 = vunpack.c.l.s4 1934713408
        %v969 = vunpack.c.0.s8 %v968
        %v970 = vlaneseq
        %v971 = vshrl.u32 %v970, 7
        %v972 = vsub.s32 %v969, %v971
        %v973 = vrot.slane %v965, %v972
        %v975 = vunpack.c.l.s4 1934713408
        %v976 = vunpack.c.0.s8 %v975
        %v977 = vlaneseq
        %v978 = vshrl.u32 %v977, 7
        %v979 = vsub.s32 %v976, %v978
        %v980 = vrot.slane %v966, %v979
        %v981 = vcombine.low %v925, %v941
        %v982 = vcombine.high %v925, %v941
        %v984 = vunpack.c.l.s4 1934713408
        %v985 = vunpack.c.0.s8 %v984
        %v986 = vlaneseq
        %v987 = vshrl.u32 %v986, 7
        %v988 = vsub.s32 %v985, %v987
        %v989 = vrot.slane %v981, %v988
        %v991 = vunpack.c.l.s4 1934713408
        %v992 = vunpack.c.0.s8 %v991
        %v993 = vlaneseq
        %v994 = vshrl.u32 %v993, 7
        %v995 = vsub.s32 %v992, %v994
        %v996 = vrot.slane %v982, %v995
        %v997 = vcombine.low %v932, %v948
        %v998 = vcombine.high %v932, %v948
        %v1000 = vunpack.c.l.s4 1934713408
        %v1001 = vunpack.c.0.s8 %v1000
        %v1002 = vlaneseq
        %v1003 = vshrl.u32 %v1002, 7
        %v1004 = vsub.s32 %v1001, %v1003
        %v1005 = vrot.slane %v997, %v1004
        %v1007 = vunpack.c.l.s4 1934713408
        %v1008 = vunpack.c.0.s8 %v1007
        %v1009 = vlaneseq
        %v1010 = vshrl.u32 %v1009, 7
        %v1011 = vsub.s32 %v1008, %v1010
        %v1012 = vrot.slane %v998, %v1011
        %v1013 = vcombine.low %v957, %v989
        %v1014 = vcombine.high %v957, %v989
        %v1015 = vcombine.low %v964, %v996
        %v1016 = vcombine.high %v964, %v996
        %v1017 = vcombine.low %v973, %v1005
        %v1018 = vcombine.high %v973, %v1005
        %v1019 = vcombine.low %v980, %v1012
        %v1020 = vcombine.high %v980, %v1012
        %v1021 = vcombine.low %v590, %v596
        %v1022 = vcombine.high %v590, %v596
        %v1024 = vunpack.c.l.s4 1983009808
        %v1025 = vunpack.c.0.s8 %v1024
        %v1026 = vlaneseq
        %v1027 = vshrl.u32 %v1026, 7
        %v1028 = vsub.s32 %v1025, %v1027
        %v1029 = vrot.slane %v1021, %v1028
        %v1031 = vunpack.c.l.s4 1983009808
        %v1032 = vunpack.c.0.s8 %v1031
        %v1033 = vlaneseq
        %v1034 = vshrl.u32 %v1033, 7
        %v1035 = vsub.s32 %v1032, %v1034
        %v1036 = vrot.slane %v1022, %v1035
        %v1037 = vcombine.low %v593, %v599
        %v1038 = vcombine.high %v593, %v599
        %v1040 = vunpack.c.l.s4 1983009808
        %v1041 = vunpack.c.0.s8 %v1040
        %v1042 = vlaneseq
        %v1043 = vshrl.u32 %v1042, 7
        %v1044 = vsub.s32 %v1041, %v1043
        %v1045 = vrot.slane %v1037, %v1044
        %v1047 = vunpack.c.l.s4 1983009808
        %v1048 = vunpack.c.0.s8 %v1047
        %v1049 = vlaneseq
        %v1050 = vshrl.u32 %v1049, 7
        %v1051 = vsub.s32 %v1048, %v1050
        %v1052 = vrot.slane %v1038, %v1051
        %v1053 = vcombine.low %v602, %v608
        %v1054 = vcombine.high %v602, %v608
        %v1056 = vunpack.c.l.s4 1983009808
        %v1057 = vunpack.c.0.s8 %v1056
        %v1058 = vlaneseq
        %v1059 = vshrl.u32 %v1058, 7
        %v1060 = vsub.s32 %v1057, %v1059
        %v1061 = vrot.slane %v1053, %v1060
        %v1063 = vunpack.c.l.s4 1983009808
        %v1064 = vunpack.c.0.s8 %v1063
        %v1065 = vlaneseq
        %v1066 = vshrl.u32 %v1065, 7
        %v1067 = vsub.s32 %v1064, %v1066
        %v1068 = vrot.slane %v1054, %v1067
        %v1069 = vcombine.low %v605, %v611
        %v1070 = vcombine.high %v605, %v611
        %v1072 = vunpack.c.l.s4 1983009808
        %v1073 = vunpack.c.0.s8 %v1072
        %v1074 = vlaneseq
        %v1075 = vshrl.u32 %v1074, 7
        %v1076 = vsub.s32 %v1073, %v1075
        %v1077 = vrot.slane %v1069, %v1076
        %v1079 = vunpack.c.l.s4 1983009808
        %v1080 = vunpack.c.0.s8 %v1079
        %v1081 = vlaneseq
        %v1082 = vshrl.u32 %v1081, 7
        %v1083 = vsub.s32 %v1080, %v1082
        %v1084 = vrot.slane %v1070, %v1083
        %v1085 = vcombine.low %v1029, %v1045
        %v1086 = vcombine.high %v1029, %v1045
        %v1088 = vunpack.c.l.s4 1934713408
        %v1089 = vunpack.c.0.s8 %v1088
        %v1090 = vlaneseq
        %v1091 = vshrl.u32 %v1090, 7
        %v1092 = vsub.s32 %v1089, %v1091
        %v1093 = vrot.slane %v1085, %v1092
        %v1095 = vunpack.c.l.s4 1934713408
        %v1096 = vunpack.c.0.s8 %v1095
        %v1097 = vlaneseq
        %v1098 = vshrl.u32 %v1097, 7
        %v1099 = vsub.s32 %v1096, %v1098
        %v1100 = vrot.slane %v1086, %v1099
        %v1101 = vcombine.low %v1036, %v1052
        %v1102 = vcombine.high %v1036, %v1052
        %v1104 = vunpack.c.l.s4 1934713408
        %v1105 = vunpack.c.0.s8 %v1104
        %v1106 = vlaneseq
        %v1107 = vshrl.u32 %v1106, 7
        %v1108 = vsub.s32 %v1105, %v1107
        %v1109 = vrot.slane %v1101, %v1108
        %v1111 = vunpack.c.l.s4 1934713408
        %v1112 = vunpack.c.0.s8 %v1111
        %v1113 = vlaneseq
        %v1114 = vshrl.u32 %v1113, 7
        %v1115 = vsub.s32 %v1112, %v1114
        %v1116 = vrot.slane %v1102, %v1115
        %v1117 = vcombine.low %v1061, %v1077
        %v1118 = vcombine.high %v1061, %v1077
        %v1120 = vunpack.c.l.s4 1934713408
        %v1121 = vunpack.c.0.s8 %v1120
        %v1122 = vlaneseq
        %v1123 = vshrl.u32 %v1122, 7
        %v1124 = vsub.s32 %v1121, %v1123
        %v1125 = vrot.slane %v1117, %v1124
        %v1127 = vunpack.c.l.s4 1934713408
        %v1128 = vunpack.c.0.s8 %v1127
        %v1129 = vlaneseq
        %v1130 = vshrl.u32 %v1129, 7
        %v1131 = vsub.s32 %v1128, %v1130
        %v1132 = vrot.slane %v1118, %v1131
        %v1133 = vcombine.low %v1068, %v1084
        %v1134 = vcombine.high %v1068, %v1084
        %v1136 = vunpack.c.l.s4 1934713408
        %v1137 = vunpack.c.0.s8 %v1136
        %v1138 = vlaneseq
        %v1139 = vshrl.u32 %v1138, 7
        %v1140 = vsub.s32 %v1137, %v1139
        %v1141 = vrot.slane %v1133, %v1140
        %v1143 = vunpack.c.l.s4 1934713408
        %v1144 = vunpack.c.0.s8 %v1143
        %v1145 = vlaneseq
        %v1146 = vshrl.u32 %v1145, 7
        %v1147 = vsub.s32 %v1144, %v1146
        %v1148 = vrot.slane %v1134, %v1147
        %v1149 = vcombine.low %v1093, %v1125
        %v1150 = vcombine.high %v1093, %v1125
        %v1151 = vcombine.low %v1100, %v1132
        %v1152 = vcombine.high %v1100, %v1132
        %v1153 = vcombine.low %v1109, %v1141
        %v1154 = vcombine.high %v1109, %v1141
        %v1155 = vcombine.low %v1116, %v1148
        %v1156 = vcombine.high %v1116, %v1148
        %v1157 = vlaneseq
        %v1158 = vand.u32 %v1157, 127
        %v1159 = vmul.f32 %v353, 0.7400229
        %v1161 = vcombine.high %v353, %v353
        %v1163 = vunpack.c.l.s4 1966171168
        %v1164 = vunpack.c.0.s8 %v1163
        %v1165 = vlaneseq
        %v1166 = vshrl.u32 %v1165, 7
        %v1167 = vsub.s32 %v1164, %v1166
        %v1168 = vrot.slane %v353, %v1167
        %v1170 = vunpack.c.l.s4 1966171168
        %v1171 = vunpack.c.0.s8 %v1170
        %v1172 = vlaneseq
        %v1173 = vshrl.u32 %v1172, 7
        %v1174 = vsub.s32 %v1171, %v1173
        %v1175 = vrot.slane %v1161, %v1174
        %v1176 = vcombine.high %v1168, %v1168
        %v1177 = vcombine.high %v1175, %v1175
        %v1179 = vunpack.c.l.s4 1966171168
        %v1180 = vunpack.c.0.s8 %v1179
        %v1181 = vlaneseq
        %v1182 = vshrl.u32 %v1181, 7
        %v1183 = vsub.s32 %v1180, %v1182
        %v1184 = vrot.slane %v1168, %v1183
        %v1186 = vunpack.c.l.s4 1966171168
        %v1187 = vunpack.c.0.s8 %v1186
        %v1188 = vlaneseq
        %v1189 = vshrl.u32 %v1188, 7
        %v1190 = vsub.s32 %v1187, %v1189
        %v1191 = vrot.slane %v1175, %v1190
        %v1193 = vunpack.c.l.s4 1966171168
        %v1194 = vunpack.c.0.s8 %v1193
        %v1195 = vlaneseq
        %v1196 = vshrl.u32 %v1195, 7
        %v1197 = vsub.s32 %v1194, %v1196
        %v1198 = vrot.slane %v1176, %v1197
        %v1200 = vunpack.c.l.s4 1966171168
        %v1201 = vunpack.c.0.s8 %v1200
        %v1202 = vlaneseq
        %v1203 = vshrl.u32 %v1202, 7
        %v1204 = vsub.s32 %v1201, %v1203
        %v1205 = vrot.slane %v1177, %v1204
        %v1206 = vcombine.high %v1184, %v1184
        %v1207 = vcombine.high %v1191, %v1191
        %v1208 = vcombine.high %v1198, %v1198
        %v1209 = vcombine.high %v1205, %v1205
        %1242 = vrot.lane.b32.xlu0 %v741, 1
        %v1243 = vpop.permute.xlu0 %1242
        %1244 = vrot.lane.b32.xlu0 %v877, 1
        %v1245 = vpop.permute.xlu0 %1244
        %1246 = vrot.lane.b32.xlu0 %v1013, 1
        %v1247 = vpop.permute.xlu0 %1246
        %1248 = vrot.lane.b32.xlu0 %v1149, 1
        %v1249 = vpop.permute.xlu0 %1248
        %1250 = vrot.lane.b32.xlu0 %v742, 1
        %v1251 = vpop.permute.xlu0 %1250
        %1252 = vrot.lane.b32.xlu0 %v878, 1
        %v1253 = vpop.permute.xlu0 %1252
        %1254 = vrot.lane.b32.xlu0 %v1014, 1
        %v1255 = vpop.permute.xlu0 %1254
        %1256 = vrot.lane.b32.xlu0 %v1150, 1
        %v1257 = vpop.permute.xlu0 %1256
        %1258 = vrot.lane.b32.xlu0 %v743, 1
        %v1259 = vpop.permute.xlu0 %1258
        %1260 = vrot.lane.b32.xlu0 %v879, 1
        %v1261 = vpop.permute.xlu0 %1260
        %1262 = vrot.lane.b32.xlu0 %v1015, 1
        %v1263 = vpop.permute.xlu0 %1262
        %1264 = vrot.lane.b32.xlu0 %v1151, 1
        %v1265 = vpop.permute.xlu0 %1264
        %1266 = vrot.lane.b32.xlu0 %v744, 1
        %v1267 = vpop.permute.xlu0 %1266
        %1268 = vrot.lane.b32.xlu0 %v880, 1
        %v1269 = vpop.permute.xlu0 %1268
        %1270 = vrot.lane.b32.xlu0 %v1016, 1
        %v1271 = vpop.permute.xlu0 %1270
        %1272 = vrot.lane.b32.xlu0 %v1152, 1
        %v1273 = vpop.permute.xlu0 %1272
        %1274 = vrot.lane.b32.xlu0 %v745, 1
        %v1275 = vpop.permute.xlu0 %1274
        %1276 = vrot.lane.b32.xlu0 %v881, 1
        %v1277 = vpop.permute.xlu0 %1276
        %1278 = vrot.lane.b32.xlu0 %v1017, 1
        %v1279 = vpop.permute.xlu0 %1278
        %1280 = vrot.lane.b32.xlu0 %v1153, 1
        %v1281 = vpop.permute.xlu0 %1280
        %1282 = vrot.lane.b32.xlu0 %v746, 1
        %v1283 = vpop.permute.xlu0 %1282
        %1284 = vrot.lane.b32.xlu0 %v882, 1
        %v1285 = vpop.permute.xlu0 %1284
        %1286 = vrot.lane.b32.xlu0 %v1018, 1
        %v1287 = vpop.permute.xlu0 %1286
        %1288 = vrot.lane.b32.xlu0 %v1154, 1
        %v1289 = vpop.permute.xlu0 %1288
        %1290 = vrot.lane.b32.xlu0 %v747, 1
        %v1291 = vpop.permute.xlu0 %1290
        %1292 = vrot.lane.b32.xlu0 %v883, 1
        %v1293 = vpop.permute.xlu0 %1292
        %1294 = vrot.lane.b32.xlu0 %v1019, 1
        %v1295 = vpop.permute.xlu0 %1294
        %1296 = vrot.lane.b32.xlu0 %v1155, 1
        %v1297 = vpop.permute.xlu0 %1296
        %1298 = vrot.lane.b32.xlu0 %v748, 1
        %v1299 = vpop.permute.xlu0 %1298
        %1300 = vrot.lane.b32.xlu0 %v884, 1
        %v1301 = vpop.permute.xlu0 %1300
        %1302 = vrot.lane.b32.xlu0 %v1020, 1
        %v1303 = vpop.permute.xlu0 %1302
        %1304 = vrot.lane.b32.xlu0 %v1156, 1
        %v1305 = vpop.permute.xlu0 %1304
        %v1338 = vadd.f32 %v357, %v1243
        %v1339 = vadd.f32 %v358, %v1245
        %v1340 = vadd.f32 %v359, %v1247
        %v1341 = vadd.f32 %v360, %v1249
        %v1342 = vadd.f32 %v357, %v1251
        %v1343 = vadd.f32 %v358, %v1253
        %v1344 = vadd.f32 %v359, %v1255
        %v1345 = vadd.f32 %v360, %v1257
        %v1346 = vadd.f32 %v357, %v1259
        %v1347 = vadd.f32 %v358, %v1261
        %v1348 = vadd.f32 %v359, %v1263
        %v1349 = vadd.f32 %v360, %v1265
        %v1350 = vadd.f32 %v357, %v1267
        %v1351 = vadd.f32 %v358, %v1269
        %v1352 = vadd.f32 %v359, %v1271
        %v1353 = vadd.f32 %v360, %v1273
        %v1354 = vadd.f32 %v357, %v1275
        %v1355 = vadd.f32 %v358, %v1277
        %v1356 = vadd.f32 %v359, %v1279
        %v1357 = vadd.f32 %v360, %v1281
        %v1358 = vadd.f32 %v357, %v1283
        %v1359 = vadd.f32 %v358, %v1285
        %v1360 = vadd.f32 %v359, %v1287
        %v1361 = vadd.f32 %v360, %v1289
        %v1362 = vadd.f32 %v357, %v1291
        %v1363 = vadd.f32 %v358, %v1293
        %v1364 = vadd.f32 %v359, %v1295
        %v1365 = vadd.f32 %v360, %v1297
        %v1366 = vadd.f32 %v357, %v1299
        %v1367 = vadd.f32 %v358, %v1301
        %v1368 = vadd.f32 %v359, %v1303
        %v1369 = vadd.f32 %v360, %v1305
        %v1370 = vlaneseq
        %v1371 = vshrl.u32 %v1370, 7
        %v1372 = vsub.s32 0, %v1371
        %v1373 = vrot.slane %v1184, %v1372
        %v1374 = vlaneseq
        %v1375 = vshrl.u32 %v1374, 7
        %v1376 = vsub.s32 0, %v1375
        %v1377 = vrot.slane %v1198, %v1376
        %v1378 = vlaneseq
        %v1379 = vshrl.u32 %v1378, 7
        %v1380 = vsub.s32 0, %v1379
        %v1381 = vrot.slane %v1206, %v1380
        %v1382 = vlaneseq
        %v1383 = vshrl.u32 %v1382, 7
        %v1384 = vsub.s32 0, %v1383
        %v1385 = vrot.slane %v1208, %v1384
        %v1386 = vlaneseq
        %v1387 = vshrl.u32 %v1386, 7
        %v1388 = vsub.s32 0, %v1387
        %v1389 = vrot.slane %v1191, %v1388
        %v1390 = vlaneseq
        %v1391 = vshrl.u32 %v1390, 7
        %v1392 = vsub.s32 0, %v1391
        %v1393 = vrot.slane %v1205, %v1392
        %v1394 = vlaneseq
        %v1395 = vshrl.u32 %v1394, 7
        %v1396 = vsub.s32 0, %v1395
        %v1397 = vrot.slane %v1207, %v1396
        %v1398 = vlaneseq
        %v1399 = vshrl.u32 %v1398, 7
        %v1400 = vsub.s32 0, %v1399
        %v1401 = vrot.slane %v1209, %v1400
        %1411 = vset.pattern.permute.xlu0 2
        %1412 = vperm.xlu0 %1411, %v1338
        %v1413 = vpop.permute.xlu0 %1412
        %1416 = vset.pattern.permute.xlu0 2
        %1417 = vperm.xlu0 %1416, %v1339
        %v1418 = vpop.permute.xlu0 %1417
        %1421 = vset.pattern.permute.xlu0 2
        %1422 = vperm.xlu0 %1421, %v1340
        %v1423 = vpop.permute.xlu0 %1422
        %1426 = vset.pattern.permute.xlu0 2
        %1427 = vperm.xlu0 %1426, %v1341
        %v1428 = vpop.permute.xlu0 %1427
        %1431 = vset.pattern.permute.xlu0 2
        %1432 = vperm.xlu0 %1431, %v1342
        %v1433 = vpop.permute.xlu0 %1432
        %1436 = vset.pattern.permute.xlu0 2
        %1437 = vperm.xlu0 %1436, %v1343
        %v1438 = vpop.permute.xlu0 %1437
        %1441 = vset.pattern.permute.xlu0 2
        %1442 = vperm.xlu0 %1441, %v1344
        %v1443 = vpop.permute.xlu0 %1442
        %1446 = vset.pattern.permute.xlu0 2
        %1447 = vperm.xlu0 %1446, %v1345
        %v1448 = vpop.permute.xlu0 %1447
        %1451 = vset.pattern.permute.xlu0 2
        %1452 = vperm.xlu0 %1451, %v1346
        %v1453 = vpop.permute.xlu0 %1452
        %1456 = vset.pattern.permute.xlu0 2
        %1457 = vperm.xlu0 %1456, %v1347
        %v1458 = vpop.permute.xlu0 %1457
        %1461 = vset.pattern.permute.xlu0 2
        %1462 = vperm.xlu0 %1461, %v1348
        %v1463 = vpop.permute.xlu0 %1462
        %1466 = vset.pattern.permute.xlu0 2
        %1467 = vperm.xlu0 %1466, %v1349
        %v1468 = vpop.permute.xlu0 %1467
        %1471 = vset.pattern.permute.xlu0 2
        %1472 = vperm.xlu0 %1471, %v1350
        %v1473 = vpop.permute.xlu0 %1472
        %1476 = vset.pattern.permute.xlu0 2
        %1477 = vperm.xlu0 %1476, %v1351
        %v1478 = vpop.permute.xlu0 %1477
        %1481 = vset.pattern.permute.xlu0 2
        %1482 = vperm.xlu0 %1481, %v1352
        %v1483 = vpop.permute.xlu0 %1482
        %1486 = vset.pattern.permute.xlu0 2
        %1487 = vperm.xlu0 %1486, %v1353
        %v1488 = vpop.permute.xlu0 %1487
        %1491 = vset.pattern.permute.xlu0 2
        %1492 = vperm.xlu0 %1491, %v1354
        %v1493 = vpop.permute.xlu0 %1492
        %1496 = vset.pattern.permute.xlu0 2
        %1497 = vperm.xlu0 %1496, %v1355
        %v1498 = vpop.permute.xlu0 %1497
        %1501 = vset.pattern.permute.xlu0 2
        %1502 = vperm.xlu0 %1501, %v1356
        %v1503 = vpop.permute.xlu0 %1502
        %1506 = vset.pattern.permute.xlu0 2
        %1507 = vperm.xlu0 %1506, %v1357
        %v1508 = vpop.permute.xlu0 %1507
        %1511 = vset.pattern.permute.xlu0 2
        %1512 = vperm.xlu0 %1511, %v1358
        %v1513 = vpop.permute.xlu0 %1512
        %1516 = vset.pattern.permute.xlu0 2
        %1517 = vperm.xlu0 %1516, %v1359
        %v1518 = vpop.permute.xlu0 %1517
        %1521 = vset.pattern.permute.xlu0 2
        %1522 = vperm.xlu0 %1521, %v1360
        %v1523 = vpop.permute.xlu0 %1522
        %1526 = vset.pattern.permute.xlu0 2
        %1527 = vperm.xlu0 %1526, %v1361
        %v1528 = vpop.permute.xlu0 %1527
        %1531 = vset.pattern.permute.xlu0 2
        %1532 = vperm.xlu0 %1531, %v1362
        %v1533 = vpop.permute.xlu0 %1532
        %1536 = vset.pattern.permute.xlu0 2
        %1537 = vperm.xlu0 %1536, %v1363
        %v1538 = vpop.permute.xlu0 %1537
        %1541 = vset.pattern.permute.xlu0 2
        %1542 = vperm.xlu0 %1541, %v1364
        %v1543 = vpop.permute.xlu0 %1542
        %1546 = vset.pattern.permute.xlu0 2
        %1547 = vperm.xlu0 %1546, %v1365
        %v1548 = vpop.permute.xlu0 %1547
        %1551 = vset.pattern.permute.xlu0 2
        %1552 = vperm.xlu0 %1551, %v1366
        %v1553 = vpop.permute.xlu0 %1552
        %1556 = vset.pattern.permute.xlu0 2
        %1557 = vperm.xlu0 %1556, %v1367
        %v1558 = vpop.permute.xlu0 %1557
        %1561 = vset.pattern.permute.xlu0 2
        %1562 = vperm.xlu0 %1561, %v1368
        %v1563 = vpop.permute.xlu0 %1562
        %1566 = vset.pattern.permute.xlu0 2
        %1567 = vperm.xlu0 %1566, %v1369
        %v1568 = vpop.permute.xlu0 %1567
        %v1570 = vmul.f32 %v1373, %v1413
        %v1571 = vmul.f32 %v1373, %v1418
        %v1572 = vmul.f32 %v1373, %v1423
        %v1573 = vmul.f32 %v1373, %v1428
        %v1574 = vmul.f32 %v1377, %v1433
        %v1575 = vmul.f32 %v1377, %v1438
        %v1576 = vmul.f32 %v1377, %v1443
        %v1577 = vmul.f32 %v1377, %v1448
        %v1578 = vmul.f32 %v1381, %v1453
        %v1579 = vmul.f32 %v1381, %v1458
        %v1580 = vmul.f32 %v1381, %v1463
        %v1581 = vmul.f32 %v1381, %v1468
        %v1582 = vmul.f32 %v1385, %v1473
        %v1583 = vmul.f32 %v1385, %v1478
        %v1584 = vmul.f32 %v1385, %v1483
        %v1585 = vmul.f32 %v1385, %v1488
        %v1586 = vmul.f32 %v1389, %v1493
        %v1587 = vmul.f32 %v1389, %v1498
        %v1588 = vmul.f32 %v1389, %v1503
        %v1589 = vmul.f32 %v1389, %v1508
        %v1590 = vmul.f32 %v1393, %v1513
        %v1591 = vmul.f32 %v1393, %v1518
        %v1592 = vmul.f32 %v1393, %v1523
        %v1593 = vmul.f32 %v1393, %v1528
        %v1594 = vmul.f32 %v1397, %v1533
        %v1595 = vmul.f32 %v1397, %v1538
        %v1596 = vmul.f32 %v1397, %v1543
        %v1597 = vmul.f32 %v1397, %v1548
        %v1598 = vmul.f32 %v1401, %v1553
        %v1599 = vmul.f32 %v1401, %v1558
        %v1600 = vmul.f32 %v1401, %v1563
        %v1601 = vmul.f32 %v1401, %v1568
        %1603 = vset.pattern.permute.xlu0 5
        %1604 = vperm.xlu0 %1603, %v357
        %v1605 = vpop.permute.xlu0 %1604
        %1608 = vset.pattern.permute.xlu0 5
        %1609 = vperm.xlu0 %1608, %v358
        %v1610 = vpop.permute.xlu0 %1609
        %1613 = vset.pattern.permute.xlu0 5
        %1614 = vperm.xlu0 %1613, %v359
        %v1615 = vpop.permute.xlu0 %1614
        %1618 = vset.pattern.permute.xlu0 5
        %1619 = vperm.xlu0 %1618, %v360
        %v1620 = vpop.permute.xlu0 %1619
        %v1622 = vadd.f32 %v1605, %v1570
        %v1623 = vadd.f32 %v1610, %v1571
        %v1624 = vadd.f32 %v1615, %v1572
        %v1625 = vadd.f32 %v1620, %v1573
        %v1626 = vadd.f32 %v1605, %v1574
        %v1627 = vadd.f32 %v1610, %v1575
        %v1628 = vadd.f32 %v1615, %v1576
        %v1629 = vadd.f32 %v1620, %v1577
        %v1630 = vadd.f32 %v1605, %v1578
        %v1631 = vadd.f32 %v1610, %v1579
        %v1632 = vadd.f32 %v1615, %v1580
        %v1633 = vadd.f32 %v1620, %v1581
        %v1634 = vadd.f32 %v1605, %v1582
        %v1635 = vadd.f32 %v1610, %v1583
        %v1636 = vadd.f32 %v1615, %v1584
        %v1637 = vadd.f32 %v1620, %v1585
        %v1638 = vadd.f32 %v1605, %v1586
        %v1639 = vadd.f32 %v1610, %v1587
        %v1640 = vadd.f32 %v1615, %v1588
        %v1641 = vadd.f32 %v1620, %v1589
        %v1642 = vadd.f32 %v1605, %v1590
        %v1643 = vadd.f32 %v1610, %v1591
        %v1644 = vadd.f32 %v1615, %v1592
        %v1645 = vadd.f32 %v1620, %v1593
        %v1646 = vadd.f32 %v1605, %v1594
        %v1647 = vadd.f32 %v1610, %v1595
        %v1648 = vadd.f32 %v1615, %v1596
        %v1649 = vadd.f32 %v1620, %v1597
        %v1650 = vadd.f32 %v1605, %v1598
        %v1651 = vadd.f32 %v1610, %v1599
        %v1652 = vadd.f32 %v1615, %v1600
        %v1653 = vadd.f32 %v1620, %v1601
        %1654 = vrot.lane.b32.xlu0 %v353, 10
        %v1655 = vpop.permute.xlu0 %1654
        %v1656 = vadd.s32 %v1158, 4294967286
        %vm1657 = vcmp.ge.s32.totalorder %v1656, 0
        %v1658 = vsel %vm1657, 1, 0
        %vm1659 = vcmp.eq.s32.totalorder %v1658, 1
        %v1660 = vsel %vm1659, %v1655, 0.0
        %v1661 = vmul.f32 %v1660, 0.013172835
        %v1662 = vadd.f32 %v1159, %v1661
        %1663 = vrot.lane.b32.xlu0 %v353, 9
        %v1664 = vpop.permute.xlu0 %1663
        %v1665 = vadd.s32 %v1158, 4294967287
        %vm1666 = vcmp.ge.s32.totalorder %v1665, 0
        %v1667 = vsel %vm1666, 1, 0
        %vm1668 = vcmp.eq.s32.totalorder %v1667, 1
        %v1669 = vsel %vm1668, %v1664, 0.0
        %v1670 = vmul.f32 %v1669, 0.013028079
        %v1671 = vadd.f32 %v1662, %v1670
        %1672 = vrot.lane.b32.xlu0 %v353, 8
        %v1673 = vpop.permute.xlu0 %1672
        %v1674 = vadd.s32 %v1158, 4294967288
        %vm1675 = vcmp.ge.s32.totalorder %v1674, 0
        %v1676 = vsel %vm1675, 1, 0
        %vm1677 = vcmp.eq.s32.totalorder %v1676, 1
        %v1678 = vsel %vm1677, %v1673, 0.0
        %v1679 = vmul.f32 %v1678, 0.013751862
        %v1680 = vadd.f32 %v1671, %v1679
        %1681 = vrot.lane.b32.xlu0 %v353, 7
        %v1682 = vpop.permute.xlu0 %1681
        %v1683 = vadd.s32 %v1158, 4294967289
        %vm1684 = vcmp.ge.s32.totalorder %v1683, 0
        %v1685 = vsel %vm1684, 1, 0
        %vm1686 = vcmp.eq.s32.totalorder %v1685, 1
        %v1687 = vsel %vm1686, %v1682, 0.0
        %v1688 = vmul.f32 %v1687, 0.014978553
        %v1689 = vadd.f32 %v1680, %v1688
        %1690 = vrot.lane.b32.xlu0 %v353, 6
        %v1691 = vpop.permute.xlu0 %1690
        %v1692 = vadd.s32 %v1158, 4294967290
        %vm1693 = vcmp.ge.s32.totalorder %v1692, 0
        %v1694 = vsel %vm1693, 1, 0
        %vm1695 = vcmp.eq.s32.totalorder %v1694, 1
        %v1696 = vsel %vm1695, %v1691, 0.0
        %v1697 = vmul.f32 %v1696, 0.01675879
        %v1698 = vadd.f32 %v1689, %v1697
        %1699 = vrot.lane.b32.xlu0 %v353, 5
        %v1700 = vpop.permute.xlu0 %1699
        %v1701 = vadd.s32 %v1158, 4294967291
        %vm1702 = vcmp.ge.s32.totalorder %v1701, 0
        %v1703 = vsel %vm1702, 1, 0
        %vm1704 = vcmp.eq.s32.totalorder %v1703, 1
        %v1705 = vsel %vm1704, %v1700, 0.0
        %v1706 = vmul.f32 %v1705, 0.0193219
        %v1707 = vadd.f32 %v1698, %v1706
        %1708 = vrot.lane.b32.xlu0 %v353, 4
        %v1709 = vpop.permute.xlu0 %1708
        %v1710 = vadd.s32 %v1158, 4294967292
        %vm1711 = vcmp.ge.s32.totalorder %v1710, 0
        %v1712 = vsel %vm1711, 1, 0
        %vm1713 = vcmp.eq.s32.totalorder %v1712, 1
        %v1714 = vsel %vm1713, %v1709, 0.0
        %v1715 = vmul.f32 %v1714, 0.023170572
        %v1716 = vadd.f32 %v1707, %v1715
        %1717 = vrot.lane.b32.xlu0 %v353, 3
        %v1718 = vpop.permute.xlu0 %1717
        %v1719 = vadd.s32 %v1158, 4294967293
        %vm1720 = vcmp.ge.s32.totalorder %v1719, 0
        %v1721 = vsel %vm1720, 1, 0
        %vm1722 = vcmp.eq.s32.totalorder %v1721, 1
        %v1723 = vsel %vm1722, %v1718, 0.0
        %v1724 = vmul.f32 %v1723, 0.029470405
        %v1725 = vadd.f32 %v1716, %v1724
        %1726 = vrot.lane.b32.xlu0 %v353, 2
        %v1727 = vpop.permute.xlu0 %1726
        %v1728 = vadd.s32 %v1158, 4294967294
        %vm1729 = vcmp.ge.s32.totalorder %v1728, 0
        %v1730 = vsel %vm1729, 1, 0
        %vm1731 = vcmp.eq.s32.totalorder %v1730, 1
        %v1732 = vsel %vm1731, %v1727, 0.0
        %v1733 = vmul.f32 %v1732, 0.04157432
        %v1734 = vadd.f32 %v1725, %v1733
        %v1736 = vcombine.high %v1732, %v1732
        %v1738 = vunpack.c.l.s4 1966171168
        %v1739 = vunpack.c.0.s8 %v1738
        %v1740 = vlaneseq
        %v1741 = vshrl.u32 %v1740, 7
        %v1742 = vsub.s32 %v1739, %v1741
        %v1743 = vrot.slane %v1732, %v1742
        %v1745 = vunpack.c.l.s4 1966171168
        %v1746 = vunpack.c.0.s8 %v1745
        %v1747 = vlaneseq
        %v1748 = vshrl.u32 %v1747, 7
        %v1749 = vsub.s32 %v1746, %v1748
        %v1750 = vrot.slane %v1736, %v1749
        %v1751 = vcombine.high %v1743, %v1743
        %v1752 = vcombine.high %v1750, %v1750
        %v1754 = vunpack.c.l.s4 1966171168
        %v1755 = vunpack.c.0.s8 %v1754
        %v1756 = vlaneseq
        %v1757 = vshrl.u32 %v1756, 7
        %v1758 = vsub.s32 %v1755, %v1757
        %v1759 = vrot.slane %v1743, %v1758
        %v1761 = vunpack.c.l.s4 1966171168
        %v1762 = vunpack.c.0.s8 %v1761
        %v1763 = vlaneseq
        %v1764 = vshrl.u32 %v1763, 7
        %v1765 = vsub.s32 %v1762, %v1764
        %v1766 = vrot.slane %v1750, %v1765
        %v1768 = vunpack.c.l.s4 1966171168
        %v1769 = vunpack.c.0.s8 %v1768
        %v1770 = vlaneseq
        %v1771 = vshrl.u32 %v1770, 7
        %v1772 = vsub.s32 %v1769, %v1771
        %v1773 = vrot.slane %v1751, %v1772
        %v1775 = vunpack.c.l.s4 1966171168
        %v1776 = vunpack.c.0.s8 %v1775
        %v1777 = vlaneseq
        %v1778 = vshrl.u32 %v1777, 7
        %v1779 = vsub.s32 %v1776, %v1778
        %v1780 = vrot.slane %v1752, %v1779
        %v1781 = vcombine.high %v1759, %v1759
        %v1782 = vcombine.high %v1766, %v1766
        %v1783 = vcombine.high %v1773, %v1773
        %v1784 = vcombine.high %v1780, %v1780
        %v1785 = vlaneseq
        %v1786 = vshrl.u32 %v1785, 7
        %v1787 = vsub.s32 0, %v1786
        %v1788 = vrot.slane %v1759, %v1787
        %v1789 = vlaneseq
        %v1790 = vshrl.u32 %v1789, 7
        %v1791 = vsub.s32 0, %v1790
        %v1792 = vrot.slane %v1773, %v1791
        %v1793 = vlaneseq
        %v1794 = vshrl.u32 %v1793, 7
        %v1795 = vsub.s32 0, %v1794
        %v1796 = vrot.slane %v1781, %v1795
        %v1797 = vlaneseq
        %v1798 = vshrl.u32 %v1797, 7
        %v1799 = vsub.s32 0, %v1798
        %v1800 = vrot.slane %v1783, %v1799
        %v1801 = vlaneseq
        %v1802 = vshrl.u32 %v1801, 7
        %v1803 = vsub.s32 0, %v1802
        %v1804 = vrot.slane %v1766, %v1803
        %v1805 = vlaneseq
        %v1806 = vshrl.u32 %v1805, 7
        %v1807 = vsub.s32 0, %v1806
        %v1808 = vrot.slane %v1780, %v1807
        %v1809 = vlaneseq
        %v1810 = vshrl.u32 %v1809, 7
        %v1811 = vsub.s32 0, %v1810
        %v1812 = vrot.slane %v1782, %v1811
        %v1813 = vlaneseq
        %v1814 = vshrl.u32 %v1813, 7
        %v1815 = vsub.s32 0, %v1814
        %v1816 = vrot.slane %v1784, %v1815
        %1825 = vset.pattern.permute.xlu0 0
        %1826 = vperm.xlu0 %1825, %v357
        %v1827 = vpop.permute.xlu0 %1826
        %1829 = vset.pattern.permute.xlu0 0
        %1830 = vperm.xlu0 %1829, %v358
        %v1831 = vpop.permute.xlu0 %1830
        %1833 = vset.pattern.permute.xlu0 0
        %1834 = vperm.xlu0 %1833, %v359
        %v1835 = vpop.permute.xlu0 %1834
        %1837 = vset.pattern.permute.xlu0 0
        %1838 = vperm.xlu0 %1837, %v360
        %v1839 = vpop.permute.xlu0 %1838
        %v1841 = vmul.f32 %v1788, %v1827
        %v1842 = vmul.f32 %v1788, %v1831
        %v1843 = vmul.f32 %v1788, %v1835
        %v1844 = vmul.f32 %v1788, %v1839
        %v1845 = vmul.f32 %v1792, %v1827
        %v1846 = vmul.f32 %v1792, %v1831
        %v1847 = vmul.f32 %v1792, %v1835
        %v1848 = vmul.f32 %v1792, %v1839
        %v1849 = vmul.f32 %v1796, %v1827
        %v1850 = vmul.f32 %v1796, %v1831
        %v1851 = vmul.f32 %v1796, %v1835
        %v1852 = vmul.f32 %v1796, %v1839
        %v1853 = vmul.f32 %v1800, %v1827
        %v1854 = vmul.f32 %v1800, %v1831
        %v1855 = vmul.f32 %v1800, %v1835
        %v1856 = vmul.f32 %v1800, %v1839
        %v1857 = vmul.f32 %v1804, %v1827
        %v1858 = vmul.f32 %v1804, %v1831
        %v1859 = vmul.f32 %v1804, %v1835
        %v1860 = vmul.f32 %v1804, %v1839
        %v1861 = vmul.f32 %v1808, %v1827
        %v1862 = vmul.f32 %v1808, %v1831
        %v1863 = vmul.f32 %v1808, %v1835
        %v1864 = vmul.f32 %v1808, %v1839
        %v1865 = vmul.f32 %v1812, %v1827
        %v1866 = vmul.f32 %v1812, %v1831
        %v1867 = vmul.f32 %v1812, %v1835
        %v1868 = vmul.f32 %v1812, %v1839
        %v1869 = vmul.f32 %v1816, %v1827
        %v1870 = vmul.f32 %v1816, %v1831
        %v1871 = vmul.f32 %v1816, %v1835
        %v1872 = vmul.f32 %v1816, %v1839
        %v1873 = vadd.f32 %v1622, %v1841
        %v1874 = vadd.f32 %v1623, %v1842
        %v1875 = vadd.f32 %v1624, %v1843
        %v1876 = vadd.f32 %v1625, %v1844
        %v1877 = vadd.f32 %v1626, %v1845
        %v1878 = vadd.f32 %v1627, %v1846
        %v1879 = vadd.f32 %v1628, %v1847
        %v1880 = vadd.f32 %v1629, %v1848
        %v1881 = vadd.f32 %v1630, %v1849
        %v1882 = vadd.f32 %v1631, %v1850
        %v1883 = vadd.f32 %v1632, %v1851
        %v1884 = vadd.f32 %v1633, %v1852
        %v1885 = vadd.f32 %v1634, %v1853
        %v1886 = vadd.f32 %v1635, %v1854
        %v1887 = vadd.f32 %v1636, %v1855
        %v1888 = vadd.f32 %v1637, %v1856
        %v1889 = vadd.f32 %v1638, %v1857
        %v1890 = vadd.f32 %v1639, %v1858
        %v1891 = vadd.f32 %v1640, %v1859
        %v1892 = vadd.f32 %v1641, %v1860
        %v1893 = vadd.f32 %v1642, %v1861
        %v1894 = vadd.f32 %v1643, %v1862
        %v1895 = vadd.f32 %v1644, %v1863
        %v1896 = vadd.f32 %v1645, %v1864
        %v1897 = vadd.f32 %v1646, %v1865
        %v1898 = vadd.f32 %v1647, %v1866
        %v1899 = vadd.f32 %v1648, %v1867
        %v1900 = vadd.f32 %v1649, %v1868
        %v1901 = vadd.f32 %v1650, %v1869
        %v1902 = vadd.f32 %v1651, %v1870
        %v1903 = vadd.f32 %v1652, %v1871
        %v1904 = vadd.f32 %v1653, %v1872
        %1905 = vrot.lane.b32.xlu0 %v353, 1
        %v1906 = vpop.permute.xlu0 %1905
        %v1907 = vadd.s32 %v1158, 4294967295
        %vm1908 = vcmp.ge.s32.totalorder %v1907, 0
        %v1909 = vsel %vm1908, 1, 0
        %vm1910 = vcmp.eq.s32.totalorder %v1909, 1
        %v1911 = vsel %vm1910, %v1906, 0.0
        %v1912 = vmul.f32 %v1911, 0.07474979
        %v1913 = vadd.f32 %v1734, %v1912
        %v1915 = vcombine.high %v1911, %v1911
        %v1917 = vunpack.c.l.s4 1966171168
        %v1918 = vunpack.c.0.s8 %v1917
        %v1919 = vlaneseq
        %v1920 = vshrl.u32 %v1919, 7
        %v1921 = vsub.s32 %v1918, %v1920
        %v1922 = vrot.slane %v1911, %v1921
        %v1924 = vunpack.c.l.s4 1966171168
        %v1925 = vunpack.c.0.s8 %v1924
        %v1926 = vlaneseq
        %v1927 = vshrl.u32 %v1926, 7
        %v1928 = vsub.s32 %v1925, %v1927
        %v1929 = vrot.slane %v1915, %v1928
        %v1930 = vcombine.high %v1922, %v1922
        %v1931 = vcombine.high %v1929, %v1929
        %v1933 = vunpack.c.l.s4 1966171168
        %v1934 = vunpack.c.0.s8 %v1933
        %v1935 = vlaneseq
        %v1936 = vshrl.u32 %v1935, 7
        %v1937 = vsub.s32 %v1934, %v1936
        %v1938 = vrot.slane %v1922, %v1937
        %v1940 = vunpack.c.l.s4 1966171168
        %v1941 = vunpack.c.0.s8 %v1940
        %v1942 = vlaneseq
        %v1943 = vshrl.u32 %v1942, 7
        %v1944 = vsub.s32 %v1941, %v1943
        %v1945 = vrot.slane %v1929, %v1944
        %v1947 = vunpack.c.l.s4 1966171168
        %v1948 = vunpack.c.0.s8 %v1947
        %v1949 = vlaneseq
        %v1950 = vshrl.u32 %v1949, 7
        %v1951 = vsub.s32 %v1948, %v1950
        %v1952 = vrot.slane %v1930, %v1951
        %v1954 = vunpack.c.l.s4 1966171168
        %v1955 = vunpack.c.0.s8 %v1954
        %v1956 = vlaneseq
        %v1957 = vshrl.u32 %v1956, 7
        %v1958 = vsub.s32 %v1955, %v1957
        %v1959 = vrot.slane %v1931, %v1958
        %v1960 = vcombine.high %v1938, %v1938
        %v1961 = vcombine.high %v1945, %v1945
        %v1962 = vcombine.high %v1952, %v1952
        %v1963 = vcombine.high %v1959, %v1959
        %v1964 = vlaneseq
        %v1965 = vshrl.u32 %v1964, 7
        %v1966 = vsub.s32 0, %v1965
        %v1967 = vrot.slane %v1938, %v1966
        %v1968 = vlaneseq
        %v1969 = vshrl.u32 %v1968, 7
        %v1970 = vsub.s32 0, %v1969
        %v1971 = vrot.slane %v1952, %v1970
        %v1972 = vlaneseq
        %v1973 = vshrl.u32 %v1972, 7
        %v1974 = vsub.s32 0, %v1973
        %v1975 = vrot.slane %v1960, %v1974
        %v1976 = vlaneseq
        %v1977 = vshrl.u32 %v1976, 7
        %v1978 = vsub.s32 0, %v1977
        %v1979 = vrot.slane %v1962, %v1978
        %v1980 = vlaneseq
        %v1981 = vshrl.u32 %v1980, 7
        %v1982 = vsub.s32 0, %v1981
        %v1983 = vrot.slane %v1945, %v1982
        %v1984 = vlaneseq
        %v1985 = vshrl.u32 %v1984, 7
        %v1986 = vsub.s32 0, %v1985
        %v1987 = vrot.slane %v1959, %v1986
        %v1988 = vlaneseq
        %v1989 = vshrl.u32 %v1988, 7
        %v1990 = vsub.s32 0, %v1989
        %v1991 = vrot.slane %v1961, %v1990
        %v1992 = vlaneseq
        %v1993 = vshrl.u32 %v1992, 7
        %v1994 = vsub.s32 0, %v1993
        %v1995 = vrot.slane %v1963, %v1994
        %2004 = vset.pattern.permute.xlu0 1
        %2005 = vperm.xlu0 %2004, %v1338
        %v2006 = vpop.permute.xlu0 %2005
        %2008 = vset.pattern.permute.xlu0 1
        %2009 = vperm.xlu0 %2008, %v1339
        %v2010 = vpop.permute.xlu0 %2009
        %2012 = vset.pattern.permute.xlu0 1
        %2013 = vperm.xlu0 %2012, %v1340
        %v2014 = vpop.permute.xlu0 %2013
        %2016 = vset.pattern.permute.xlu0 1
        %2017 = vperm.xlu0 %2016, %v1341
        %v2018 = vpop.permute.xlu0 %2017
        %2020 = vset.pattern.permute.xlu0 1
        %2021 = vperm.xlu0 %2020, %v1342
        %v2022 = vpop.permute.xlu0 %2021
        %2024 = vset.pattern.permute.xlu0 1
        %2025 = vperm.xlu0 %2024, %v1343
        %v2026 = vpop.permute.xlu0 %2025
        %2028 = vset.pattern.permute.xlu0 1
        %2029 = vperm.xlu0 %2028, %v1344
        %v2030 = vpop.permute.xlu0 %2029
        %2032 = vset.pattern.permute.xlu0 1
        %2033 = vperm.xlu0 %2032, %v1345
        %v2034 = vpop.permute.xlu0 %2033
        %2036 = vset.pattern.permute.xlu0 1
        %2037 = vperm.xlu0 %2036, %v1346
        %v2038 = vpop.permute.xlu0 %2037
        %2040 = vset.pattern.permute.xlu0 1
        %2041 = vperm.xlu0 %2040, %v1347
        %v2042 = vpop.permute.xlu0 %2041
        %2044 = vset.pattern.permute.xlu0 1
        %2045 = vperm.xlu0 %2044, %v1348
        %v2046 = vpop.permute.xlu0 %2045
        %2048 = vset.pattern.permute.xlu0 1
        %2049 = vperm.xlu0 %2048, %v1349
        %v2050 = vpop.permute.xlu0 %2049
        %2052 = vset.pattern.permute.xlu0 1
        %2053 = vperm.xlu0 %2052, %v1350
        %v2054 = vpop.permute.xlu0 %2053
        %2056 = vset.pattern.permute.xlu0 1
        %2057 = vperm.xlu0 %2056, %v1351
        %v2058 = vpop.permute.xlu0 %2057
        %2060 = vset.pattern.permute.xlu0 1
        %2061 = vperm.xlu0 %2060, %v1352
        %v2062 = vpop.permute.xlu0 %2061
        %2064 = vset.pattern.permute.xlu0 1
        %2065 = vperm.xlu0 %2064, %v1353
        %v2066 = vpop.permute.xlu0 %2065
        %2068 = vset.pattern.permute.xlu0 1
        %2069 = vperm.xlu0 %2068, %v1354
        %v2070 = vpop.permute.xlu0 %2069
        %2072 = vset.pattern.permute.xlu0 1
        %2073 = vperm.xlu0 %2072, %v1355
        %v2074 = vpop.permute.xlu0 %2073
        %2076 = vset.pattern.permute.xlu0 1
        %2077 = vperm.xlu0 %2076, %v1356
        %v2078 = vpop.permute.xlu0 %2077
        %2080 = vset.pattern.permute.xlu0 1
        %2081 = vperm.xlu0 %2080, %v1357
        %v2082 = vpop.permute.xlu0 %2081
        %2084 = vset.pattern.permute.xlu0 1
        %2085 = vperm.xlu0 %2084, %v1358
        %v2086 = vpop.permute.xlu0 %2085
        %2088 = vset.pattern.permute.xlu0 1
        %2089 = vperm.xlu0 %2088, %v1359
        %v2090 = vpop.permute.xlu0 %2089
        %2092 = vset.pattern.permute.xlu0 1
        %2093 = vperm.xlu0 %2092, %v1360
        %v2094 = vpop.permute.xlu0 %2093
        %2096 = vset.pattern.permute.xlu0 1
        %2097 = vperm.xlu0 %2096, %v1361
        %v2098 = vpop.permute.xlu0 %2097
        %2100 = vset.pattern.permute.xlu0 1
        %2101 = vperm.xlu0 %2100, %v1362
        %v2102 = vpop.permute.xlu0 %2101
        %2104 = vset.pattern.permute.xlu0 1
        %2105 = vperm.xlu0 %2104, %v1363
        %v2106 = vpop.permute.xlu0 %2105
        %2108 = vset.pattern.permute.xlu0 1
        %2109 = vperm.xlu0 %2108, %v1364
        %v2110 = vpop.permute.xlu0 %2109
        %2112 = vset.pattern.permute.xlu0 1
        %2113 = vperm.xlu0 %2112, %v1365
        %v2114 = vpop.permute.xlu0 %2113
        %2116 = vset.pattern.permute.xlu0 1
        %2117 = vperm.xlu0 %2116, %v1366
        %v2118 = vpop.permute.xlu0 %2117
        %2120 = vset.pattern.permute.xlu0 1
        %2121 = vperm.xlu0 %2120, %v1367
        %v2122 = vpop.permute.xlu0 %2121
        %2124 = vset.pattern.permute.xlu0 1
        %2125 = vperm.xlu0 %2124, %v1368
        %v2126 = vpop.permute.xlu0 %2125
        %2128 = vset.pattern.permute.xlu0 1
        %2129 = vperm.xlu0 %2128, %v1369
        %v2130 = vpop.permute.xlu0 %2129
        %v2132 = vmul.f32 %v1967, %v2006
        %v2133 = vmul.f32 %v1967, %v2010
        %v2134 = vmul.f32 %v1967, %v2014
        %v2135 = vmul.f32 %v1967, %v2018
        %v2136 = vmul.f32 %v1971, %v2022
        %v2137 = vmul.f32 %v1971, %v2026
        %v2138 = vmul.f32 %v1971, %v2030
        %v2139 = vmul.f32 %v1971, %v2034
        %v2140 = vmul.f32 %v1975, %v2038
        %v2141 = vmul.f32 %v1975, %v2042
        %v2142 = vmul.f32 %v1975, %v2046
        %v2143 = vmul.f32 %v1975, %v2050
        %v2144 = vmul.f32 %v1979, %v2054
        %v2145 = vmul.f32 %v1979, %v2058
        %v2146 = vmul.f32 %v1979, %v2062
        %v2147 = vmul.f32 %v1979, %v2066
        %v2148 = vmul.f32 %v1983, %v2070
        %v2149 = vmul.f32 %v1983, %v2074
        %v2150 = vmul.f32 %v1983, %v2078
        %v2151 = vmul.f32 %v1983, %v2082
        %v2152 = vmul.f32 %v1987, %v2086
        %v2153 = vmul.f32 %v1987, %v2090
        %v2154 = vmul.f32 %v1987, %v2094
        %v2155 = vmul.f32 %v1987, %v2098
        %v2156 = vmul.f32 %v1991, %v2102
        %v2157 = vmul.f32 %v1991, %v2106
        %v2158 = vmul.f32 %v1991, %v2110
        %v2159 = vmul.f32 %v1991, %v2114
        %v2160 = vmul.f32 %v1995, %v2118
        %v2161 = vmul.f32 %v1995, %v2122
        %v2162 = vmul.f32 %v1995, %v2126
        %v2163 = vmul.f32 %v1995, %v2130
        %v2164 = vadd.f32 %v1873, %v2132
        %v2165 = vadd.f32 %v1874, %v2133
        %v2166 = vadd.f32 %v1875, %v2134
        %v2167 = vadd.f32 %v1876, %v2135
        %v2168 = vadd.f32 %v1877, %v2136
        %v2169 = vadd.f32 %v1878, %v2137
        %v2170 = vadd.f32 %v1879, %v2138
        %v2171 = vadd.f32 %v1880, %v2139
        %v2172 = vadd.f32 %v1881, %v2140
        %v2173 = vadd.f32 %v1882, %v2141
        %v2174 = vadd.f32 %v1883, %v2142
        %v2175 = vadd.f32 %v1884, %v2143
        %v2176 = vadd.f32 %v1885, %v2144
        %v2177 = vadd.f32 %v1886, %v2145
        %v2178 = vadd.f32 %v1887, %v2146
        %v2179 = vadd.f32 %v1888, %v2147
        %v2180 = vadd.f32 %v1889, %v2148
        %v2181 = vadd.f32 %v1890, %v2149
        %v2182 = vadd.f32 %v1891, %v2150
        %v2183 = vadd.f32 %v1892, %v2151
        %v2184 = vadd.f32 %v1893, %v2152
        %v2185 = vadd.f32 %v1894, %v2153
        %v2186 = vadd.f32 %v1895, %v2154
        %v2187 = vadd.f32 %v1896, %v2155
        %v2188 = vadd.f32 %v1897, %v2156
        %v2189 = vadd.f32 %v1898, %v2157
        %v2190 = vadd.f32 %v1899, %v2158
        %v2191 = vadd.f32 %v1900, %v2159
        %v2192 = vadd.f32 %v1901, %v2160
        %v2193 = vadd.f32 %v1902, %v2161
        %v2194 = vadd.f32 %v1903, %v2162
        %v2195 = vadd.f32 %v1904, %v2163
        %2196 = vrot.lane.b32.xlu0 %v353, 127
        %v2197 = vpop.permute.xlu0 %2196
        %v2198 = vadd.s32 %v1158, 1
        %vm2199 = vcmp.lt.s32.totalorder %v2198, 128
        %v2200 = vsel %vm2199, 1, 0
        %vm2201 = vcmp.eq.s32.totalorder %v2200, 1
        %v2202 = vsel %vm2201, %v2197, 0.0
        %v2204 = vcombine.high %v2202, %v2202
        %v2206 = vunpack.c.l.s4 1966171168
        %v2207 = vunpack.c.0.s8 %v2206
        %v2208 = vlaneseq
        %v2209 = vshrl.u32 %v2208, 7
        %v2210 = vsub.s32 %v2207, %v2209
        %v2211 = vrot.slane %v2202, %v2210
        %v2213 = vunpack.c.l.s4 1966171168
        %v2214 = vunpack.c.0.s8 %v2213
        %v2215 = vlaneseq
        %v2216 = vshrl.u32 %v2215, 7
        %v2217 = vsub.s32 %v2214, %v2216
        %v2218 = vrot.slane %v2204, %v2217
        %v2219 = vcombine.high %v2211, %v2211
        %v2220 = vcombine.high %v2218, %v2218
        %v2222 = vunpack.c.l.s4 1966171168
        %v2223 = vunpack.c.0.s8 %v2222
        %v2224 = vlaneseq
        %v2225 = vshrl.u32 %v2224, 7
        %v2226 = vsub.s32 %v2223, %v2225
        %v2227 = vrot.slane %v2211, %v2226
        %v2229 = vunpack.c.l.s4 1966171168
        %v2230 = vunpack.c.0.s8 %v2229
        %v2231 = vlaneseq
        %v2232 = vshrl.u32 %v2231, 7
        %v2233 = vsub.s32 %v2230, %v2232
        %v2234 = vrot.slane %v2218, %v2233
        %v2236 = vunpack.c.l.s4 1966171168
        %v2237 = vunpack.c.0.s8 %v2236
        %v2238 = vlaneseq
        %v2239 = vshrl.u32 %v2238, 7
        %v2240 = vsub.s32 %v2237, %v2239
        %v2241 = vrot.slane %v2219, %v2240
        %v2243 = vunpack.c.l.s4 1966171168
        %v2244 = vunpack.c.0.s8 %v2243
        %v2245 = vlaneseq
        %v2246 = vshrl.u32 %v2245, 7
        %v2247 = vsub.s32 %v2244, %v2246
        %v2248 = vrot.slane %v2220, %v2247
        %v2249 = vcombine.high %v2227, %v2227
        %v2250 = vcombine.high %v2234, %v2234
        %v2251 = vcombine.high %v2241, %v2241
        %v2252 = vcombine.high %v2248, %v2248
        %v2253 = vlaneseq
        %v2254 = vshrl.u32 %v2253, 7
        %v2255 = vsub.s32 0, %v2254
        %v2256 = vrot.slane %v2227, %v2255
        %v2257 = vlaneseq
        %v2258 = vshrl.u32 %v2257, 7
        %v2259 = vsub.s32 0, %v2258
        %v2260 = vrot.slane %v2241, %v2259
        %v2261 = vlaneseq
        %v2262 = vshrl.u32 %v2261, 7
        %v2263 = vsub.s32 0, %v2262
        %v2264 = vrot.slane %v2249, %v2263
        %v2265 = vlaneseq
        %v2266 = vshrl.u32 %v2265, 7
        %v2267 = vsub.s32 0, %v2266
        %v2268 = vrot.slane %v2251, %v2267
        %v2269 = vlaneseq
        %v2270 = vshrl.u32 %v2269, 7
        %v2271 = vsub.s32 0, %v2270
        %v2272 = vrot.slane %v2234, %v2271
        %v2273 = vlaneseq
        %v2274 = vshrl.u32 %v2273, 7
        %v2275 = vsub.s32 0, %v2274
        %v2276 = vrot.slane %v2248, %v2275
        %v2277 = vlaneseq
        %v2278 = vshrl.u32 %v2277, 7
        %v2279 = vsub.s32 0, %v2278
        %v2280 = vrot.slane %v2250, %v2279
        %v2281 = vlaneseq
        %v2282 = vshrl.u32 %v2281, 7
        %v2283 = vsub.s32 0, %v2282
        %v2284 = vrot.slane %v2252, %v2283
        %2293 = vset.pattern.permute.xlu0 3
        %2294 = vperm.xlu0 %2293, %v1338
        %v2295 = vpop.permute.xlu0 %2294
        %2297 = vset.pattern.permute.xlu0 3
        %2298 = vperm.xlu0 %2297, %v1339
        %v2299 = vpop.permute.xlu0 %2298
        %2301 = vset.pattern.permute.xlu0 3
        %2302 = vperm.xlu0 %2301, %v1340
        %v2303 = vpop.permute.xlu0 %2302
        %2305 = vset.pattern.permute.xlu0 3
        %2306 = vperm.xlu0 %2305, %v1341
        %v2307 = vpop.permute.xlu0 %2306
        %2309 = vset.pattern.permute.xlu0 3
        %2310 = vperm.xlu0 %2309, %v1342
        %v2311 = vpop.permute.xlu0 %2310
        %2313 = vset.pattern.permute.xlu0 3
        %2314 = vperm.xlu0 %2313, %v1343
        %v2315 = vpop.permute.xlu0 %2314
        %2317 = vset.pattern.permute.xlu0 3
        %2318 = vperm.xlu0 %2317, %v1344
        %v2319 = vpop.permute.xlu0 %2318
        %2321 = vset.pattern.permute.xlu0 3
        %2322 = vperm.xlu0 %2321, %v1345
        %v2323 = vpop.permute.xlu0 %2322
        %2325 = vset.pattern.permute.xlu0 3
        %2326 = vperm.xlu0 %2325, %v1346
        %v2327 = vpop.permute.xlu0 %2326
        %2329 = vset.pattern.permute.xlu0 3
        %2330 = vperm.xlu0 %2329, %v1347
        %v2331 = vpop.permute.xlu0 %2330
        %2333 = vset.pattern.permute.xlu0 3
        %2334 = vperm.xlu0 %2333, %v1348
        %v2335 = vpop.permute.xlu0 %2334
        %2337 = vset.pattern.permute.xlu0 3
        %2338 = vperm.xlu0 %2337, %v1349
        %v2339 = vpop.permute.xlu0 %2338
        %2341 = vset.pattern.permute.xlu0 3
        %2342 = vperm.xlu0 %2341, %v1350
        %v2343 = vpop.permute.xlu0 %2342
        %2345 = vset.pattern.permute.xlu0 3
        %2346 = vperm.xlu0 %2345, %v1351
        %v2347 = vpop.permute.xlu0 %2346
        %2349 = vset.pattern.permute.xlu0 3
        %2350 = vperm.xlu0 %2349, %v1352
        %v2351 = vpop.permute.xlu0 %2350
        %2353 = vset.pattern.permute.xlu0 3
        %2354 = vperm.xlu0 %2353, %v1353
        %v2355 = vpop.permute.xlu0 %2354
        %2357 = vset.pattern.permute.xlu0 3
        %2358 = vperm.xlu0 %2357, %v1354
        %v2359 = vpop.permute.xlu0 %2358
        %2361 = vset.pattern.permute.xlu0 3
        %2362 = vperm.xlu0 %2361, %v1355
        %v2363 = vpop.permute.xlu0 %2362
        %2365 = vset.pattern.permute.xlu0 3
        %2366 = vperm.xlu0 %2365, %v1356
        %v2367 = vpop.permute.xlu0 %2366
        %2369 = vset.pattern.permute.xlu0 3
        %2370 = vperm.xlu0 %2369, %v1357
        %v2371 = vpop.permute.xlu0 %2370
        %2373 = vset.pattern.permute.xlu0 3
        %2374 = vperm.xlu0 %2373, %v1358
        %v2375 = vpop.permute.xlu0 %2374
        %2377 = vset.pattern.permute.xlu0 3
        %2378 = vperm.xlu0 %2377, %v1359
        %v2379 = vpop.permute.xlu0 %2378
        %2381 = vset.pattern.permute.xlu0 3
        %2382 = vperm.xlu0 %2381, %v1360
        %v2383 = vpop.permute.xlu0 %2382
        %2385 = vset.pattern.permute.xlu0 3
        %2386 = vperm.xlu0 %2385, %v1361
        %v2387 = vpop.permute.xlu0 %2386
        %2389 = vset.pattern.permute.xlu0 3
        %2390 = vperm.xlu0 %2389, %v1362
        %v2391 = vpop.permute.xlu0 %2390
        %2393 = vset.pattern.permute.xlu0 3
        %2394 = vperm.xlu0 %2393, %v1363
        %v2395 = vpop.permute.xlu0 %2394
        %2397 = vset.pattern.permute.xlu0 3
        %2398 = vperm.xlu0 %2397, %v1364
        %v2399 = vpop.permute.xlu0 %2398
        %2401 = vset.pattern.permute.xlu0 3
        %2402 = vperm.xlu0 %2401, %v1365
        %v2403 = vpop.permute.xlu0 %2402
        %2405 = vset.pattern.permute.xlu0 3
        %2406 = vperm.xlu0 %2405, %v1366
        %v2407 = vpop.permute.xlu0 %2406
        %2409 = vset.pattern.permute.xlu0 3
        %2410 = vperm.xlu0 %2409, %v1367
        %v2411 = vpop.permute.xlu0 %2410
        %2413 = vset.pattern.permute.xlu0 3
        %2414 = vperm.xlu0 %2413, %v1368
        %v2415 = vpop.permute.xlu0 %2414
        %2417 = vset.pattern.permute.xlu0 3
        %2418 = vperm.xlu0 %2417, %v1369
        %v2419 = vpop.permute.xlu0 %2418
        %v2421 = vmul.f32 %v2256, %v2295
        %v2422 = vmul.f32 %v2256, %v2299
        %v2423 = vmul.f32 %v2256, %v2303
        %v2424 = vmul.f32 %v2256, %v2307
        %v2425 = vmul.f32 %v2260, %v2311
        %v2426 = vmul.f32 %v2260, %v2315
        %v2427 = vmul.f32 %v2260, %v2319
        %v2428 = vmul.f32 %v2260, %v2323
        %v2429 = vmul.f32 %v2264, %v2327
        %v2430 = vmul.f32 %v2264, %v2331
        %v2431 = vmul.f32 %v2264, %v2335
        %v2432 = vmul.f32 %v2264, %v2339
        %v2433 = vmul.f32 %v2268, %v2343
        %v2434 = vmul.f32 %v2268, %v2347
        %v2435 = vmul.f32 %v2268, %v2351
        %v2436 = vmul.f32 %v2268, %v2355
        %v2437 = vmul.f32 %v2272, %v2359
        %v2438 = vmul.f32 %v2272, %v2363
        %v2439 = vmul.f32 %v2272, %v2367
        %v2440 = vmul.f32 %v2272, %v2371
        %v2441 = vmul.f32 %v2276, %v2375
        %v2442 = vmul.f32 %v2276, %v2379
        %v2443 = vmul.f32 %v2276, %v2383
        %v2444 = vmul.f32 %v2276, %v2387
        %v2445 = vmul.f32 %v2280, %v2391
        %v2446 = vmul.f32 %v2280, %v2395
        %v2447 = vmul.f32 %v2280, %v2399
        %v2448 = vmul.f32 %v2280, %v2403
        %v2449 = vmul.f32 %v2284, %v2407
        %v2450 = vmul.f32 %v2284, %v2411
        %v2451 = vmul.f32 %v2284, %v2415
        %v2452 = vmul.f32 %v2284, %v2419
        %v2453 = vadd.f32 %v2164, %v2421
        %v2454 = vadd.f32 %v2165, %v2422
        %v2455 = vadd.f32 %v2166, %v2423
        %v2456 = vadd.f32 %v2167, %v2424
        %v2457 = vadd.f32 %v2168, %v2425
        %v2458 = vadd.f32 %v2169, %v2426
        %v2459 = vadd.f32 %v2170, %v2427
        %v2460 = vadd.f32 %v2171, %v2428
        %v2461 = vadd.f32 %v2172, %v2429
        %v2462 = vadd.f32 %v2173, %v2430
        %v2463 = vadd.f32 %v2174, %v2431
        %v2464 = vadd.f32 %v2175, %v2432
        %v2465 = vadd.f32 %v2176, %v2433
        %v2466 = vadd.f32 %v2177, %v2434
        %v2467 = vadd.f32 %v2178, %v2435
        %v2468 = vadd.f32 %v2179, %v2436
        %v2469 = vadd.f32 %v2180, %v2437
        %v2470 = vadd.f32 %v2181, %v2438
        %v2471 = vadd.f32 %v2182, %v2439
        %v2472 = vadd.f32 %v2183, %v2440
        %v2473 = vadd.f32 %v2184, %v2441
        %v2474 = vadd.f32 %v2185, %v2442
        %v2475 = vadd.f32 %v2186, %v2443
        %v2476 = vadd.f32 %v2187, %v2444
        %v2477 = vadd.f32 %v2188, %v2445
        %v2478 = vadd.f32 %v2189, %v2446
        %v2479 = vadd.f32 %v2190, %v2447
        %v2480 = vadd.f32 %v2191, %v2448
        %v2481 = vadd.f32 %v2192, %v2449
        %v2482 = vadd.f32 %v2193, %v2450
        %v2483 = vadd.f32 %v2194, %v2451
        %v2484 = vadd.f32 %v2195, %v2452
        %2485 = vrot.lane.b32.xlu0 %v353, 126
        %v2486 = vpop.permute.xlu0 %2485
        %v2487 = vadd.s32 %v1158, 2
        %vm2488 = vcmp.lt.s32.totalorder %v2487, 128
        %v2489 = vsel %vm2488, 1, 0
        %vm2490 = vcmp.eq.s32.totalorder %v2489, 1
        %v2491 = vsel %vm2490, %v2486, 0.0
        %v2493 = vcombine.high %v2491, %v2491
        %v2495 = vunpack.c.l.s4 1966171168
        %v2496 = vunpack.c.0.s8 %v2495
        %v2497 = vlaneseq
        %v2498 = vshrl.u32 %v2497, 7
        %v2499 = vsub.s32 %v2496, %v2498
        %v2500 = vrot.slane %v2491, %v2499
        %v2502 = vunpack.c.l.s4 1966171168
        %v2503 = vunpack.c.0.s8 %v2502
        %v2504 = vlaneseq
        %v2505 = vshrl.u32 %v2504, 7
        %v2506 = vsub.s32 %v2503, %v2505
        %v2507 = vrot.slane %v2493, %v2506
        %v2508 = vcombine.high %v2500, %v2500
        %v2509 = vcombine.high %v2507, %v2507
        %v2511 = vunpack.c.l.s4 1966171168
        %v2512 = vunpack.c.0.s8 %v2511
        %v2513 = vlaneseq
        %v2514 = vshrl.u32 %v2513, 7
        %v2515 = vsub.s32 %v2512, %v2514
        %v2516 = vrot.slane %v2500, %v2515
        %v2518 = vunpack.c.l.s4 1966171168
        %v2519 = vunpack.c.0.s8 %v2518
        %v2520 = vlaneseq
        %v2521 = vshrl.u32 %v2520, 7
        %v2522 = vsub.s32 %v2519, %v2521
        %v2523 = vrot.slane %v2507, %v2522
        %v2525 = vunpack.c.l.s4 1966171168
        %v2526 = vunpack.c.0.s8 %v2525
        %v2527 = vlaneseq
        %v2528 = vshrl.u32 %v2527, 7
        %v2529 = vsub.s32 %v2526, %v2528
        %v2530 = vrot.slane %v2508, %v2529
        %v2532 = vunpack.c.l.s4 1966171168
        %v2533 = vunpack.c.0.s8 %v2532
        %v2534 = vlaneseq
        %v2535 = vshrl.u32 %v2534, 7
        %v2536 = vsub.s32 %v2533, %v2535
        %v2537 = vrot.slane %v2509, %v2536
        %v2538 = vcombine.high %v2516, %v2516
        %v2539 = vcombine.high %v2523, %v2523
        %v2540 = vcombine.high %v2530, %v2530
        %v2541 = vcombine.high %v2537, %v2537
        %v2542 = vlaneseq
        %v2543 = vshrl.u32 %v2542, 7
        %v2544 = vsub.s32 0, %v2543
        %v2545 = vrot.slane %v2516, %v2544
        %v2546 = vlaneseq
        %v2547 = vshrl.u32 %v2546, 7
        %v2548 = vsub.s32 0, %v2547
        %v2549 = vrot.slane %v2530, %v2548
        %v2550 = vlaneseq
        %v2551 = vshrl.u32 %v2550, 7
        %v2552 = vsub.s32 0, %v2551
        %v2553 = vrot.slane %v2538, %v2552
        %v2554 = vlaneseq
        %v2555 = vshrl.u32 %v2554, 7
        %v2556 = vsub.s32 0, %v2555
        %v2557 = vrot.slane %v2540, %v2556
        %v2558 = vlaneseq
        %v2559 = vshrl.u32 %v2558, 7
        %v2560 = vsub.s32 0, %v2559
        %v2561 = vrot.slane %v2523, %v2560
        %v2562 = vlaneseq
        %v2563 = vshrl.u32 %v2562, 7
        %v2564 = vsub.s32 0, %v2563
        %v2565 = vrot.slane %v2537, %v2564
        %v2566 = vlaneseq
        %v2567 = vshrl.u32 %v2566, 7
        %v2568 = vsub.s32 0, %v2567
        %v2569 = vrot.slane %v2539, %v2568
        %v2570 = vlaneseq
        %v2571 = vshrl.u32 %v2570, 7
        %v2572 = vsub.s32 0, %v2571
        %v2573 = vrot.slane %v2541, %v2572
        %2582 = vset.pattern.permute.xlu0 4
        %2583 = vperm.xlu0 %2582, %v357
        %v2584 = vpop.permute.xlu0 %2583
        %2586 = vset.pattern.permute.xlu0 4
        %2587 = vperm.xlu0 %2586, %v358
        %v2588 = vpop.permute.xlu0 %2587
        %2590 = vset.pattern.permute.xlu0 4
        %2591 = vperm.xlu0 %2590, %v359
        %v2592 = vpop.permute.xlu0 %2591
        %2594 = vset.pattern.permute.xlu0 4
        %2595 = vperm.xlu0 %2594, %v360
        %v2596 = vpop.permute.xlu0 %2595
        %v2598 = vmul.f32 %v2545, %v2584
        %v2599 = vmul.f32 %v2545, %v2588
        %v2600 = vmul.f32 %v2545, %v2592
        %v2601 = vmul.f32 %v2545, %v2596
        %v2602 = vmul.f32 %v2549, %v2584
        %v2603 = vmul.f32 %v2549, %v2588
        %v2604 = vmul.f32 %v2549, %v2592
        %v2605 = vmul.f32 %v2549, %v2596
        %v2606 = vmul.f32 %v2553, %v2584
        %v2607 = vmul.f32 %v2553, %v2588
        %v2608 = vmul.f32 %v2553, %v2592
        %v2609 = vmul.f32 %v2553, %v2596
        %v2610 = vmul.f32 %v2557, %v2584
        %v2611 = vmul.f32 %v2557, %v2588
        %v2612 = vmul.f32 %v2557, %v2592
        %v2613 = vmul.f32 %v2557, %v2596
        %v2614 = vmul.f32 %v2561, %v2584
        %v2615 = vmul.f32 %v2561, %v2588
        %v2616 = vmul.f32 %v2561, %v2592
        %v2617 = vmul.f32 %v2561, %v2596
        %v2618 = vmul.f32 %v2565, %v2584
        %v2619 = vmul.f32 %v2565, %v2588
        %v2620 = vmul.f32 %v2565, %v2592
        %v2621 = vmul.f32 %v2565, %v2596
        %v2622 = vmul.f32 %v2569, %v2584
        %v2623 = vmul.f32 %v2569, %v2588
        %v2624 = vmul.f32 %v2569, %v2592
        %v2625 = vmul.f32 %v2569, %v2596
        %v2626 = vmul.f32 %v2573, %v2584
        %v2627 = vmul.f32 %v2573, %v2588
        %v2628 = vmul.f32 %v2573, %v2592
        %v2629 = vmul.f32 %v2573, %v2596
        %v2630 = vadd.f32 %v2453, %v2598
        %v2631 = vadd.f32 %v2454, %v2599
        %v2632 = vadd.f32 %v2455, %v2600
        %v2633 = vadd.f32 %v2456, %v2601
        %v2634 = vadd.f32 %v2457, %v2602
        %v2635 = vadd.f32 %v2458, %v2603
        %v2636 = vadd.f32 %v2459, %v2604
        %v2637 = vadd.f32 %v2460, %v2605
        %v2638 = vadd.f32 %v2461, %v2606
        %v2639 = vadd.f32 %v2462, %v2607
        %v2640 = vadd.f32 %v2463, %v2608
        %v2641 = vadd.f32 %v2464, %v2609
        %v2642 = vadd.f32 %v2465, %v2610
        %v2643 = vadd.f32 %v2466, %v2611
        %v2644 = vadd.f32 %v2467, %v2612
        %v2645 = vadd.f32 %v2468, %v2613
        %v2646 = vadd.f32 %v2469, %v2614
        %v2647 = vadd.f32 %v2470, %v2615
        %v2648 = vadd.f32 %v2471, %v2616
        %v2649 = vadd.f32 %v2472, %v2617
        %v2650 = vadd.f32 %v2473, %v2618
        %v2651 = vadd.f32 %v2474, %v2619
        %v2652 = vadd.f32 %v2475, %v2620
        %v2653 = vadd.f32 %v2476, %v2621
        %v2654 = vadd.f32 %v2477, %v2622
        %v2655 = vadd.f32 %v2478, %v2623
        %v2656 = vadd.f32 %v2479, %v2624
        %v2657 = vadd.f32 %v2480, %v2625
        %v2658 = vadd.f32 %v2481, %v2626
        %v2659 = vadd.f32 %v2482, %v2627
        %v2660 = vadd.f32 %v2483, %v2628
        %v2661 = vadd.f32 %v2484, %v2629
        %v2662 = vmax.f32 %v1913, 1e-06
        %v2663 = vlog2.pop %v2662
        %v2664 = vmul.f32 %v2663, 0.6931472
        %v2665 = vtanh.pop %v2630
        %v2666 = vtanh.pop %v2631
        %v2667 = vtanh.pop %v2632
        %v2668 = vtanh.pop %v2633
        %v2669 = vtanh.pop %v2634
        %v2670 = vtanh.pop %v2635
        %v2671 = vtanh.pop %v2636
        %v2672 = vtanh.pop %v2637
        %v2673 = vtanh.pop %v2638
        %v2674 = vtanh.pop %v2639
        %v2675 = vtanh.pop %v2640
        %v2676 = vtanh.pop %v2641
        %v2677 = vtanh.pop %v2642
        %v2678 = vtanh.pop %v2643
        %v2679 = vtanh.pop %v2644
        %v2680 = vtanh.pop %v2645
        %v2681 = vtanh.pop %v2646
        %v2682 = vtanh.pop %v2647
        %v2683 = vtanh.pop %v2648
        %v2684 = vtanh.pop %v2649
        %v2685 = vtanh.pop %v2650
        %v2686 = vtanh.pop %v2651
        %v2687 = vtanh.pop %v2652
        %v2688 = vtanh.pop %v2653
        %v2689 = vtanh.pop %v2654
        %v2690 = vtanh.pop %v2655
        %v2691 = vtanh.pop %v2656
        %v2692 = vtanh.pop %v2657
        %v2693 = vtanh.pop %v2658
        %v2694 = vtanh.pop %v2659
        %v2695 = vtanh.pop %v2660
        %v2696 = vtanh.pop %v2661
        %2697 = vset.pattern.permute.xlu0 6
        %2698 = vperm.xlu0 %2697, %v357
        %v2699 = vpop.permute.xlu0 %2698
        %2701 = vset.pattern.permute.xlu0 6
        %2702 = vperm.xlu0 %2701, %v358
        %v2703 = vpop.permute.xlu0 %2702
        %2705 = vset.pattern.permute.xlu0 6
        %2706 = vperm.xlu0 %2705, %v359
        %v2707 = vpop.permute.xlu0 %2706
        %2709 = vset.pattern.permute.xlu0 6
        %2710 = vperm.xlu0 %2709, %v360
        %v2711 = vpop.permute.xlu0 %2710
        %v2713 = vmul.f32 %v2665, %v2699
        %v2714 = vmul.f32 %v2666, %v2703
        %v2715 = vmul.f32 %v2667, %v2707
        %v2716 = vmul.f32 %v2668, %v2711
        %v2717 = vmul.f32 %v2669, %v2699
        %v2718 = vmul.f32 %v2670, %v2703
        %v2719 = vmul.f32 %v2671, %v2707
        %v2720 = vmul.f32 %v2672, %v2711
        %v2721 = vmul.f32 %v2673, %v2699
        %v2722 = vmul.f32 %v2674, %v2703
        %v2723 = vmul.f32 %v2675, %v2707
        %v2724 = vmul.f32 %v2676, %v2711
        %v2725 = vmul.f32 %v2677, %v2699
        %v2726 = vmul.f32 %v2678, %v2703
        %v2727 = vmul.f32 %v2679, %v2707
        %v2728 = vmul.f32 %v2680, %v2711
        %v2729 = vmul.f32 %v2681, %v2699
        %v2730 = vmul.f32 %v2682, %v2703
        %v2731 = vmul.f32 %v2683, %v2707
        %v2732 = vmul.f32 %v2684, %v2711
        %v2733 = vmul.f32 %v2685, %v2699
        %v2734 = vmul.f32 %v2686, %v2703
        %v2735 = vmul.f32 %v2687, %v2707
        %v2736 = vmul.f32 %v2688, %v2711
        %v2737 = vmul.f32 %v2689, %v2699
        %v2738 = vmul.f32 %v2690, %v2703
        %v2739 = vmul.f32 %v2691, %v2707
        %v2740 = vmul.f32 %v2692, %v2711
        %v2741 = vmul.f32 %v2693, %v2699
        %v2742 = vmul.f32 %v2694, %v2703
        %v2743 = vmul.f32 %v2695, %v2707
        %v2744 = vmul.f32 %v2696, %v2711
        %v2745 = vadd.f32 %v2713, %v2714
        %v2746 = vadd.f32 %v2745, %v2715
        %v2747 = vadd.f32 %v2746, %v2716
        %v2748 = vrot.slane %v2747, 4
        %v2749 = vadd.f32 %v2747, %v2748
        %v2750 = vrot.slane %v2749, 2
        %v2751 = vadd.f32 %v2749, %v2750
        %v2752 = vrot.slane %v2751, 1
        %v2753 = vadd.f32 %v2751, %v2752
        %v2754 = vadd.f32 %v2717, %v2718
        %v2755 = vadd.f32 %v2754, %v2719
        %v2756 = vadd.f32 %v2755, %v2720
        %v2757 = vrot.slane %v2756, 4
        %v2758 = vadd.f32 %v2756, %v2757
        %v2759 = vrot.slane %v2758, 2
        %v2760 = vadd.f32 %v2758, %v2759
        %v2761 = vrot.slane %v2760, 1
        %v2762 = vadd.f32 %v2760, %v2761
        %v2763 = vadd.f32 %v2721, %v2722
        %v2764 = vadd.f32 %v2763, %v2723
        %v2765 = vadd.f32 %v2764, %v2724
        %v2766 = vrot.slane %v2765, 4
        %v2767 = vadd.f32 %v2765, %v2766
        %v2768 = vrot.slane %v2767, 2
        %v2769 = vadd.f32 %v2767, %v2768
        %v2770 = vrot.slane %v2769, 1
        %v2771 = vadd.f32 %v2769, %v2770
        %v2772 = vadd.f32 %v2725, %v2726
        %v2773 = vadd.f32 %v2772, %v2727
        %v2774 = vadd.f32 %v2773, %v2728
        %v2775 = vrot.slane %v2774, 4
        %v2776 = vadd.f32 %v2774, %v2775
        %v2777 = vrot.slane %v2776, 2
        %v2778 = vadd.f32 %v2776, %v2777
        %v2779 = vrot.slane %v2778, 1
        %v2780 = vadd.f32 %v2778, %v2779
        %v2781 = vadd.f32 %v2729, %v2730
        %v2782 = vadd.f32 %v2781, %v2731
        %v2783 = vadd.f32 %v2782, %v2732
        %v2784 = vrot.slane %v2783, 4
        %v2785 = vadd.f32 %v2783, %v2784
        %v2786 = vrot.slane %v2785, 2
        %v2787 = vadd.f32 %v2785, %v2786
        %v2788 = vrot.slane %v2787, 1
        %v2789 = vadd.f32 %v2787, %v2788
        %v2790 = vadd.f32 %v2733, %v2734
        %v2791 = vadd.f32 %v2790, %v2735
        %v2792 = vadd.f32 %v2791, %v2736
        %v2793 = vrot.slane %v2792, 4
        %v2794 = vadd.f32 %v2792, %v2793
        %v2795 = vrot.slane %v2794, 2
        %v2796 = vadd.f32 %v2794, %v2795
        %v2797 = vrot.slane %v2796, 1
        %v2798 = vadd.f32 %v2796, %v2797
        %v2799 = vadd.f32 %v2737, %v2738
        %v2800 = vadd.f32 %v2799, %v2739
        %v2801 = vadd.f32 %v2800, %v2740
        %v2802 = vrot.slane %v2801, 4
        %v2803 = vadd.f32 %v2801, %v2802
        %v2804 = vrot.slane %v2803, 2
        %v2805 = vadd.f32 %v2803, %v2804
        %v2806 = vrot.slane %v2805, 1
        %v2807 = vadd.f32 %v2805, %v2806
        %v2808 = vadd.f32 %v2741, %v2742
        %v2809 = vadd.f32 %v2808, %v2743
        %v2810 = vadd.f32 %v2809, %v2744
        %v2811 = vrot.slane %v2810, 4
        %v2812 = vadd.f32 %v2810, %v2811
        %v2813 = vrot.slane %v2812, 2
        %v2814 = vadd.f32 %v2812, %v2813
        %v2815 = vrot.slane %v2814, 1
        %v2816 = vadd.f32 %v2814, %v2815
        %v2818 = vrot.slane %v2664, 1
        %v2819 = vrot.slane %v2664, 2
        %v2820 = vrot.slane %v2664, 3
        %v2821 = vrot.slane %v2664, 4
        %v2822 = vrot.slane %v2664, 5
        %v2823 = vrot.slane %v2664, 6
        %v2824 = vrot.slane %v2664, 7
        %v2833 = vadd.f32 %v2753, %v2664
        %v2834 = vadd.f32 %v2762, %v2818
        %v2835 = vadd.f32 %v2771, %v2819
        %v2836 = vadd.f32 %v2780, %v2820
        %v2837 = vadd.f32 %v2789, %v2821
        %v2838 = vadd.f32 %v2798, %v2822
        %v2839 = vadd.f32 %v2807, %v2823
        %v2840 = vadd.f32 %v2816, %v2824
        %v2849 = vrot.slane %v2834, 7
        %vm2850 = vcmask 1041409
        %v2851 = vsel %vm2850, %v2849, %v2833
        %v2852 = vrot.slane %v2835, 6
        %vm2853 = vcmask 1042434
        %v2854 = vsel %vm2853, %v2852, %v2851
        %v2855 = vrot.slane %v2836, 5
        %vm2856 = vcmask 1043459
        %v2857 = vsel %vm2856, %v2855, %v2854
        %v2858 = vrot.slane %v2837, 4
        %vm2859 = vcmask 1044484
        %v2860 = vsel %vm2859, %v2858, %v2857
        %v2861 = vrot.slane %v2838, 3
        %vm2862 = vcmask 1045509
        %v2863 = vsel %vm2862, %v2861, %v2860
        %v2864 = vrot.slane %v2839, 2
        %vm2865 = vcmask 1046534
        %v2866 = vsel %vm2865, %v2864, %v2863
        %v2867 = vrot.slane %v2840, 1
        %vm2868 = vcmask 1047559
        %v2869 = vsel %vm2868, %v2867, %v2866
        %2871 = vmax.xlane.f32.xlu0 %v2869
        %v2872 = vpop.xlane.xlu0 %2871
        %v2874 = vrot.slane %v2872, 1
        %v2875 = vrot.slane %v2872, 2
        %v2876 = vrot.slane %v2872, 3
        %v2877 = vrot.slane %v2872, 4
        %v2878 = vrot.slane %v2872, 5
        %v2879 = vrot.slane %v2872, 6
        %v2880 = vrot.slane %v2872, 7
        %v2889 = vsub.f32 %v2833, %v2872
        %v2890 = vsub.f32 %v2834, %v2874
        %v2891 = vsub.f32 %v2835, %v2875
        %v2892 = vsub.f32 %v2836, %v2876
        %v2893 = vsub.f32 %v2837, %v2877
        %v2894 = vsub.f32 %v2838, %v2878
        %v2895 = vsub.f32 %v2839, %v2879
        %v2896 = vsub.f32 %v2840, %v2880
        %v2897 = vmul.f32 %v2889, 1.442695
        %v2898 = vpow.pop %v2897
        %v2899 = vmul.f32 %v2890, 1.442695
        %v2900 = vpow.pop %v2899
        %v2901 = vmul.f32 %v2891, 1.442695
        %v2902 = vpow.pop %v2901
        %v2903 = vmul.f32 %v2892, 1.442695
        %v2904 = vpow.pop %v2903
        %v2905 = vmul.f32 %v2893, 1.442695
        %v2906 = vpow.pop %v2905
        %v2907 = vmul.f32 %v2894, 1.442695
        %v2908 = vpow.pop %v2907
        %v2909 = vmul.f32 %v2895, 1.442695
        %v2910 = vpow.pop %v2909
        %v2911 = vmul.f32 %v2896, 1.442695
        %v2912 = vpow.pop %v2911
        %v2921 = vrot.slane %v2900, 7
        %v2922 = vsel %vm2850, %v2921, %v2898
        %v2923 = vrot.slane %v2902, 6
        %v2924 = vsel %vm2853, %v2923, %v2922
        %v2925 = vrot.slane %v2904, 5
        %v2926 = vsel %vm2856, %v2925, %v2924
        %v2927 = vrot.slane %v2906, 4
        %v2928 = vsel %vm2859, %v2927, %v2926
        %v2929 = vrot.slane %v2908, 3
        %v2930 = vsel %vm2862, %v2929, %v2928
        %v2931 = vrot.slane %v2910, 2
        %v2932 = vsel %vm2865, %v2931, %v2930
        %v2933 = vrot.slane %v2912, 1
        %v2934 = vsel %vm2868, %v2933, %v2932
        %2936 = vadd.xlane.f32.xlu0 %v2934
        %v2937 = vpop.xlane.xlu0 %2936
        %v2939 = vrot.slane %v2937, 1
        %v2940 = vrot.slane %v2937, 2
        %v2941 = vrot.slane %v2937, 3
        %v2942 = vrot.slane %v2937, 4
        %v2943 = vrot.slane %v2937, 5
        %v2944 = vrot.slane %v2937, 6
        %v2945 = vrot.slane %v2937, 7
        %v2954 = vrcp.pop %v2937
        %v2955 = vmul.f32 %v2898, %v2954
        %v2956 = vrcp.pop %v2939
        %v2957 = vmul.f32 %v2900, %v2956
        %v2958 = vrcp.pop %v2940
        %v2959 = vmul.f32 %v2902, %v2958
        %v2960 = vrcp.pop %v2941
        %v2961 = vmul.f32 %v2904, %v2960
        %v2962 = vrcp.pop %v2942
        %v2963 = vmul.f32 %v2906, %v2962
        %v2964 = vrcp.pop %v2943
        %v2965 = vmul.f32 %v2908, %v2964
        %v2966 = vrcp.pop %v2944
        %v2967 = vmul.f32 %v2910, %v2966
        %v2968 = vrcp.pop %v2945
        %v2969 = vmul.f32 %v2912, %v2968
        %v2970 = vld [vmem:[%s346] sm:$0xff]
        %vm2971 = vcmp.gt.s32.totalorder %v2970, 0
        %v2980 = vrot.slane %v2957, 7
        %v2981 = vsel %vm2850, %v2980, %v2955
        %v2982 = vrot.slane %v2959, 6
        %v2983 = vsel %vm2853, %v2982, %v2981
        %v2984 = vrot.slane %v2961, 5
        %v2985 = vsel %vm2856, %v2984, %v2983
        %v2986 = vrot.slane %v2963, 4
        %v2987 = vsel %vm2859, %v2986, %v2985
        %v2988 = vrot.slane %v2965, 3
        %v2989 = vsel %vm2862, %v2988, %v2987
        %v2990 = vrot.slane %v2967, 2
        %v2991 = vsel %vm2865, %v2990, %v2989
        %v2992 = vrot.slane %v2969, 1
        %v2993 = vsel %vm2868, %v2992, %v2991
        %v2995 = vsel %vm2971, %v2993, 1e-08
        %2996 = vst [vmem:[#allocation2] sm:$0xff] %v2995
        %2997 = vst [vmem:[%s323] sm:$0xff] %v2995
        %v2999 = vcombine.high %v2995, %v2995
        %v3001 = vunpack.c.l.s4 1966171168
        %v3002 = vunpack.c.0.s8 %v3001
        %v3003 = vlaneseq
        %v3004 = vshrl.u32 %v3003, 7
        %v3005 = vsub.s32 %v3002, %v3004
        %v3006 = vrot.slane %v2995, %v3005
        %v3008 = vunpack.c.l.s4 1966171168
        %v3009 = vunpack.c.0.s8 %v3008
        %v3010 = vlaneseq
        %v3011 = vshrl.u32 %v3010, 7
        %v3012 = vsub.s32 %v3009, %v3011
        %v3013 = vrot.slane %v2999, %v3012
        %v3014 = vcombine.high %v3006, %v3006
        %v3015 = vcombine.high %v3013, %v3013
        %v3017 = vunpack.c.l.s4 1966171168
        %v3018 = vunpack.c.0.s8 %v3017
        %v3019 = vlaneseq
        %v3020 = vshrl.u32 %v3019, 7
        %v3021 = vsub.s32 %v3018, %v3020
        %v3022 = vrot.slane %v3006, %v3021
        %v3024 = vunpack.c.l.s4 1966171168
        %v3025 = vunpack.c.0.s8 %v3024
        %v3026 = vlaneseq
        %v3027 = vshrl.u32 %v3026, 7
        %v3028 = vsub.s32 %v3025, %v3027
        %v3029 = vrot.slane %v3013, %v3028
        %v3031 = vunpack.c.l.s4 1966171168
        %v3032 = vunpack.c.0.s8 %v3031
        %v3033 = vlaneseq
        %v3034 = vshrl.u32 %v3033, 7
        %v3035 = vsub.s32 %v3032, %v3034
        %v3036 = vrot.slane %v3014, %v3035
        %v3038 = vunpack.c.l.s4 1966171168
        %v3039 = vunpack.c.0.s8 %v3038
        %v3040 = vlaneseq
        %v3041 = vshrl.u32 %v3040, 7
        %v3042 = vsub.s32 %v3039, %v3041
        %v3043 = vrot.slane %v3015, %v3042
        %v3044 = vcombine.high %v3022, %v3022
        %v3045 = vcombine.high %v3029, %v3029
        %v3046 = vcombine.high %v3036, %v3036
        %v3047 = vcombine.high %v3043, %v3043
        %v3056 = vld [vmem:[%s337] sm:$0xff]
        %v3057 = vld [vmem:[%s337 + $0x8] sm:$0xff]
        %v3058 = vld [vmem:[%s337 + $0x10] sm:$0xff]
        %v3059 = vld [vmem:[%s337 + $0x18] sm:$0xff]
        %v3060 = vld [vmem:[%s337 + $0x20] sm:$0xff]
        %v3061 = vld [vmem:[%s337 + $0x28] sm:$0xff]
        %v3062 = vld [vmem:[%s337 + $0x30] sm:$0xff]
        %v3063 = vld [vmem:[%s337 + $0x38] sm:$0xff]
        %v3064 = vld [vmem:[%s337 + $0x40] sm:$0xff]
        %v3065 = vld [vmem:[%s337 + $0x48] sm:$0xff]
        %v3066 = vld [vmem:[%s337 + $0x50] sm:$0xff]
        %v3067 = vld [vmem:[%s337 + $0x58] sm:$0xff]
        %v3068 = vld [vmem:[%s337 + $0x60] sm:$0xff]
        %v3069 = vld [vmem:[%s337 + $0x68] sm:$0xff]
        %v3070 = vld [vmem:[%s337 + $0x70] sm:$0xff]
        %v3071 = vld [vmem:[%s337 + $0x78] sm:$0xff]
        %v3072 = vld [vmem:[%s337 + $0x80] sm:$0xff]
        %v3073 = vld [vmem:[%s337 + $0x88] sm:$0xff]
        %v3074 = vld [vmem:[%s337 + $0x90] sm:$0xff]
        %v3075 = vld [vmem:[%s337 + $0x98] sm:$0xff]
        %v3076 = vld [vmem:[%s337 + $0xa0] sm:$0xff]
        %v3077 = vld [vmem:[%s337 + $0xa8] sm:$0xff]
        %v3078 = vld [vmem:[%s337 + $0xb0] sm:$0xff]
        %v3079 = vld [vmem:[%s337 + $0xb8] sm:$0xff]
        %v3080 = vld [vmem:[%s337 + $0xc0] sm:$0xff]
        %v3081 = vld [vmem:[%s337 + $0xc8] sm:$0xff]
        %v3082 = vld [vmem:[%s337 + $0xd0] sm:$0xff]
        %v3083 = vld [vmem:[%s337 + $0xd8] sm:$0xff]
        %v3084 = vld [vmem:[%s337 + $0xe0] sm:$0xff]
        %v3085 = vld [vmem:[%s337 + $0xe8] sm:$0xff]
        %v3086 = vld [vmem:[%s337 + $0xf0] sm:$0xff]
        %v3087 = vld [vmem:[%s337 + $0xf8] sm:$0xff]
        %v3088 = vld [vmem:[%s337 + $0x100] sm:$0xff]
        %v3089 = vld [vmem:[%s337 + $0x108] sm:$0xff]
        %v3090 = vld [vmem:[%s337 + $0x110] sm:$0xff]
        %v3091 = vld [vmem:[%s337 + $0x118] sm:$0xff]
        %v3092 = vld [vmem:[%s337 + $0x120] sm:$0xff]
        %v3093 = vld [vmem:[%s337 + $0x128] sm:$0xff]
        %v3094 = vld [vmem:[%s337 + $0x130] sm:$0xff]
        %v3095 = vld [vmem:[%s337 + $0x138] sm:$0xff]
        %v3096 = vld [vmem:[%s337 + $0x140] sm:$0xff]
        %v3097 = vld [vmem:[%s337 + $0x148] sm:$0xff]
        %v3098 = vld [vmem:[%s337 + $0x150] sm:$0xff]
        %v3099 = vld [vmem:[%s337 + $0x158] sm:$0xff]
        %v3100 = vld [vmem:[%s337 + $0x160] sm:$0xff]
        %v3101 = vld [vmem:[%s337 + $0x168] sm:$0xff]
        %v3102 = vld [vmem:[%s337 + $0x170] sm:$0xff]
        %v3103 = vld [vmem:[%s337 + $0x178] sm:$0xff]
        %v3104 = vld [vmem:[%s337 + $0x180] sm:$0xff]
        %v3105 = vld [vmem:[%s337 + $0x188] sm:$0xff]
        %v3106 = vld [vmem:[%s337 + $0x190] sm:$0xff]
        %v3107 = vld [vmem:[%s337 + $0x198] sm:$0xff]
        %v3108 = vld [vmem:[%s337 + $0x1a0] sm:$0xff]
        %v3109 = vld [vmem:[%s337 + $0x1a8] sm:$0xff]
        %v3110 = vld [vmem:[%s337 + $0x1b0] sm:$0xff]
        %v3111 = vld [vmem:[%s337 + $0x1b8] sm:$0xff]
        %v3112 = vld [vmem:[%s337 + $0x1c0] sm:$0xff]
        %v3113 = vld [vmem:[%s337 + $0x1c8] sm:$0xff]
        %v3114 = vld [vmem:[%s337 + $0x1d0] sm:$0xff]
        %v3115 = vld [vmem:[%s337 + $0x1d8] sm:$0xff]
        %v3116 = vld [vmem:[%s337 + $0x1e0] sm:$0xff]
        %v3117 = vld [vmem:[%s337 + $0x1e8] sm:$0xff]
        %v3118 = vld [vmem:[%s337 + $0x1f0] sm:$0xff]
        %v3119 = vld [vmem:[%s337 + $0x1f8] sm:$0xff]
        %v3120 = vld [vmem:[%s337 + $0x200] sm:$0xff]
        %v3121 = vld [vmem:[%s337 + $0x208] sm:$0xff]
        %v3122 = vld [vmem:[%s337 + $0x210] sm:$0xff]
        %v3123 = vld [vmem:[%s337 + $0x218] sm:$0xff]
        %v3124 = vld [vmem:[%s337 + $0x220] sm:$0xff]
        %v3125 = vld [vmem:[%s337 + $0x228] sm:$0xff]
        %v3126 = vld [vmem:[%s337 + $0x230] sm:$0xff]
        %v3127 = vld [vmem:[%s337 + $0x238] sm:$0xff]
        %v3128 = vld [vmem:[%s337 + $0x240] sm:$0xff]
        %v3129 = vld [vmem:[%s337 + $0x248] sm:$0xff]
        %v3130 = vld [vmem:[%s337 + $0x250] sm:$0xff]
        %v3131 = vld [vmem:[%s337 + $0x258] sm:$0xff]
        %v3132 = vld [vmem:[%s337 + $0x260] sm:$0xff]
        %v3133 = vld [vmem:[%s337 + $0x268] sm:$0xff]
        %v3134 = vld [vmem:[%s337 + $0x270] sm:$0xff]
        %v3135 = vld [vmem:[%s337 + $0x278] sm:$0xff]
        %v3136 = vld [vmem:[%s337 + $0x280] sm:$0xff]
        %v3137 = vld [vmem:[%s337 + $0x288] sm:$0xff]
        %v3138 = vld [vmem:[%s337 + $0x290] sm:$0xff]
        %v3139 = vld [vmem:[%s337 + $0x298] sm:$0xff]
        %v3140 = vld [vmem:[%s337 + $0x2a0] sm:$0xff]
        %v3141 = vld [vmem:[%s337 + $0x2a8] sm:$0xff]
        %v3142 = vld [vmem:[%s337 + $0x2b0] sm:$0xff]
        %v3143 = vld [vmem:[%s337 + $0x2b8] sm:$0xff]
        %v3144 = vld [vmem:[%s337 + $0x2c0] sm:$0xff]
        %v3145 = vld [vmem:[%s337 + $0x2c8] sm:$0xff]
        %v3146 = vld [vmem:[%s337 + $0x2d0] sm:$0xff]
        %v3147 = vld [vmem:[%s337 + $0x2d8] sm:$0xff]
        %v3148 = vld [vmem:[%s337 + $0x2e0] sm:$0xff]
        %v3149 = vld [vmem:[%s337 + $0x2e8] sm:$0xff]
        %v3150 = vld [vmem:[%s337 + $0x2f0] sm:$0xff]
        %v3151 = vld [vmem:[%s337 + $0x2f8] sm:$0xff]
        %v3152 = vld [vmem:[%s337 + $0x300] sm:$0xff]
        %v3153 = vld [vmem:[%s337 + $0x308] sm:$0xff]
        %v3154 = vld [vmem:[%s337 + $0x310] sm:$0xff]
        %v3155 = vld [vmem:[%s337 + $0x318] sm:$0xff]
        %v3156 = vld [vmem:[%s337 + $0x320] sm:$0xff]
        %v3157 = vld [vmem:[%s337 + $0x328] sm:$0xff]
        %v3158 = vld [vmem:[%s337 + $0x330] sm:$0xff]
        %v3159 = vld [vmem:[%s337 + $0x338] sm:$0xff]
        %v3160 = vld [vmem:[%s337 + $0x340] sm:$0xff]
        %v3161 = vld [vmem:[%s337 + $0x348] sm:$0xff]
        %v3162 = vld [vmem:[%s337 + $0x350] sm:$0xff]
        %v3163 = vld [vmem:[%s337 + $0x358] sm:$0xff]
        %v3164 = vld [vmem:[%s337 + $0x360] sm:$0xff]
        %v3165 = vld [vmem:[%s337 + $0x368] sm:$0xff]
        %v3166 = vld [vmem:[%s337 + $0x370] sm:$0xff]
        %v3167 = vld [vmem:[%s337 + $0x378] sm:$0xff]
        %v3168 = vld [vmem:[%s337 + $0x380] sm:$0xff]
        %v3169 = vld [vmem:[%s337 + $0x388] sm:$0xff]
        %v3170 = vld [vmem:[%s337 + $0x390] sm:$0xff]
        %v3171 = vld [vmem:[%s337 + $0x398] sm:$0xff]
        %v3172 = vld [vmem:[%s337 + $0x3a0] sm:$0xff]
        %v3173 = vld [vmem:[%s337 + $0x3a8] sm:$0xff]
        %v3174 = vld [vmem:[%s337 + $0x3b0] sm:$0xff]
        %v3175 = vld [vmem:[%s337 + $0x3b8] sm:$0xff]
        %v3176 = vld [vmem:[%s337 + $0x3c0] sm:$0xff]
        %v3177 = vld [vmem:[%s337 + $0x3c8] sm:$0xff]
        %v3178 = vld [vmem:[%s337 + $0x3d0] sm:$0xff]
        %v3179 = vld [vmem:[%s337 + $0x3d8] sm:$0xff]
        %v3180 = vld [vmem:[%s337 + $0x3e0] sm:$0xff]
        %v3181 = vld [vmem:[%s337 + $0x3e8] sm:$0xff]
        %v3182 = vld [vmem:[%s337 + $0x3f0] sm:$0xff]
        %v3183 = vld [vmem:[%s337 + $0x3f8] sm:$0xff]
        %3184 = vmatprep.subr.mxu0 0.0
        %3185 = vmatpush1.msra.mxu0 %v3071
        %3186 = vmatprep.subr.mxu0 0.0
        %3187 = vmatpush1.msra.mxu0 %v3070
        %3188 = vmatprep.subr.mxu0 0.0
        %3189 = vmatpush1.msra.mxu0 %v3069
        %3190 = vmatprep.subr.mxu0 0.0
        %3191 = vmatpush1.msra.mxu0 %v3068
        %3192 = vmatprep.subr.mxu0 0.0
        %3193 = vmatpush1.msra.mxu0 %v3067
        %3194 = vmatprep.subr.mxu0 0.0
        %3195 = vmatpush1.msra.mxu0 %v3066
        %3196 = vmatprep.subr.mxu0 0.0
        %3197 = vmatpush1.msra.mxu0 %v3065
        %3198 = vmatprep.subr.mxu0 0.0
        %3199 = vmatpush1.msra.mxu0 %v3064
        %3200 = vmatprep.subr.mxu0 0.0
        %3201 = vmatpush1.msra.mxu0 %v3063
        %3202 = vmatprep.subr.mxu0 0.0
        %3203 = vmatpush1.msra.mxu0 %v3062
        %3204 = vmatprep.subr.mxu0 0.0
        %3205 = vmatpush1.msra.mxu0 %v3061
        %3206 = vmatprep.subr.mxu0 0.0
        %3207 = vmatpush1.msra.mxu0 %v3060
        %3208 = vmatprep.subr.mxu0 0.0
        %3209 = vmatpush1.msra.mxu0 %v3059
        %3210 = vmatprep.subr.mxu0 0.0
        %3211 = vmatpush1.msra.mxu0 %v3058
        %3212 = vmatprep.subr.mxu0 0.0
        %3213 = vmatpush1.msra.mxu0 %v3057
        %3214 = vmatprep.subr.mxu0 0.0
        %3215 = vmatpush1.msra.mxu0 %v3056
        %3216 = vmatprep.subr.mxu0 0.0
        %3217 = vmatpush2.msra.mxu0 0.0
        %3218 = vmatprep.subr.mxu0 0.0
        %3219 = vmatpush2.msra.mxu0 0.0
        %3220 = vmatprep.subr.mxu0 0.0
        %3221 = vmatpush2.msra.mxu0 0.0
        %3222 = vmatprep.subr.mxu0 0.0
        %3223 = vmatpush2.msra.mxu0 0.0
        %3224 = vmatprep.subr.mxu0 0.0
        %3225 = vmatpush2.msra.mxu0 0.0
        %3226 = vmatprep.subr.mxu0 0.0
        %3227 = vmatpush2.msra.mxu0 0.0
        %3228 = vmatprep.subr.mxu0 0.0
        %3229 = vmatpush2.msra.mxu0 0.0
        %3230 = vmatprep.subr.mxu0 0.0
        %3231 = vmatpush2.msra.mxu0 0.0
        %3232 = vmatprep.subr.mxu0 0.0
        %3233 = vmatpush2.msra.mxu0 0.0
        %3234 = vmatprep.subr.mxu0 0.0
        %3235 = vmatpush2.msra.mxu0 0.0
        %3236 = vmatprep.subr.mxu0 0.0
        %3237 = vmatpush2.msra.mxu0 0.0
        %3238 = vmatprep.subr.mxu0 0.0
        %3239 = vmatpush2.msra.mxu0 0.0
        %3240 = vmatprep.subr.mxu0 0.0
        %3241 = vmatpush2.msra.mxu0 0.0
        %3242 = vmatprep.subr.mxu0 0.0
        %3243 = vmatpush2.msra.mxu0 0.0
        %3244 = vmatprep.subr.mxu0 0.0
        %3245 = vmatpush2.msra.mxu0 0.0
        %3246 = vmatprep.subr.mxu0 0.0
        %3247 = vmatpush2.msra.mxu0 0.0
        %3248 = vmatprep.mubr.f32.mxu0 0.0
        %3249 = vmatmul.mubr.f32.gmra.mxu0 %v3022
        %v3250 = vpop.f32.mrf.mxu0
        %v3251 = vadd.f32 0.0, %v3250
        %v3252 = vpop.f32.mrf.mxu0
        %3253 = vdwg.mxu0
        %3254 = vmatprep.subr.mxu0 0.0
        %3255 = vmatpush1.msra.mxu0 %v3087
        %3256 = vmatprep.subr.mxu0 0.0
        %3257 = vmatpush1.msra.mxu0 %v3086
        %3258 = vmatprep.subr.mxu0 0.0
        %3259 = vmatpush1.msra.mxu0 %v3085
        %3260 = vmatprep.subr.mxu0 0.0
        %3261 = vmatpush1.msra.mxu0 %v3084
        %3262 = vmatprep.subr.mxu0 0.0
        %3263 = vmatpush1.msra.mxu0 %v3083
        %3264 = vmatprep.subr.mxu0 0.0
        %3265 = vmatpush1.msra.mxu0 %v3082
        %3266 = vmatprep.subr.mxu0 0.0
        %3267 = vmatpush1.msra.mxu0 %v3081
        %3268 = vmatprep.subr.mxu0 0.0
        %3269 = vmatpush1.msra.mxu0 %v3080
        %3270 = vmatprep.subr.mxu0 0.0
        %3271 = vmatpush1.msra.mxu0 %v3079
        %3272 = vmatprep.subr.mxu0 0.0
        %3273 = vmatpush1.msra.mxu0 %v3078
        %3274 = vmatprep.subr.mxu0 0.0
        %3275 = vmatpush1.msra.mxu0 %v3077
        %3276 = vmatprep.subr.mxu0 0.0
        %3277 = vmatpush1.msra.mxu0 %v3076
        %3278 = vmatprep.subr.mxu0 0.0
        %3279 = vmatpush1.msra.mxu0 %v3075
        %3280 = vmatprep.subr.mxu0 0.0
        %3281 = vmatpush1.msra.mxu0 %v3074
        %3282 = vmatprep.subr.mxu0 0.0
        %3283 = vmatpush1.msra.mxu0 %v3073
        %3284 = vmatprep.subr.mxu0 0.0
        %3285 = vmatpush1.msra.mxu0 %v3072
        %3286 = vmatprep.subr.mxu0 0.0
        %3287 = vmatpush2.msra.mxu0 0.0
        %3288 = vmatprep.subr.mxu0 0.0
        %3289 = vmatpush2.msra.mxu0 0.0
        %3290 = vmatprep.subr.mxu0 0.0
        %3291 = vmatpush2.msra.mxu0 0.0
        %3292 = vmatprep.subr.mxu0 0.0
        %3293 = vmatpush2.msra.mxu0 0.0
        %3294 = vmatprep.subr.mxu0 0.0
        %3295 = vmatpush2.msra.mxu0 0.0
        %3296 = vmatprep.subr.mxu0 0.0
        %3297 = vmatpush2.msra.mxu0 0.0
        %3298 = vmatprep.subr.mxu0 0.0
        %3299 = vmatpush2.msra.mxu0 0.0
        %3300 = vmatprep.subr.mxu0 0.0
        %3301 = vmatpush2.msra.mxu0 0.0
        %3302 = vmatprep.subr.mxu0 0.0
        %3303 = vmatpush2.msra.mxu0 0.0
        %3304 = vmatprep.subr.mxu0 0.0
        %3305 = vmatpush2.msra.mxu0 0.0
        %3306 = vmatprep.subr.mxu0 0.0
        %3307 = vmatpush2.msra.mxu0 0.0
        %3308 = vmatprep.subr.mxu0 0.0
        %3309 = vmatpush2.msra.mxu0 0.0
        %3310 = vmatprep.subr.mxu0 0.0
        %3311 = vmatpush2.msra.mxu0 0.0
        %3312 = vmatprep.subr.mxu0 0.0
        %3313 = vmatpush2.msra.mxu0 0.0
        %3314 = vmatprep.subr.mxu0 0.0
        %3315 = vmatpush2.msra.mxu0 0.0
        %3316 = vmatprep.subr.mxu0 0.0
        %3317 = vmatpush2.msra.mxu0 0.0
        %3318 = vmatprep.mubr.f32.mxu0 0.0
        %3319 = vmatmul.mubr.f32.gmra.mxu0 %v3036
        %v3320 = vpop.f32.mrf.mxu0
        %v3321 = vadd.f32 0.0, %v3320
        %v3322 = vpop.f32.mrf.mxu0
        %3323 = vdwg.mxu0
        %3324 = vmatprep.subr.mxu0 0.0
        %3325 = vmatpush1.msra.mxu0 %v3103
        %3326 = vmatprep.subr.mxu0 0.0
        %3327 = vmatpush1.msra.mxu0 %v3102
        %3328 = vmatprep.subr.mxu0 0.0
        %3329 = vmatpush1.msra.mxu0 %v3101
        %3330 = vmatprep.subr.mxu0 0.0
        %3331 = vmatpush1.msra.mxu0 %v3100
        %3332 = vmatprep.subr.mxu0 0.0
        %3333 = vmatpush1.msra.mxu0 %v3099
        %3334 = vmatprep.subr.mxu0 0.0
        %3335 = vmatpush1.msra.mxu0 %v3098
        %3336 = vmatprep.subr.mxu0 0.0
        %3337 = vmatpush1.msra.mxu0 %v3097
        %3338 = vmatprep.subr.mxu0 0.0
        %3339 = vmatpush1.msra.mxu0 %v3096
        %3340 = vmatprep.subr.mxu0 0.0
        %3341 = vmatpush1.msra.mxu0 %v3095
        %3342 = vmatprep.subr.mxu0 0.0
        %3343 = vmatpush1.msra.mxu0 %v3094
        %3344 = vmatprep.subr.mxu0 0.0
        %3345 = vmatpush1.msra.mxu0 %v3093
        %3346 = vmatprep.subr.mxu0 0.0
        %3347 = vmatpush1.msra.mxu0 %v3092
        %3348 = vmatprep.subr.mxu0 0.0
        %3349 = vmatpush1.msra.mxu0 %v3091
        %3350 = vmatprep.subr.mxu0 0.0
        %3351 = vmatpush1.msra.mxu0 %v3090
        %3352 = vmatprep.subr.mxu0 0.0
        %3353 = vmatpush1.msra.mxu0 %v3089
        %3354 = vmatprep.subr.mxu0 0.0
        %3355 = vmatpush1.msra.mxu0 %v3088
        %3356 = vmatprep.subr.mxu0 0.0
        %3357 = vmatpush2.msra.mxu0 0.0
        %3358 = vmatprep.subr.mxu0 0.0
        %3359 = vmatpush2.msra.mxu0 0.0
        %3360 = vmatprep.subr.mxu0 0.0
        %3361 = vmatpush2.msra.mxu0 0.0
        %3362 = vmatprep.subr.mxu0 0.0
        %3363 = vmatpush2.msra.mxu0 0.0
        %3364 = vmatprep.subr.mxu0 0.0
        %3365 = vmatpush2.msra.mxu0 0.0
        %3366 = vmatprep.subr.mxu0 0.0
        %3367 = vmatpush2.msra.mxu0 0.0
        %3368 = vmatprep.subr.mxu0 0.0
        %3369 = vmatpush2.msra.mxu0 0.0
        %3370 = vmatprep.subr.mxu0 0.0
        %3371 = vmatpush2.msra.mxu0 0.0
        %3372 = vmatprep.subr.mxu0 0.0
        %3373 = vmatpush2.msra.mxu0 0.0
        %3374 = vmatprep.subr.mxu0 0.0
        %3375 = vmatpush2.msra.mxu0 0.0
        %3376 = vmatprep.subr.mxu0 0.0
        %3377 = vmatpush2.msra.mxu0 0.0
        %3378 = vmatprep.subr.mxu0 0.0
        %3379 = vmatpush2.msra.mxu0 0.0
        %3380 = vmatprep.subr.mxu0 0.0
        %3381 = vmatpush2.msra.mxu0 0.0
        %3382 = vmatprep.subr.mxu0 0.0
        %3383 = vmatpush2.msra.mxu0 0.0
        %3384 = vmatprep.subr.mxu0 0.0
        %3385 = vmatpush2.msra.mxu0 0.0
        %3386 = vmatprep.subr.mxu0 0.0
        %3387 = vmatpush2.msra.mxu0 0.0
        %3388 = vmatprep.mubr.f32.mxu0 0.0
        %3389 = vmatmul.mubr.f32.gmra.mxu0 %v3044
        %v3390 = vpop.f32.mrf.mxu0
        %v3391 = vadd.f32 0.0, %v3390
        %v3392 = vpop.f32.mrf.mxu0
        %3393 = vdwg.mxu0
        %3394 = vmatprep.subr.mxu0 0.0
        %3395 = vmatpush1.msra.mxu0 %v3119
        %3396 = vmatprep.subr.mxu0 0.0
        %3397 = vmatpush1.msra.mxu0 %v3118
        %3398 = vmatprep.subr.mxu0 0.0
        %3399 = vmatpush1.msra.mxu0 %v3117
        %3400 = vmatprep.subr.mxu0 0.0
        %3401 = vmatpush1.msra.mxu0 %v3116
        %3402 = vmatprep.subr.mxu0 0.0
        %3403 = vmatpush1.msra.mxu0 %v3115
        %3404 = vmatprep.subr.mxu0 0.0
        %3405 = vmatpush1.msra.mxu0 %v3114
        %3406 = vmatprep.subr.mxu0 0.0
        %3407 = vmatpush1.msra.mxu0 %v3113
        %3408 = vmatprep.subr.mxu0 0.0
        %3409 = vmatpush1.msra.mxu0 %v3112
        %3410 = vmatprep.subr.mxu0 0.0
        %3411 = vmatpush1.msra.mxu0 %v3111
        %3412 = vmatprep.subr.mxu0 0.0
        %3413 = vmatpush1.msra.mxu0 %v3110
        %3414 = vmatprep.subr.mxu0 0.0
        %3415 = vmatpush1.msra.mxu0 %v3109
        %3416 = vmatprep.subr.mxu0 0.0
        %3417 = vmatpush1.msra.mxu0 %v3108
        %3418 = vmatprep.subr.mxu0 0.0
        %3419 = vmatpush1.msra.mxu0 %v3107
        %3420 = vmatprep.subr.mxu0 0.0
        %3421 = vmatpush1.msra.mxu0 %v3106
        %3422 = vmatprep.subr.mxu0 0.0
        %3423 = vmatpush1.msra.mxu0 %v3105
        %3424 = vmatprep.subr.mxu0 0.0
        %3425 = vmatpush1.msra.mxu0 %v3104
        %3426 = vmatprep.subr.mxu0 0.0
        %3427 = vmatpush2.msra.mxu0 0.0
        %3428 = vmatprep.subr.mxu0 0.0
        %3429 = vmatpush2.msra.mxu0 0.0
        %3430 = vmatprep.subr.mxu0 0.0
        %3431 = vmatpush2.msra.mxu0 0.0
        %3432 = vmatprep.subr.mxu0 0.0
        %3433 = vmatpush2.msra.mxu0 0.0
        %3434 = vmatprep.subr.mxu0 0.0
        %3435 = vmatpush2.msra.mxu0 0.0
        %3436 = vmatprep.subr.mxu0 0.0
        %3437 = vmatpush2.msra.mxu0 0.0
        %3438 = vmatprep.subr.mxu0 0.0
        %3439 = vmatpush2.msra.mxu0 0.0
        %3440 = vmatprep.subr.mxu0 0.0
        %3441 = vmatpush2.msra.mxu0 0.0
        %3442 = vmatprep.subr.mxu0 0.0
        %3443 = vmatpush2.msra.mxu0 0.0
        %3444 = vmatprep.subr.mxu0 0.0
        %3445 = vmatpush2.msra.mxu0 0.0
        %3446 = vmatprep.subr.mxu0 0.0
        %3447 = vmatpush2.msra.mxu0 0.0
        %3448 = vmatprep.subr.mxu0 0.0
        %3449 = vmatpush2.msra.mxu0 0.0
        %3450 = vmatprep.subr.mxu0 0.0
        %3451 = vmatpush2.msra.mxu0 0.0
        %3452 = vmatprep.subr.mxu0 0.0
        %3453 = vmatpush2.msra.mxu0 0.0
        %3454 = vmatprep.subr.mxu0 0.0
        %3455 = vmatpush2.msra.mxu0 0.0
        %3456 = vmatprep.subr.mxu0 0.0
        %3457 = vmatpush2.msra.mxu0 0.0
        %3458 = vmatprep.mubr.f32.mxu0 0.0
        %3459 = vmatmul.mubr.f32.gmra.mxu0 %v3046
        %v3460 = vpop.f32.mrf.mxu0
        %v3461 = vadd.f32 0.0, %v3460
        %v3462 = vpop.f32.mrf.mxu0
        %3463 = vdwg.mxu0
        %3464 = vmatprep.subr.mxu0 0.0
        %3465 = vmatpush1.msra.mxu0 %v3135
        %3466 = vmatprep.subr.mxu0 0.0
        %3467 = vmatpush1.msra.mxu0 %v3134
        %3468 = vmatprep.subr.mxu0 0.0
        %3469 = vmatpush1.msra.mxu0 %v3133
        %3470 = vmatprep.subr.mxu0 0.0
        %3471 = vmatpush1.msra.mxu0 %v3132
        %3472 = vmatprep.subr.mxu0 0.0
        %3473 = vmatpush1.msra.mxu0 %v3131
        %3474 = vmatprep.subr.mxu0 0.0
        %3475 = vmatpush1.msra.mxu0 %v3130
        %3476 = vmatprep.subr.mxu0 0.0
        %3477 = vmatpush1.msra.mxu0 %v3129
        %3478 = vmatprep.subr.mxu0 0.0
        %3479 = vmatpush1.msra.mxu0 %v3128
        %3480 = vmatprep.subr.mxu0 0.0
        %3481 = vmatpush1.msra.mxu0 %v3127
        %3482 = vmatprep.subr.mxu0 0.0
        %3483 = vmatpush1.msra.mxu0 %v3126
        %3484 = vmatprep.subr.mxu0 0.0
        %3485 = vmatpush1.msra.mxu0 %v3125
        %3486 = vmatprep.subr.mxu0 0.0
        %3487 = vmatpush1.msra.mxu0 %v3124
        %3488 = vmatprep.subr.mxu0 0.0
        %3489 = vmatpush1.msra.mxu0 %v3123
        %3490 = vmatprep.subr.mxu0 0.0
        %3491 = vmatpush1.msra.mxu0 %v3122
        %3492 = vmatprep.subr.mxu0 0.0
        %3493 = vmatpush1.msra.mxu0 %v3121
        %3494 = vmatprep.subr.mxu0 0.0
        %3495 = vmatpush1.msra.mxu0 %v3120
        %3496 = vmatprep.subr.mxu0 0.0
        %3497 = vmatpush2.msra.mxu0 0.0
        %3498 = vmatprep.subr.mxu0 0.0
        %3499 = vmatpush2.msra.mxu0 0.0
        %3500 = vmatprep.subr.mxu0 0.0
        %3501 = vmatpush2.msra.mxu0 0.0
        %3502 = vmatprep.subr.mxu0 0.0
        %3503 = vmatpush2.msra.mxu0 0.0
        %3504 = vmatprep.subr.mxu0 0.0
        %3505 = vmatpush2.msra.mxu0 0.0
        %3506 = vmatprep.subr.mxu0 0.0
        %3507 = vmatpush2.msra.mxu0 0.0
        %3508 = vmatprep.subr.mxu0 0.0
        %3509 = vmatpush2.msra.mxu0 0.0
        %3510 = vmatprep.subr.mxu0 0.0
        %3511 = vmatpush2.msra.mxu0 0.0
        %3512 = vmatprep.subr.mxu0 0.0
        %3513 = vmatpush2.msra.mxu0 0.0
        %3514 = vmatprep.subr.mxu0 0.0
        %3515 = vmatpush2.msra.mxu0 0.0
        %3516 = vmatprep.subr.mxu0 0.0
        %3517 = vmatpush2.msra.mxu0 0.0
        %3518 = vmatprep.subr.mxu0 0.0
        %3519 = vmatpush2.msra.mxu0 0.0
        %3520 = vmatprep.subr.mxu0 0.0
        %3521 = vmatpush2.msra.mxu0 0.0
        %3522 = vmatprep.subr.mxu0 0.0
        %3523 = vmatpush2.msra.mxu0 0.0
        %3524 = vmatprep.subr.mxu0 0.0
        %3525 = vmatpush2.msra.mxu0 0.0
        %3526 = vmatprep.subr.mxu0 0.0
        %3527 = vmatpush2.msra.mxu0 0.0
        %3528 = vmatprep.mubr.f32.mxu0 0.0
        %3529 = vmatmul.mubr.f32.gmra.mxu0 %v3029
        %v3530 = vpop.f32.mrf.mxu0
        %v3531 = vadd.f32 0.0, %v3530
        %v3532 = vpop.f32.mrf.mxu0
        %3533 = vdwg.mxu0
        %3534 = vmatprep.subr.mxu0 0.0
        %3535 = vmatpush1.msra.mxu0 %v3151
        %3536 = vmatprep.subr.mxu0 0.0
        %3537 = vmatpush1.msra.mxu0 %v3150
        %3538 = vmatprep.subr.mxu0 0.0
        %3539 = vmatpush1.msra.mxu0 %v3149
        %3540 = vmatprep.subr.mxu0 0.0
        %3541 = vmatpush1.msra.mxu0 %v3148
        %3542 = vmatprep.subr.mxu0 0.0
        %3543 = vmatpush1.msra.mxu0 %v3147
        %3544 = vmatprep.subr.mxu0 0.0
        %3545 = vmatpush1.msra.mxu0 %v3146
        %3546 = vmatprep.subr.mxu0 0.0
        %3547 = vmatpush1.msra.mxu0 %v3145
        %3548 = vmatprep.subr.mxu0 0.0
        %3549 = vmatpush1.msra.mxu0 %v3144
        %3550 = vmatprep.subr.mxu0 0.0
        %3551 = vmatpush1.msra.mxu0 %v3143
        %3552 = vmatprep.subr.mxu0 0.0
        %3553 = vmatpush1.msra.mxu0 %v3142
        %3554 = vmatprep.subr.mxu0 0.0
        %3555 = vmatpush1.msra.mxu0 %v3141
        %3556 = vmatprep.subr.mxu0 0.0
        %3557 = vmatpush1.msra.mxu0 %v3140
        %3558 = vmatprep.subr.mxu0 0.0
        %3559 = vmatpush1.msra.mxu0 %v3139
        %3560 = vmatprep.subr.mxu0 0.0
        %3561 = vmatpush1.msra.mxu0 %v3138
        %3562 = vmatprep.subr.mxu0 0.0
        %3563 = vmatpush1.msra.mxu0 %v3137
        %3564 = vmatprep.subr.mxu0 0.0
        %3565 = vmatpush1.msra.mxu0 %v3136
        %3566 = vmatprep.subr.mxu0 0.0
        %3567 = vmatpush2.msra.mxu0 0.0
        %3568 = vmatprep.subr.mxu0 0.0
        %3569 = vmatpush2.msra.mxu0 0.0
        %3570 = vmatprep.subr.mxu0 0.0
        %3571 = vmatpush2.msra.mxu0 0.0
        %3572 = vmatprep.subr.mxu0 0.0
        %3573 = vmatpush2.msra.mxu0 0.0
        %3574 = vmatprep.subr.mxu0 0.0
        %3575 = vmatpush2.msra.mxu0 0.0
        %3576 = vmatprep.subr.mxu0 0.0
        %3577 = vmatpush2.msra.mxu0 0.0
        %3578 = vmatprep.subr.mxu0 0.0
        %3579 = vmatpush2.msra.mxu0 0.0
        %3580 = vmatprep.subr.mxu0 0.0
        %3581 = vmatpush2.msra.mxu0 0.0
        %3582 = vmatprep.subr.mxu0 0.0
        %3583 = vmatpush2.msra.mxu0 0.0
        %3584 = vmatprep.subr.mxu0 0.0
        %3585 = vmatpush2.msra.mxu0 0.0
        %3586 = vmatprep.subr.mxu0 0.0
        %3587 = vmatpush2.msra.mxu0 0.0
        %3588 = vmatprep.subr.mxu0 0.0
        %3589 = vmatpush2.msra.mxu0 0.0
        %3590 = vmatprep.subr.mxu0 0.0
        %3591 = vmatpush2.msra.mxu0 0.0
        %3592 = vmatprep.subr.mxu0 0.0
        %3593 = vmatpush2.msra.mxu0 0.0
        %3594 = vmatprep.subr.mxu0 0.0
        %3595 = vmatpush2.msra.mxu0 0.0
        %3596 = vmatprep.subr.mxu0 0.0
        %3597 = vmatpush2.msra.mxu0 0.0
        %3598 = vmatprep.mubr.f32.mxu0 0.0
        %3599 = vmatmul.mubr.f32.gmra.mxu0 %v3043
        %v3600 = vpop.f32.mrf.mxu0
        %v3601 = vadd.f32 0.0, %v3600
        %v3602 = vpop.f32.mrf.mxu0
        %3603 = vdwg.mxu0
        %3604 = vmatprep.subr.mxu0 0.0
        %3605 = vmatpush1.msra.mxu0 %v3167
        %3606 = vmatprep.subr.mxu0 0.0
        %3607 = vmatpush1.msra.mxu0 %v3166
        %3608 = vmatprep.subr.mxu0 0.0
        %3609 = vmatpush1.msra.mxu0 %v3165
        %3610 = vmatprep.subr.mxu0 0.0
        %3611 = vmatpush1.msra.mxu0 %v3164
        %3612 = vmatprep.subr.mxu0 0.0
        %3613 = vmatpush1.msra.mxu0 %v3163
        %3614 = vmatprep.subr.mxu0 0.0
        %3615 = vmatpush1.msra.mxu0 %v3162
        %3616 = vmatprep.subr.mxu0 0.0
        %3617 = vmatpush1.msra.mxu0 %v3161
        %3618 = vmatprep.subr.mxu0 0.0
        %3619 = vmatpush1.msra.mxu0 %v3160
        %3620 = vmatprep.subr.mxu0 0.0
        %3621 = vmatpush1.msra.mxu0 %v3159
        %3622 = vmatprep.subr.mxu0 0.0
        %3623 = vmatpush1.msra.mxu0 %v3158
        %3624 = vmatprep.subr.mxu0 0.0
        %3625 = vmatpush1.msra.mxu0 %v3157
        %3626 = vmatprep.subr.mxu0 0.0
        %3627 = vmatpush1.msra.mxu0 %v3156
        %3628 = vmatprep.subr.mxu0 0.0
        %3629 = vmatpush1.msra.mxu0 %v3155
        %3630 = vmatprep.subr.mxu0 0.0
        %3631 = vmatpush1.msra.mxu0 %v3154
        %3632 = vmatprep.subr.mxu0 0.0
        %3633 = vmatpush1.msra.mxu0 %v3153
        %3634 = vmatprep.subr.mxu0 0.0
        %3635 = vmatpush1.msra.mxu0 %v3152
        %3636 = vmatprep.subr.mxu0 0.0
        %3637 = vmatpush2.msra.mxu0 0.0
        %3638 = vmatprep.subr.mxu0 0.0
        %3639 = vmatpush2.msra.mxu0 0.0
        %3640 = vmatprep.subr.mxu0 0.0
        %3641 = vmatpush2.msra.mxu0 0.0
        %3642 = vmatprep.subr.mxu0 0.0
        %3643 = vmatpush2.msra.mxu0 0.0
        %3644 = vmatprep.subr.mxu0 0.0
        %3645 = vmatpush2.msra.mxu0 0.0
        %3646 = vmatprep.subr.mxu0 0.0
        %3647 = vmatpush2.msra.mxu0 0.0
        %3648 = vmatprep.subr.mxu0 0.0
        %3649 = vmatpush2.msra.mxu0 0.0
        %3650 = vmatprep.subr.mxu0 0.0
        %3651 = vmatpush2.msra.mxu0 0.0
        %3652 = vmatprep.subr.mxu0 0.0
        %3653 = vmatpush2.msra.mxu0 0.0
        %3654 = vmatprep.subr.mxu0 0.0
        %3655 = vmatpush2.msra.mxu0 0.0
        %3656 = vmatprep.subr.mxu0 0.0
        %3657 = vmatpush2.msra.mxu0 0.0
        %3658 = vmatprep.subr.mxu0 0.0
        %3659 = vmatpush2.msra.mxu0 0.0
        %3660 = vmatprep.subr.mxu0 0.0
        %3661 = vmatpush2.msra.mxu0 0.0
        %3662 = vmatprep.subr.mxu0 0.0
        %3663 = vmatpush2.msra.mxu0 0.0
        %3664 = vmatprep.subr.mxu0 0.0
        %3665 = vmatpush2.msra.mxu0 0.0
        %3666 = vmatprep.subr.mxu0 0.0
        %3667 = vmatpush2.msra.mxu0 0.0
        %3668 = vmatprep.mubr.f32.mxu0 0.0
        %3669 = vmatmul.mubr.f32.gmra.mxu0 %v3045
        %v3670 = vpop.f32.mrf.mxu0
        %v3671 = vadd.f32 0.0, %v3670
        %v3672 = vpop.f32.mrf.mxu0
        %3673 = vdwg.mxu0
        %3674 = vmatprep.subr.mxu0 0.0
        %3675 = vmatpush1.msra.mxu0 %v3183
        %3676 = vmatprep.subr.mxu0 0.0
        %3677 = vmatpush1.msra.mxu0 %v3182
        %3678 = vmatprep.subr.mxu0 0.0
        %3679 = vmatpush1.msra.mxu0 %v3181
        %3680 = vmatprep.subr.mxu0 0.0
        %3681 = vmatpush1.msra.mxu0 %v3180
        %3682 = vmatprep.subr.mxu0 0.0
        %3683 = vmatpush1.msra.mxu0 %v3179
        %3684 = vmatprep.subr.mxu0 0.0
        %3685 = vmatpush1.msra.mxu0 %v3178
        %3686 = vmatprep.subr.mxu0 0.0
        %3687 = vmatpush1.msra.mxu0 %v3177
        %3688 = vmatprep.subr.mxu0 0.0
        %3689 = vmatpush1.msra.mxu0 %v3176
        %3690 = vmatprep.subr.mxu0 0.0
        %3691 = vmatpush1.msra.mxu0 %v3175
        %3692 = vmatprep.subr.mxu0 0.0
        %3693 = vmatpush1.msra.mxu0 %v3174
        %3694 = vmatprep.subr.mxu0 0.0
        %3695 = vmatpush1.msra.mxu0 %v3173
        %3696 = vmatprep.subr.mxu0 0.0
        %3697 = vmatpush1.msra.mxu0 %v3172
        %3698 = vmatprep.subr.mxu0 0.0
        %3699 = vmatpush1.msra.mxu0 %v3171
        %3700 = vmatprep.subr.mxu0 0.0
        %3701 = vmatpush1.msra.mxu0 %v3170
        %3702 = vmatprep.subr.mxu0 0.0
        %3703 = vmatpush1.msra.mxu0 %v3169
        %3704 = vmatprep.subr.mxu0 0.0
        %3705 = vmatpush1.msra.mxu0 %v3168
        %3706 = vmatprep.subr.mxu0 0.0
        %3707 = vmatpush2.msra.mxu0 0.0
        %3708 = vmatprep.subr.mxu0 0.0
        %3709 = vmatpush2.msra.mxu0 0.0
        %3710 = vmatprep.subr.mxu0 0.0
        %3711 = vmatpush2.msra.mxu0 0.0
        %3712 = vmatprep.subr.mxu0 0.0
        %3713 = vmatpush2.msra.mxu0 0.0
        %3714 = vmatprep.subr.mxu0 0.0
        %3715 = vmatpush2.msra.mxu0 0.0
        %3716 = vmatprep.subr.mxu0 0.0
        %3717 = vmatpush2.msra.mxu0 0.0
        %3718 = vmatprep.subr.mxu0 0.0
        %3719 = vmatpush2.msra.mxu0 0.0
        %3720 = vmatprep.subr.mxu0 0.0
        %3721 = vmatpush2.msra.mxu0 0.0
        %3722 = vmatprep.subr.mxu0 0.0
        %3723 = vmatpush2.msra.mxu0 0.0
        %3724 = vmatprep.subr.mxu0 0.0
        %3725 = vmatpush2.msra.mxu0 0.0
        %3726 = vmatprep.subr.mxu0 0.0
        %3727 = vmatpush2.msra.mxu0 0.0
        %3728 = vmatprep.subr.mxu0 0.0
        %3729 = vmatpush2.msra.mxu0 0.0
        %3730 = vmatprep.subr.mxu0 0.0
        %3731 = vmatpush2.msra.mxu0 0.0
        %3732 = vmatprep.subr.mxu0 0.0
        %3733 = vmatpush2.msra.mxu0 0.0
        %3734 = vmatprep.subr.mxu0 0.0
        %3735 = vmatpush2.msra.mxu0 0.0
        %3736 = vmatprep.subr.mxu0 0.0
        %3737 = vmatpush2.msra.mxu0 0.0
        %3738 = vmatprep.mubr.f32.mxu0 0.0
        %3739 = vmatmul.mubr.f32.gmra.mxu0 %v3047
        %v3740 = vpop.f32.mrf.mxu0
        %v3741 = vadd.f32 0.0, %v3740
        %v3742 = vpop.f32.mrf.mxu0
        %3743 = vdwg.mxu0
        %v3744 = vcombine.low %v3251, %v3391
        %v3746 = vunpack.c.l.s4 1983009808
        %v3747 = vunpack.c.0.s8 %v3746
        %v3748 = vlaneseq
        %v3749 = vshrl.u32 %v3748, 7
        %v3750 = vsub.s32 %v3747, %v3749
        %v3751 = vrot.slane %v3744, %v3750
        %v3752 = vcombine.low %v3321, %v3461
        %v3754 = vunpack.c.l.s4 1983009808
        %v3755 = vunpack.c.0.s8 %v3754
        %v3756 = vlaneseq
        %v3757 = vshrl.u32 %v3756, 7
        %v3758 = vsub.s32 %v3755, %v3757
        %v3759 = vrot.slane %v3752, %v3758
        %v3760 = vcombine.low %v3531, %v3671
        %v3762 = vunpack.c.l.s4 1983009808
        %v3763 = vunpack.c.0.s8 %v3762
        %v3764 = vlaneseq
        %v3765 = vshrl.u32 %v3764, 7
        %v3766 = vsub.s32 %v3763, %v3765
        %v3767 = vrot.slane %v3760, %v3766
        %v3768 = vcombine.low %v3601, %v3741
        %v3770 = vunpack.c.l.s4 1983009808
        %v3771 = vunpack.c.0.s8 %v3770
        %v3772 = vlaneseq
        %v3773 = vshrl.u32 %v3772, 7
        %v3774 = vsub.s32 %v3771, %v3773
        %v3775 = vrot.slane %v3768, %v3774
        %v3776 = vcombine.low %v3751, %v3759
        %v3778 = vunpack.c.l.s4 1934713408
        %v3779 = vunpack.c.0.s8 %v3778
        %v3780 = vlaneseq
        %v3781 = vshrl.u32 %v3780, 7
        %v3782 = vsub.s32 %v3779, %v3781
        %v3783 = vrot.slane %v3776, %v3782
        %v3784 = vcombine.low %v3767, %v3775
        %v3786 = vunpack.c.l.s4 1934713408
        %v3787 = vunpack.c.0.s8 %v3786
        %v3788 = vlaneseq
        %v3789 = vshrl.u32 %v3788, 7
        %v3790 = vsub.s32 %v3787, %v3789
        %v3791 = vrot.slane %v3784, %v3790
        %v3792 = vcombine.low %v3783, %v3791
        %vm3793 = vcmask 523264
        %3794 = vst.msk [vmem:[%s316] sm:$0xff] %vm3793, %v3792
        %s3795 = sand.u32 %s173, 1
        %s3796 = scalar_lea.sflag [#allocation4], %s3795
        %s3797 = sand.u32 %s173, 1
        %s3798 = smul.addr %s3797, 8
        %s3799 = scalar_lea.vmem [#allocation3], %s3798
        %s3800 = sand.u32 %s201, 1
        %s3801 = scalar_lea.sflag [#allocation6], %s3800
        %s3802 = sand.u32 %s201, 1
        %s3803 = smul.addr %s3802, 8
        %s3804 = scalar_lea.vmem [#allocation5], %s3803
        // Predicated region
        $region45: #{tpu_custom_call.1} parent=39 // pred_check
          %p3805 = pneg %p183
        $region46: #{tpu_custom_call.1} parent=39 // pred_check_branch
          %3807 = sbr.rel (%p3805) target = $region48
        $region47: #{tpu_custom_call.1} parent=39 // pred_region
          %s3809 = ssub.s32 128, 128
          %3810 = vsyncadd %s3796, %s3809
          %s3811 = smul.addr %s29, 2
          %s3812 = sadd.s32 %s28, %s3811
          %s3813 = smul.addr %s3812, 128
          %s3814 = scalar_lea.hbm %s5, %s3813
          %s3816 = sshll.u32 %s3799, 4
          %s3817 = int_to_ptr.vmem [resolvable:$true] %s3816
          %3819 = dma.vmem_to_hbm [thread:$0]  %s3817, 128, %s3814, %s3796
        $region48: #{tpu_custom_call.1} parent=39 // pred_fallthru
          _
        // Predicated region
        $region49: #{tpu_custom_call.1} parent=39 // pred_check
          %p3820 = pneg %p211
        $region50: #{tpu_custom_call.1} parent=39 // pred_check_branch
          %3822 = sbr.rel (%p3820) target = $region52
        $region51: #{tpu_custom_call.1} parent=39 // pred_region
          %s3824 = ssub.s32 128, 128
          %3825 = vsyncadd %s3801, %s3824
          %s3826 = smul.addr %s29, 2
          %s3827 = sadd.s32 %s28, %s3826
          %s3828 = smul.addr %s3827, 128
          %s3829 = scalar_lea.hbm %s6, %s3828
          %s3831 = sshll.u32 %s3804, 4
          %s3832 = int_to_ptr.vmem [resolvable:$true] %s3831
          %3834 = dma.vmem_to_hbm [thread:$0]  %s3832, 128, %s3829, %s3801
        $region52: #{tpu_custom_call.1} parent=39 // pred_fallthru
          _
      $region40: #{tpu_custom_call.1} parent=5 // pred_fallthru
        _
      %p3835 = scmp.le.s32.totalorder 2, %s19
      // Predicated region
      $region53: #{tpu_custom_call.1} parent=5 // pred_check
        %p3836 = pneg %p3835
      $region54: #{tpu_custom_call.1} parent=5 // pred_check_branch
        %3838 = sbr.rel (%p3836) target = $region56
      $region55: #{tpu_custom_call.1} parent=5 // pred_region
        %s3839 = ssub.s32 %s19, 2
        // Predicated region
        $region57: #{tpu_custom_call.1} parent=55 // pred_check
          %p3840 = pneg %p189
        $region58: #{tpu_custom_call.1} parent=55 // pred_check_branch
          %3842 = sbr.rel (%p3840) target = $region60
        $region59: #{tpu_custom_call.1} parent=55 // pred_region
          %s3843 = sand.u32 %s174, 1
          %s3844 = scalar_lea.sflag [#allocation4], %s3843
          %s3845 = sand.u32 %s174, 1
          %s3846 = smul.addr %s3845, 8
          %s3847 = scalar_lea.vmem [#allocation3], %s3846
          %3848 = dma.done %s3844, 128
        $region60: #{tpu_custom_call.1} parent=55 // pred_fallthru
          _
        // Predicated region
        $region61: #{tpu_custom_call.1} parent=55 // pred_check
          %p3849 = pneg %p217
        $region62: #{tpu_custom_call.1} parent=55 // pred_check_branch
          %3851 = sbr.rel (%p3849) target = $region64
        $region63: #{tpu_custom_call.1} parent=55 // pred_region
          %s3852 = sand.u32 %s202, 1
          %s3853 = scalar_lea.sflag [#allocation6], %s3852
          %s3854 = sand.u32 %s202, 1
          %s3855 = smul.addr %s3854, 8
          %s3856 = scalar_lea.vmem [#allocation5], %s3855
          %3857 = dma.done %s3853, 128
        $region64: #{tpu_custom_call.1} parent=55 // pred_fallthru
          _
      $region56: #{tpu_custom_call.1} parent=5 // pred_fallthru
        _
    $region6: #{tpu_custom_call.1} parent=1 // loop_footer
      %s23 = sadd.s32 1, %s19
    $region7: #{tpu_custom_call.1} parent=1 // loop_footer_branch
      %18 = sbr.rel target = $region3
    $region8: #{tpu_custom_call.1} parent=1 // loop_exit
      _
    %3858 = vsyncpa [#allocation4], 1
    %s3859 = scalar_lea.sflag [#allocation4], 1
    %3860 = vsyncpa %s3859, 1
    %3861 = vsyncpa [#allocation6], 1
    %s3862 = scalar_lea.sflag [#allocation6], 1
    %3863 = vsyncpa %s3862, 1

</llo_original>
